<compile_context>
chip_gen: v6e
topology: v6e:2x2x1
jax: 0.10.0
libtpu: 0.0.40
codegen_flags: <defaults>
</compile_context>

<pallas_src>
import numpy as np

import jax
import jax.numpy as jnp
from jax.experimental import pallas as pl
from jax.experimental.pallas import tpu as pltpu


# ----------------------------- fused Pallas kernel ---------------------------

def _lenet_kernel(x_ref,
                  w1_ref, b1_ref, ph1_ref, pw1_ref,
                  w2_ref, b2_ref, ph2_ref, pw2_ref,
                  w3_ref, b3_ref, s3_ref,
                  fw1_ref, fb1_ref, fw2_ref, fb2_ref,
                  o_ref):
    f32 = jnp.float32

    def conv(x, w_ref, b_ref):
        # x: (R, W*IC) batched planar rows (per-sample stride = input height).
        # w_ref: (KH, W*IC, OW*OC) block-packed conv weights.
        # Valid conv == sum over KH of a row-shifted matmul.
        kh = w_ref.shape[0]
        out_rows = x.shape[0] - (kh - 1)
        acc = jnp.dot(x[0:out_rows], w_ref[0], preferred_element_type=f32)
        for i in range(1, kh):
            acc = acc + jnp.dot(x[i:i + out_rows], w_ref[i],
                                preferred_element_type=f32)
        return jnp.tanh(acc + b_ref[...])

    def pool(x, ph_ref, pw_ref):
        # 2x2/stride-2 avg pool + per-sample row compaction, all as matmuls
        # with constant 0.5 matrices (rows: PH @ x, planar cols: x @ PW).
        t = jnp.dot(ph_ref[...], x, preferred_element_type=f32)
        return jnp.dot(t, pw_ref[...], preferred_element_type=f32)

    x = x_ref[...]                                    # (BT*32, 96)  = 32x(32*3)
    h = conv(x, w1_ref, b1_ref)                       # (BT*32-4, 168) 28x(28*6)
    h = pool(h, ph1_ref, pw1_ref)                     # (BT*14, 84)   14x(14*6)
    h = conv(h, w2_ref, b2_ref)                       # (BT*14-4, 160)10x(10*16)
    h = pool(h, ph2_ref, pw2_ref)                     # (BT*5, 80)    5x(5*16)
    h = conv(h, w3_ref, b3_ref)                       # (BT*5-4, 120) 1x1x120
    h = jnp.dot(s3_ref[...], h, preferred_element_type=f32)   # (BT, 120)
    h = jnp.tanh(jnp.dot(h, fw1_ref[...], preferred_element_type=f32)
                 + fb1_ref[...])                      # (BT, 84)
    o_ref[...] = (jnp.dot(h, fw2_ref[...], preferred_element_type=f32)
                  + fb2_ref[...])                     # (BT, 2)


# ------------------------- one-time weight packing ---------------------------

def _pack_conv(w_oihw, b, in_w):
    """Planar conv packing: conv == sum_i x_plane[i:i+OH] @ w_packed[i]."""
    w = np.asarray(w_oihw, np.float32)                # (OC, IC, KH, KW) torch
    oc, ic, kh, kw = w.shape
    ow = in_w - kw + 1
    w_hwio = np.transpose(w, (2, 3, 1, 0))            # (KH, KW, IC, OC)
    packed = np.zeros((kh, in_w * ic, ow * oc), np.float32)
    for j in range(kw):
        for t in range(ow):
            packed[:, (t + j) * ic:(t + j + 1) * ic,
                   t * oc:(t + 1) * oc] = w_hwio[:, j]
    b_packed = np.tile(np.asarray(b, np.float32), ow)[None, :]
    return jnp.asarray(packed), jnp.asarray(b_packed)


def _pool_rows(bt, stride_rows, valid_rows, trim):
    """Row-wise 2x avg pool + batch compaction: pooled = PH @ conv_out."""
    out_rows = valid_rows // 2
    ph = np.zeros((bt * out_rows, bt * stride_rows - trim), np.float32)
    for b in range(bt):
        for r in range(out_rows):
            ph[b * out_rows + r, b * stride_rows + 2 * r] = 0.5
            ph[b * out_rows + r, b * stride_rows + 2 * r + 1] = 0.5
    return jnp.asarray(ph)


def _pool_cols(w, c):
    """Column-wise 2x avg pool in planar (W*C) layout: pooled = x @ PW."""
    pw = np.zeros((w * c, (w // 2) * c), np.float32)
    for t in range(w // 2):
        for ch in range(c):
            pw[(2 * t) * c + ch, t * c + ch] = 0.5
            pw[(2 * t + 1) * c + ch, t * c + ch] = 0.5
    return jnp.asarray(pw)


def _select_rows(bt, stride_rows, trim):
    """Pick row 0 of each sample from a strided slab (== view(-1, 120))."""
    s = np.zeros((bt, bt * stride_rows - trim), np.float32)
    for b in range(bt):
        s[b, b * stride_rows] = 1.0
    return jnp.asarray(s)


def pack_lenet_params(raw, batch_tile=8):
    """Pre-pack all weights once (no per-forward transpose/reshape glue)."""
    bt = batch_tile
    w1, b1 = raw["conv1"]
    w2, b2 = raw["conv2"]
    w3, b3 = raw["conv3"]
    fw1, fb1 = raw["fc1"]
    fw2, fb2 = raw["fc2"]
    w1p, b1p = _pack_conv(w1, b1, 32)                 # 32x32x3  -> 28x28x6
    w2p, b2p = _pack_conv(w2, b2, 14)                 # 14x14x6  -> 10x10x16
    w3p, b3p = _pack_conv(w3, b3, 5)                  # 5x5x16   -> 1x1x120
    return dict(
        w1=w1p, b1=b1p,
        ph1=_pool_rows(bt, 32, 28, 4), pw1=_pool_cols(28, 6),
        w2=w2p, b2=b2p,
        ph2=_pool_rows(bt, 14, 10, 4), pw2=_pool_cols(10, 16),
        w3=w3p, b3=b3p,
        s3=_select_rows(bt, 5, 4),
        fw1=jnp.asarray(np.asarray(fw1, np.float32).T),        # (120, 84)
        fb1=jnp.asarray(np.asarray(fb1, np.float32)[None, :]),
        fw2=jnp.asarray(np.asarray(fw2, np.float32).T),        # (84, 2)
        fb2=jnp.asarray(np.asarray(fb2, np.float32)[None, :]),
    )


# ------------------------------- forward pass --------------------------------

def lenet_forward(packed, x_nchw):
    """Matches torch lenet.forward; x_nchw: (B, 3, 32, 32)."""
    B = x_nchw.shape[0]
    bt = packed["s3"].shape[0]            # batch tile (static under jit)
    nb = -(-B // bt)
    bpad = nb * bt

    # Layout plumbing only: NCHW -> NHWC -> batched planar rows (B*32, 32*3).
    x = jnp.transpose(x_nchw, (0, 2, 3, 1)).astype(jnp.float32)
    if bpad != B:
        x = jnp.pad(x, ((0, bpad - B), (0, 0), (0, 0), (0, 0)))
    x2 = x.reshape(bpad * 32, 32 * 3)

    weights = (packed["w1"], packed["b1"], packed["ph1"], packed["pw1"],
               packed["w2"], packed["b2"], packed["ph2"], packed["pw2"],
               packed["w3"], packed["b3"], packed["s3"],
               packed["fw1"], packed["fb1"], packed["fw2"], packed["fb2"])

    def wspec(a):
        nd = a.ndim
        return pl.BlockSpec(a.shape, lambda i: (0,) * nd)   # resident weights

    out = pl.pallas_call(
        _lenet_kernel,
        out_shape=jax.ShapeDtypeStruct((bpad, 2), jnp.float32),
        grid=(nb,),
        in_specs=[pl.BlockSpec((bt * 32, 96), lambda i: (i, 0))]
                 + [wspec(w) for w in weights],
        out_specs=pl.BlockSpec((bt, 2), lambda i: (i, 0)),
        compiler_params=pltpu.CompilerParams(
            dimension_semantics=("parallel",)),
    )(x2, *weights)
    return out[:B]


# --------------------------- init & XLA reference ----------------------------

def init_lenet_params(key, in_channel=3):
    """Deterministic init mimicking PyTorch default U(-1/sqrt(fan_in), +)."""
    def conv_init(k, oc, ic, ks):
        k1, k2 = jax.random.split(k)
        bound = 1.0 / float(ic * ks * ks) ** 0.5
        w = jax.random.uniform(k1, (oc, ic, ks, ks), jnp.float32, -bound, bound)
        b = jax.random.uniform(k2, (oc,), jnp.float32, -bound, bound)
        return w, b

    def fc_init(k, out_f, in_f):
        k1, k2 = jax.random.split(k)
        bound = 1.0 / float(in_f) ** 0.5
        w = jax.random.uniform(k1, (out_f, in_f), jnp.float32, -bound, bound)
        b = jax.random.uniform(k2, (out_f,), jnp.float32, -bound, bound)
        return w, b

    keys = jax.random.split(key, 5)
    return {
        "conv1": conv_init(keys[0], 6, in_channel, 5),
        "conv2": conv_init(keys[1], 16, 6, 5),
        "conv3": conv_init(keys[2], 120, 16, 5),
        "fc1": fc_init(keys[3], 84, 120),
        "fc2": fc_init(keys[4], 2, 84),
    }


def lenet_reference(params, x_nchw):
    """Pure-JAX/XLA reference for correctness checking."""
    def conv(x, w, b):
        y = jax.lax.conv_general_dilated(
            x, w, (1, 1), "VALID",
            dimension_numbers=("NCHW", "OIHW", "NCHW"))
        return jnp.tanh(y + b[None, :, None, None])

    def pool(x):
        s = jax.lax.reduce_window(x, 0.0, jax.lax.add,
                                  (1, 1, 2, 2), (1, 1, 2, 2), "VALID")
        return s * 0.25

    x = conv(x_nchw, *params["conv1"])
    x = pool(x)
    x = conv(x, *params["conv2"])
    x = pool(x)
    x = conv(x, *params["conv3"])
    x = x.reshape(-1, 120)
    w1, b1 = params["fc1"]
    x = jnp.tanh(x @ w1.T + b1)
    w2, b2 = params["fc2"]
    return x @ w2.T + b2


if __name__ == "__main__":
    key = jax.random.PRNGKey(0)
    pkey, xkey = jax.random.split(key)

    raw_params = init_lenet_params(pkey, in_channel=3)
    packed_params = pack_lenet_params(raw_params, batch_tile=8)  # one-time pack

    # Classic LeNet geometry: 32x32 spatial so conv3 yields 1x1x120.
    x = jax.random.normal(xkey, (2, 3, 32, 32), jnp.float32)     # NCHW as torch

    fwd = jax.jit(lenet_forward)
    out = jax.block_until_ready(fwd(packed_params, x))
    ref = jax.block_until_ready(lenet_reference(raw_params, x))

    assert out.shape == (2, 2), out.shape
    assert jnp.allclose(out, ref, atol=1e-4, rtol=1e-4), (out, ref)
    print("KERNEL_OK")
</pallas_src>

<mosaic_0001>
module attributes {stable_mosaic.version = 11 : i64} {
  func.func @_lenet_kernel(%arg0: i32, %arg1: memref<256x96xf32, #tpu.memory_space<vmem>>, %arg2: memref<5x96x168xf32, #tpu.memory_space<vmem>>, %arg3: memref<1x168xf32, #tpu.memory_space<vmem>>, %arg4: memref<112x252xf32, #tpu.memory_space<vmem>>, %arg5: memref<168x84xf32, #tpu.memory_space<vmem>>, %arg6: memref<5x84x160xf32, #tpu.memory_space<vmem>>, %arg7: memref<1x160xf32, #tpu.memory_space<vmem>>, %arg8: memref<40x108xf32, #tpu.memory_space<vmem>>, %arg9: memref<160x80xf32, #tpu.memory_space<vmem>>, %arg10: memref<5x80x120xf32, #tpu.memory_space<vmem>>, %arg11: memref<1x120xf32, #tpu.memory_space<vmem>>, %arg12: memref<8x36xf32, #tpu.memory_space<vmem>>, %arg13: memref<120x84xf32, #tpu.memory_space<vmem>>, %arg14: memref<1x84xf32, #tpu.memory_space<vmem>>, %arg15: memref<84x2xf32, #tpu.memory_space<vmem>>, %arg16: memref<1x2xf32, #tpu.memory_space<vmem>>, %arg17: memref<8x2xf32, #tpu.memory_space<vmem>>) attributes {dimension_semantics = [#tpu.dimension_semantics<parallel>], iteration_bounds = array<i64: 1>, scalar_prefetch = 0 : i64, scratch_operands = 0 : i64, tpu.core_type = #tpu.core_type<tc>, window_params = [{transform_indices = @transform_0, window_bounds = array<i64: 256, 96>}, {pipeline_mode = #tpu.pipeline_mode<synchronous>, transform_indices = @transform_1, window_bounds = array<i64: 5, 96, 168>}, {pipeline_mode = #tpu.pipeline_mode<synchronous>, transform_indices = @transform_2, window_bounds = array<i64: 1, 168>}, {pipeline_mode = #tpu.pipeline_mode<synchronous>, transform_indices = @transform_3, window_bounds = array<i64: 112, 252>}, {pipeline_mode = #tpu.pipeline_mode<synchronous>, transform_indices = @transform_4, window_bounds = array<i64: 168, 84>}, {pipeline_mode = #tpu.pipeline_mode<synchronous>, transform_indices = @transform_5, window_bounds = array<i64: 5, 84, 160>}, {pipeline_mode = #tpu.pipeline_mode<synchronous>, transform_indices = @transform_6, window_bounds = array<i64: 1, 160>}, {pipeline_mode = #tpu.pipeline_mode<synchronous>, transform_indices = @transform_7, window_bounds = array<i64: 40, 108>}, {pipeline_mode = #tpu.pipeline_mode<synchronous>, transform_indices = @transform_8, window_bounds = array<i64: 160, 80>}, {pipeline_mode = #tpu.pipeline_mode<synchronous>, transform_indices = @transform_9, window_bounds = array<i64: 5, 80, 120>}, {pipeline_mode = #tpu.pipeline_mode<synchronous>, transform_indices = @transform_10, window_bounds = array<i64: 1, 120>}, {pipeline_mode = #tpu.pipeline_mode<synchronous>, transform_indices = @transform_11, window_bounds = array<i64: 8, 36>}, {pipeline_mode = #tpu.pipeline_mode<synchronous>, transform_indices = @transform_12, window_bounds = array<i64: 120, 84>}, {pipeline_mode = #tpu.pipeline_mode<synchronous>, transform_indices = @transform_13, window_bounds = array<i64: 1, 84>}, {pipeline_mode = #tpu.pipeline_mode<synchronous>, transform_indices = @transform_14, window_bounds = array<i64: 84, 2>}, {pipeline_mode = #tpu.pipeline_mode<synchronous>, transform_indices = @transform_15, window_bounds = array<i64: 1, 2>}, {transform_indices = @transform_16, window_bounds = array<i64: 8, 2>}]} {
    %c0 = arith.constant 0 : index
    %c0_0 = arith.constant 0 : index
    %0 = vector.load %arg1[%c0, %c0_0] : memref<256x96xf32, #tpu.memory_space<vmem>>, vector<256x96xf32>
    %1 = vector.extract_strided_slice %0 {offsets = [0, 0], sizes = [252, 96], strides = [1, 1]} : vector<256x96xf32> to vector<252x96xf32>
    %c0_1 = arith.constant 0 : index
    %c0_2 = arith.constant 0 : index
    %c0_3 = arith.constant 0 : index
    %2 = vector.load %arg2[%c0_1, %c0_2, %c0_3] : memref<5x96x168xf32, #tpu.memory_space<vmem>>, vector<1x96x168xf32>
    %3 = vector.shape_cast %2 : vector<1x96x168xf32> to vector<96x168xf32>
    %cst = arith.constant dense<0.000000e+00> : vector<252x168xf32>
    %4 = tpu.matmul %1, %3, %cst {dimension_numbers = #tpu.dot_dimension_numbers<[1], [0], [0], [1], [0, 0, 1, 1], [], []>} : vector<252x96xf32>, vector<96x168xf32>, vector<252x168xf32> -> vector<252x168xf32>
    %5 = vector.extract_strided_slice %0 {offsets = [1, 0], sizes = [252, 96], strides = [1, 1]} : vector<256x96xf32> to vector<252x96xf32>
    %c1 = arith.constant 1 : index
    %c0_4 = arith.constant 0 : index
    %c0_5 = arith.constant 0 : index
    %6 = vector.load %arg2[%c1, %c0_4, %c0_5] : memref<5x96x168xf32, #tpu.memory_space<vmem>>, vector<1x96x168xf32>
    %7 = vector.shape_cast %6 : vector<1x96x168xf32> to vector<96x168xf32>
    %cst_6 = arith.constant dense<0.000000e+00> : vector<252x168xf32>
    %8 = tpu.matmul %5, %7, %cst_6 {dimension_numbers = #tpu.dot_dimension_numbers<[1], [0], [0], [1], [0, 0, 1, 1], [], []>} : vector<252x96xf32>, vector<96x168xf32>, vector<252x168xf32> -> vector<252x168xf32>
    %9 = arith.addf %4, %8 : vector<252x168xf32>
    %10 = vector.extract_strided_slice %0 {offsets = [2, 0], sizes = [252, 96], strides = [1, 1]} : vector<256x96xf32> to vector<252x96xf32>
    %c2 = arith.constant 2 : index
    %c0_7 = arith.constant 0 : index
    %c0_8 = arith.constant 0 : index
    %11 = vector.load %arg2[%c2, %c0_7, %c0_8] : memref<5x96x168xf32, #tpu.memory_space<vmem>>, vector<1x96x168xf32>
    %12 = vector.shape_cast %11 : vector<1x96x168xf32> to vector<96x168xf32>
    %cst_9 = arith.constant dense<0.000000e+00> : vector<252x168xf32>
    %13 = tpu.matmul %10, %12, %cst_9 {dimension_numbers = #tpu.dot_dimension_numbers<[1], [0], [0], [1], [0, 0, 1, 1], [], []>} : vector<252x96xf32>, vector<96x168xf32>, vector<252x168xf32> -> vector<252x168xf32>
    %14 = arith.addf %9, %13 : vector<252x168xf32>
    %15 = vector.extract_strided_slice %0 {offsets = [3, 0], sizes = [252, 96], strides = [1, 1]} : vector<256x96xf32> to vector<252x96xf32>
    %c3 = arith.constant 3 : index
    %c0_10 = arith.constant 0 : index
    %c0_11 = arith.constant 0 : index
    %16 = vector.load %arg2[%c3, %c0_10, %c0_11] : memref<5x96x168xf32, #tpu.memory_space<vmem>>, vector<1x96x168xf32>
    %17 = vector.shape_cast %16 : vector<1x96x168xf32> to vector<96x168xf32>
    %cst_12 = arith.constant dense<0.000000e+00> : vector<252x168xf32>
    %18 = tpu.matmul %15, %17, %cst_12 {dimension_numbers = #tpu.dot_dimension_numbers<[1], [0], [0], [1], [0, 0, 1, 1], [], []>} : vector<252x96xf32>, vector<96x168xf32>, vector<252x168xf32> -> vector<252x168xf32>
    %19 = arith.addf %14, %18 : vector<252x168xf32>
    %20 = vector.extract_strided_slice %0 {offsets = [4, 0], sizes = [252, 96], strides = [1, 1]} : vector<256x96xf32> to vector<252x96xf32>
    %c4 = arith.constant 4 : index
    %c0_13 = arith.constant 0 : index
    %c0_14 = arith.constant 0 : index
    %21 = vector.load %arg2[%c4, %c0_13, %c0_14] : memref<5x96x168xf32, #tpu.memory_space<vmem>>, vector<1x96x168xf32>
    %22 = vector.shape_cast %21 : vector<1x96x168xf32> to vector<96x168xf32>
    %cst_15 = arith.constant dense<0.000000e+00> : vector<252x168xf32>
    %23 = tpu.matmul %20, %22, %cst_15 {dimension_numbers = #tpu.dot_dimension_numbers<[1], [0], [0], [1], [0, 0, 1, 1], [], []>} : vector<252x96xf32>, vector<96x168xf32>, vector<252x168xf32> -> vector<252x168xf32>
    %24 = arith.addf %19, %23 : vector<252x168xf32>
    %c0_16 = arith.constant 0 : index
    %c0_17 = arith.constant 0 : index
    %25 = vector.load %arg3[%c0_16, %c0_17] : memref<1x168xf32, #tpu.memory_space<vmem>>, vector<1x168xf32>
    %26 = vector.broadcast %25 : vector<1x168xf32> to vector<252x168xf32>
    %27 = arith.addf %24, %26 : vector<252x168xf32>
    %28 = math.tanh %27 : vector<252x168xf32>
    %c0_18 = arith.constant 0 : index
    %c0_19 = arith.constant 0 : index
    %29 = vector.load %arg4[%c0_18, %c0_19] : memref<112x252xf32, #tpu.memory_space<vmem>>, vector<112x252xf32>
    %cst_20 = arith.constant dense<0.000000e+00> : vector<112x168xf32>
    %30 = tpu.matmul %29, %28, %cst_20 {dimension_numbers = #tpu.dot_dimension_numbers<[1], [0], [0], [1], [0, 0, 1, 1], [], []>} : vector<112x252xf32>, vector<252x168xf32>, vector<112x168xf32> -> vector<112x168xf32>
    %c0_21 = arith.constant 0 : index
    %c0_22 = arith.constant 0 : index
    %31 = vector.load %arg5[%c0_21, %c0_22] : memref<168x84xf32, #tpu.memory_space<vmem>>, vector<168x84xf32>
    %cst_23 = arith.constant dense<0.000000e+00> : vector<112x84xf32>
    %32 = tpu.matmul %30, %31, %cst_23 {dimension_numbers = #tpu.dot_dimension_numbers<[1], [0], [0], [1], [0, 0, 1, 1], [], []>} : vector<112x168xf32>, vector<168x84xf32>, vector<112x84xf32> -> vector<112x84xf32>
    %33 = vector.extract_strided_slice %32 {offsets = [0, 0], sizes = [108, 84], strides = [1, 1]} : vector<112x84xf32> to vector<108x84xf32>
    %c0_24 = arith.constant 0 : index
    %c0_25 = arith.constant 0 : index
    %c0_26 = arith.constant 0 : index
    %34 = vector.load %arg6[%c0_24, %c0_25, %c0_26] : memref<5x84x160xf32, #tpu.memory_space<vmem>>, vector<1x84x160xf32>
    %35 = vector.shape_cast %34 : vector<1x84x160xf32> to vector<84x160xf32>
    %cst_27 = arith.constant dense<0.000000e+00> : vector<108x160xf32>
    %36 = tpu.matmul %33, %35, %cst_27 {dimension_numbers = #tpu.dot_dimension_numbers<[1], [0], [0], [1], [0, 0, 1, 1], [], []>} : vector<108x84xf32>, vector<84x160xf32>, vector<108x160xf32> -> vector<108x160xf32>
    %37 = vector.extract_strided_slice %32 {offsets = [1, 0], sizes = [108, 84], strides = [1, 1]} : vector<112x84xf32> to vector<108x84xf32>
    %c1_28 = arith.constant 1 : index
    %c0_29 = arith.constant 0 : index
    %c0_30 = arith.constant 0 : index
    %38 = vector.load %arg6[%c1_28, %c0_29, %c0_30] : memref<5x84x160xf32, #tpu.memory_space<vmem>>, vector<1x84x160xf32>
    %39 = vector.shape_cast %38 : vector<1x84x160xf32> to vector<84x160xf32>
    %cst_31 = arith.constant dense<0.000000e+00> : vector<108x160xf32>
    %40 = tpu.matmul %37, %39, %cst_31 {dimension_numbers = #tpu.dot_dimension_numbers<[1], [0], [0], [1], [0, 0, 1, 1], [], []>} : vector<108x84xf32>, vector<84x160xf32>, vector<108x160xf32> -> vector<108x160xf32>
    %41 = arith.addf %36, %40 : vector<108x160xf32>
    %42 = vector.extract_strided_slice %32 {offsets = [2, 0], sizes = [108, 84], strides = [1, 1]} : vector<112x84xf32> to vector<108x84xf32>
    %c2_32 = arith.constant 2 : index
    %c0_33 = arith.constant 0 : index
    %c0_34 = arith.constant 0 : index
    %43 = vector.load %arg6[%c2_32, %c0_33, %c0_34] : memref<5x84x160xf32, #tpu.memory_space<vmem>>, vector<1x84x160xf32>
    %44 = vector.shape_cast %43 : vector<1x84x160xf32> to vector<84x160xf32>
    %cst_35 = arith.constant dense<0.000000e+00> : vector<108x160xf32>
    %45 = tpu.matmul %42, %44, %cst_35 {dimension_numbers = #tpu.dot_dimension_numbers<[1], [0], [0], [1], [0, 0, 1, 1], [], []>} : vector<108x84xf32>, vector<84x160xf32>, vector<108x160xf32> -> vector<108x160xf32>
    %46 = arith.addf %41, %45 : vector<108x160xf32>
    %47 = vector.extract_strided_slice %32 {offsets = [3, 0], sizes = [108, 84], strides = [1, 1]} : vector<112x84xf32> to vector<108x84xf32>
    %c3_36 = arith.constant 3 : index
    %c0_37 = arith.constant 0 : index
    %c0_38 = arith.constant 0 : index
    %48 = vector.load %arg6[%c3_36, %c0_37, %c0_38] : memref<5x84x160xf32, #tpu.memory_space<vmem>>, vector<1x84x160xf32>
    %49 = vector.shape_cast %48 : vector<1x84x160xf32> to vector<84x160xf32>
    %cst_39 = arith.constant dense<0.000000e+00> : vector<108x160xf32>
    %50 = tpu.matmul %47, %49, %cst_39 {dimension_numbers = #tpu.dot_dimension_numbers<[1], [0], [0], [1], [0, 0, 1, 1], [], []>} : vector<108x84xf32>, vector<84x160xf32>, vector<108x160xf32> -> vector<108x160xf32>
    %51 = arith.addf %46, %50 : vector<108x160xf32>
    %52 = vector.extract_strided_slice %32 {offsets = [4, 0], sizes = [108, 84], strides = [1, 1]} : vector<112x84xf32> to vector<108x84xf32>
    %c4_40 = arith.constant 4 : index
    %c0_41 = arith.constant 0 : index
    %c0_42 = arith.constant 0 : index
    %53 = vector.load %arg6[%c4_40, %c0_41, %c0_42] : memref<5x84x160xf32, #tpu.memory_space<vmem>>, vector<1x84x160xf32>
    %54 = vector.shape_cast %53 : vector<1x84x160xf32> to vector<84x160xf32>
    %cst_43 = arith.constant dense<0.000000e+00> : vector<108x160xf32>
    %55 = tpu.matmul %52, %54, %cst_43 {dimension_numbers = #tpu.dot_dimension_numbers<[1], [0], [0], [1], [0, 0, 1, 1], [], []>} : vector<108x84xf32>, vector<84x160xf32>, vector<108x160xf32> -> vector<108x160xf32>
    %56 = arith.addf %51, %55 : vector<108x160xf32>
    %c0_44 = arith.constant 0 : index
    %c0_45 = arith.constant 0 : index
    %57 = vector.load %arg7[%c0_44, %c0_45] : memref<1x160xf32, #tpu.memory_space<vmem>>, vector<1x160xf32>
    %58 = vector.broadcast %57 : vector<1x160xf32> to vector<108x160xf32>
    %59 = arith.addf %56, %58 : vector<108x160xf32>
    %60 = math.tanh %59 : vector<108x160xf32>
    %c0_46 = arith.constant 0 : index
    %c0_47 = arith.constant 0 : index
    %61 = vector.load %arg8[%c0_46, %c0_47] : memref<40x108xf32, #tpu.memory_space<vmem>>, vector<40x108xf32>
    %cst_48 = arith.constant dense<0.000000e+00> : vector<40x160xf32>
    %62 = tpu.matmul %61, %60, %cst_48 {dimension_numbers = #tpu.dot_dimension_numbers<[1], [0], [0], [1], [0, 0, 1, 1], [], []>} : vector<40x108xf32>, vector<108x160xf32>, vector<40x160xf32> -> vector<40x160xf32>
    %c0_49 = arith.constant 0 : index
    %c0_50 = arith.constant 0 : index
    %63 = vector.load %arg9[%c0_49, %c0_50] : memref<160x80xf32, #tpu.memory_space<vmem>>, vector<160x80xf32>
    %cst_51 = arith.constant dense<0.000000e+00> : vector<40x80xf32>
    %64 = tpu.matmul %62, %63, %cst_51 {dimension_numbers = #tpu.dot_dimension_numbers<[1], [0], [0], [1], [0, 0, 1, 1], [], []>} : vector<40x160xf32>, vector<160x80xf32>, vector<40x80xf32> -> vector<40x80xf32>
    %65 = vector.extract_strided_slice %64 {offsets = [0, 0], sizes = [36, 80], strides = [1, 1]} : vector<40x80xf32> to vector<36x80xf32>
    %c0_52 = arith.constant 0 : index
    %c0_53 = arith.constant 0 : index
    %c0_54 = arith.constant 0 : index
    %66 = vector.load %arg10[%c0_52, %c0_53, %c0_54] : memref<5x80x120xf32, #tpu.memory_space<vmem>>, vector<1x80x120xf32>
    %67 = vector.shape_cast %66 : vector<1x80x120xf32> to vector<80x120xf32>
    %cst_55 = arith.constant dense<0.000000e+00> : vector<36x120xf32>
    %68 = tpu.matmul %65, %67, %cst_55 {dimension_numbers = #tpu.dot_dimension_numbers<[1], [0], [0], [1], [0, 0, 1, 1], [], []>} : vector<36x80xf32>, vector<80x120xf32>, vector<36x120xf32> -> vector<36x120xf32>
    %69 = vector.extract_strided_slice %64 {offsets = [1, 0], sizes = [36, 80], strides = [1, 1]} : vector<40x80xf32> to vector<36x80xf32>
    %c1_56 = arith.constant 1 : index
    %c0_57 = arith.constant 0 : index
    %c0_58 = arith.constant 0 : index
    %70 = vector.load %arg10[%c1_56, %c0_57, %c0_58] : memref<5x80x120xf32, #tpu.memory_space<vmem>>, vector<1x80x120xf32>
    %71 = vector.shape_cast %70 : vector<1x80x120xf32> to vector<80x120xf32>
    %cst_59 = arith.constant dense<0.000000e+00> : vector<36x120xf32>
    %72 = tpu.matmul %69, %71, %cst_59 {dimension_numbers = #tpu.dot_dimension_numbers<[1], [0], [0], [1], [0, 0, 1, 1], [], []>} : vector<36x80xf32>, vector<80x120xf32>, vector<36x120xf32> -> vector<36x120xf32>
    %73 = arith.addf %68, %72 : vector<36x120xf32>
    %74 = vector.extract_strided_slice %64 {offsets = [2, 0], sizes = [36, 80], strides = [1, 1]} : vector<40x80xf32> to vector<36x80xf32>
    %c2_60 = arith.constant 2 : index
    %c0_61 = arith.constant 0 : index
    %c0_62 = arith.constant 0 : index
    %75 = vector.load %arg10[%c2_60, %c0_61, %c0_62] : memref<5x80x120xf32, #tpu.memory_space<vmem>>, vector<1x80x120xf32>
    %76 = vector.shape_cast %75 : vector<1x80x120xf32> to vector<80x120xf32>
    %cst_63 = arith.constant dense<0.000000e+00> : vector<36x120xf32>
    %77 = tpu.matmul %74, %76, %cst_63 {dimension_numbers = #tpu.dot_dimension_numbers<[1], [0], [0], [1], [0, 0, 1, 1], [], []>} : vector<36x80xf32>, vector<80x120xf32>, vector<36x120xf32> -> vector<36x120xf32>
    %78 = arith.addf %73, %77 : vector<36x120xf32>
    %79 = vector.extract_strided_slice %64 {offsets = [3, 0], sizes = [36, 80], strides = [1, 1]} : vector<40x80xf32> to vector<36x80xf32>
    %c3_64 = arith.constant 3 : index
    %c0_65 = arith.constant 0 : index
    %c0_66 = arith.constant 0 : index
    %80 = vector.load %arg10[%c3_64, %c0_65, %c0_66] : memref<5x80x120xf32, #tpu.memory_space<vmem>>, vector<1x80x120xf32>
    %81 = vector.shape_cast %80 : vector<1x80x120xf32> to vector<80x120xf32>
    %cst_67 = arith.constant dense<0.000000e+00> : vector<36x120xf32>
    %82 = tpu.matmul %79, %81, %cst_67 {dimension_numbers = #tpu.dot_dimension_numbers<[1], [0], [0], [1], [0, 0, 1, 1], [], []>} : vector<36x80xf32>, vector<80x120xf32>, vector<36x120xf32> -> vector<36x120xf32>
    %83 = arith.addf %78, %82 : vector<36x120xf32>
    %84 = vector.extract_strided_slice %64 {offsets = [4, 0], sizes = [36, 80], strides = [1, 1]} : vector<40x80xf32> to vector<36x80xf32>
    %c4_68 = arith.constant 4 : index
    %c0_69 = arith.constant 0 : index
    %c0_70 = arith.constant 0 : index
    %85 = vector.load %arg10[%c4_68, %c0_69, %c0_70] : memref<5x80x120xf32, #tpu.memory_space<vmem>>, vector<1x80x120xf32>
    %86 = vector.shape_cast %85 : vector<1x80x120xf32> to vector<80x120xf32>
    %cst_71 = arith.constant dense<0.000000e+00> : vector<36x120xf32>
    %87 = tpu.matmul %84, %86, %cst_71 {dimension_numbers = #tpu.dot_dimension_numbers<[1], [0], [0], [1], [0, 0, 1, 1], [], []>} : vector<36x80xf32>, vector<80x120xf32>, vector<36x120xf32> -> vector<36x120xf32>
    %88 = arith.addf %83, %87 : vector<36x120xf32>
    %c0_72 = arith.constant 0 : index
    %c0_73 = arith.constant 0 : index
    %89 = vector.load %arg11[%c0_72, %c0_73] : memref<1x120xf32, #tpu.memory_space<vmem>>, vector<1x120xf32>
    %90 = vector.broadcast %89 : vector<1x120xf32> to vector<36x120xf32>
    %91 = arith.addf %88, %90 : vector<36x120xf32>
    %92 = math.tanh %91 : vector<36x120xf32>
    %c0_74 = arith.constant 0 : index
    %c0_75 = arith.constant 0 : index
    %93 = vector.load %arg12[%c0_74, %c0_75] : memref<8x36xf32, #tpu.memory_space<vmem>>, vector<8x36xf32>
    %cst_76 = arith.constant dense<0.000000e+00> : vector<8x120xf32>
    %94 = tpu.matmul %93, %92, %cst_76 {dimension_numbers = #tpu.dot_dimension_numbers<[1], [0], [0], [1], [0, 0, 1, 1], [], []>} : vector<8x36xf32>, vector<36x120xf32>, vector<8x120xf32> -> vector<8x120xf32>
    %c0_77 = arith.constant 0 : index
    %c0_78 = arith.constant 0 : index
    %95 = vector.load %arg13[%c0_77, %c0_78] : memref<120x84xf32, #tpu.memory_space<vmem>>, vector<120x84xf32>
    %cst_79 = arith.constant dense<0.000000e+00> : vector<8x84xf32>
    %96 = tpu.matmul %94, %95, %cst_79 {dimension_numbers = #tpu.dot_dimension_numbers<[1], [0], [0], [1], [0, 0, 1, 1], [], []>} : vector<8x120xf32>, vector<120x84xf32>, vector<8x84xf32> -> vector<8x84xf32>
    %c0_80 = arith.constant 0 : index
    %c0_81 = arith.constant 0 : index
    %97 = vector.load %arg14[%c0_80, %c0_81] : memref<1x84xf32, #tpu.memory_space<vmem>>, vector<1x84xf32>
    %98 = vector.broadcast %97 : vector<1x84xf32> to vector<8x84xf32>
    %99 = arith.addf %96, %98 : vector<8x84xf32>
    %100 = math.tanh %99 : vector<8x84xf32>
    %c0_82 = arith.constant 0 : index
    %c0_83 = arith.constant 0 : index
    %101 = vector.load %arg15[%c0_82, %c0_83] : memref<84x2xf32, #tpu.memory_space<vmem>>, vector<84x2xf32>
    %cst_84 = arith.constant dense<0.000000e+00> : vector<8x2xf32>
    %102 = tpu.matmul %100, %101, %cst_84 {dimension_numbers = #tpu.dot_dimension_numbers<[1], [0], [0], [1], [0, 0, 1, 1], [], []>} : vector<8x84xf32>, vector<84x2xf32>, vector<8x2xf32> -> vector<8x2xf32>
    %c0_85 = arith.constant 0 : index
    %c0_86 = arith.constant 0 : index
    %103 = vector.load %arg16[%c0_85, %c0_86] : memref<1x2xf32, #tpu.memory_space<vmem>>, vector<1x2xf32>
    %104 = vector.broadcast %103 : vector<1x2xf32> to vector<8x2xf32>
    %105 = arith.addf %102, %104 : vector<8x2xf32>
    %c0_87 = arith.constant 0 : index
    %c0_88 = arith.constant 0 : index
    %106 = vector.load %arg17[%c0_87, %c0_88] : memref<8x2xf32, #tpu.memory_space<vmem>>, vector<8x2xf32>
    tpu.vector_store %arg17[%c0_87, %c0_88], %105 {strides = array<i32>} : memref<8x2xf32, #tpu.memory_space<vmem>>, vector<8x2xf32>,
    return
  }
  func.func @transform_0(%arg0: i32) -> (i32, i32) {
    %c0_i32 = arith.constant 0 : i32
    %c0_i32_0 = arith.constant 0 : i32
    return %arg0, %c0_i32 : i32, i32
  }
  func.func @transform_1(%arg0: i32) -> (i32, i32, i32) {
    %c0_i32 = arith.constant 0 : i32
    %c0_i32_0 = arith.constant 0 : i32
    %c0_i32_1 = arith.constant 0 : i32
    %c0_i32_2 = arith.constant 0 : i32
    return %c0_i32, %c0_i32_0, %c0_i32_1 : i32, i32, i32
  }
  func.func @transform_2(%arg0: i32) -> (i32, i32) {
    %c0_i32 = arith.constant 0 : i32
    %c0_i32_0 = arith.constant 0 : i32
    %c0_i32_1 = arith.constant 0 : i32
    return %c0_i32, %c0_i32_0 : i32, i32
  }
  func.func @transform_3(%arg0: i32) -> (i32, i32) {
    %c0_i32 = arith.constant 0 : i32
    %c0_i32_0 = arith.constant 0 : i32
    %c0_i32_1 = arith.constant 0 : i32
    return %c0_i32, %c0_i32_0 : i32, i32
  }
  func.func @transform_4(%arg0: i32) -> (i32, i32) {
    %c0_i32 = arith.constant 0 : i32
    %c0_i32_0 = arith.constant 0 : i32
    %c0_i32_1 = arith.constant 0 : i32
    return %c0_i32, %c0_i32_0 : i32, i32
  }
  func.func @transform_5(%arg0: i32) -> (i32, i32, i32) {
    %c0_i32 = arith.constant 0 : i32
    %c0_i32_0 = arith.constant 0 : i32
    %c0_i32_1 = arith.constant 0 : i32
    %c0_i32_2 = arith.constant 0 : i32
    return %c0_i32, %c0_i32_0, %c0_i32_1 : i32, i32, i32
  }
  func.func @transform_6(%arg0: i32) -> (i32, i32) {
    %c0_i32 = arith.constant 0 : i32
    %c0_i32_0 = arith.constant 0 : i32
    %c0_i32_1 = arith.constant 0 : i32
    return %c0_i32, %c0_i32_0 : i32, i32
  }
  func.func @transform_7(%arg0: i32) -> (i32, i32) {
    %c0_i32 = arith.constant 0 : i32
    %c0_i32_0 = arith.constant 0 : i32
    %c0_i32_1 = arith.constant 0 : i32
    return %c0_i32, %c0_i32_0 : i32, i32
  }
  func.func @transform_8(%arg0: i32) -> (i32, i32) {
    %c0_i32 = arith.constant 0 : i32
    %c0_i32_0 = arith.constant 0 : i32
    %c0_i32_1 = arith.constant 0 : i32
    return %c0_i32, %c0_i32_0 : i32, i32
  }
  func.func @transform_9(%arg0: i32) -> (i32, i32, i32) {
    %c0_i32 = arith.constant 0 : i32
    %c0_i32_0 = arith.constant 0 : i32
    %c0_i32_1 = arith.constant 0 : i32
    %c0_i32_2 = arith.constant 0 : i32
    return %c0_i32, %c0_i32_0, %c0_i32_1 : i32, i32, i32
  }
  func.func @transform_10(%arg0: i32) -> (i32, i32) {
    %c0_i32 = arith.constant 0 : i32
    %c0_i32_0 = arith.constant 0 : i32
    %c0_i32_1 = arith.constant 0 : i32
    return %c0_i32, %c0_i32_0 : i32, i32
  }
  func.func @transform_11(%arg0: i32) -> (i32, i32) {
    %c0_i32 = arith.constant 0 : i32
    %c0_i32_0 = arith.constant 0 : i32
    %c0_i32_1 = arith.constant 0 : i32
    return %c0_i32, %c0_i32_0 : i32, i32
  }
  func.func @transform_12(%arg0: i32) -> (i32, i32) {
    %c0_i32 = arith.constant 0 : i32
    %c0_i32_0 = arith.constant 0 : i32
    %c0_i32_1 = arith.constant 0 : i32
    return %c0_i32, %c0_i32_0 : i32, i32
  }
  func.func @transform_13(%arg0: i32) -> (i32, i32) {
    %c0_i32 = arith.constant 0 : i32
    %c0_i32_0 = arith.constant 0 : i32
    %c0_i32_1 = arith.constant 0 : i32
    return %c0_i32, %c0_i32_0 : i32, i32
  }
  func.func @transform_14(%arg0: i32) -> (i32, i32) {
    %c0_i32 = arith.constant 0 : i32
    %c0_i32_0 = arith.constant 0 : i32
    %c0_i32_1 = arith.constant 0 : i32
    return %c0_i32, %c0_i32_0 : i32, i32
  }
  func.func @transform_15(%arg0: i32) -> (i32, i32) {
    %c0_i32 = arith.constant 0 : i32
    %c0_i32_0 = arith.constant 0 : i32
    %c0_i32_1 = arith.constant 0 : i32
    return %c0_i32, %c0_i32_0 : i32, i32
  }
  func.func @transform_16(%arg0: i32) -> (i32, i32) {
    %c0_i32 = arith.constant 0 : i32
    %c0_i32_0 = arith.constant 0 : i32
    return %arg0, %c0_i32 : i32, i32
  }
}

</mosaic_0001>

<llo_original>
// kernel: lenet_forward.1
$region0: #{lenet_forward.1}
  #allocation0 [shape = 'u32[]', space=smem, size = 0x4, offset = 0x4, fixed_abs, tag = 'smem constant byte address 0x4 - core index']
  #allocation1 [shape = 'u32[144,128]{1,0:T(1,128)}', space=vmem, size = 0x12000, scoped, tag = 'internal scratch']
  %s0 = inlined_call_operand.vmem [shape: f32[256,96], index: 0, kind: input, shape index: {}]
  %s1 = inlined_call_operand.vmem [shape: f32[5,96,168], index: 1, kind: input, shape index: {}]
  %s2 = inlined_call_operand.vmem [shape: f32[1,168], index: 2, kind: input, shape index: {}]
  %s3 = inlined_call_operand.vmem [shape: f32[112,252], index: 3, kind: input, shape index: {}]
  %s4 = inlined_call_operand.vmem [shape: f32[168,84], index: 4, kind: input, shape index: {}]
  %s5 = inlined_call_operand.vmem [shape: f32[5,84,160], index: 5, kind: input, shape index: {}]
  %s6 = inlined_call_operand.vmem [shape: f32[1,160], index: 6, kind: input, shape index: {}]
  %s7 = inlined_call_operand.vmem [shape: f32[40,108], index: 7, kind: input, shape index: {}]
  %s8 = inlined_call_operand.vmem [shape: f32[160,80], index: 8, kind: input, shape index: {}]
  %s9 = inlined_call_operand.vmem [shape: f32[5,80,120], index: 9, kind: input, shape index: {}]
  %s10 = inlined_call_operand.vmem [shape: f32[1,120], index: 10, kind: input, shape index: {}]
  %s11 = inlined_call_operand.vmem [shape: f32[8,36], index: 11, kind: input, shape index: {}]
  %s12 = inlined_call_operand.vmem [shape: f32[120,84], index: 12, kind: input, shape index: {}]
  %s13 = inlined_call_operand.vmem [shape: f32[1,84], index: 13, kind: input, shape index: {}]
  %s14 = inlined_call_operand.vmem [shape: f32[84,2], index: 14, kind: input, shape index: {}]
  %s15 = inlined_call_operand.vmem [shape: f32[1,2], index: 15, kind: input, shape index: {}]
  %s16 = inlined_call_operand.vmem [shape: f32[8,2], index: 16, kind: output, shape index: {}]
  %s17 = sld [smem:[#allocation0]]
  $region74: #{lenet_forward.1} parent=0
    _
  %s19 = ssub.s32 1, %s17
  %s20 = scalar_select 0, %s19, %s17
  // Predicated region
  $region2: #{lenet_forward.1} parent=0 // pred_check
    _
  $region3: #{lenet_forward.1} parent=0 // pred_check_branch
    %22 = sbr.rel (0) target = $region5
  $region4: #{lenet_forward.1} parent=0 // pred_region
    _
  $region5: #{lenet_forward.1} parent=0 // pred_fallthru
    _
  // Predicated region
  $region6: #{lenet_forward.1} parent=0 // pred_check
    _
  $region7: #{lenet_forward.1} parent=0 // pred_check_branch
    %24 = sbr.rel (0) target = $region9
  $region8: #{lenet_forward.1} parent=0 // pred_region
    _
  $region9: #{lenet_forward.1} parent=0 // pred_fallthru
    _
  // Predicated region
  $region10: #{lenet_forward.1} parent=0 // pred_check
    _
  $region11: #{lenet_forward.1} parent=0 // pred_check_branch
    %26 = sbr.rel (0) target = $region13
  $region12: #{lenet_forward.1} parent=0 // pred_region
    _
  $region13: #{lenet_forward.1} parent=0 // pred_fallthru
    _
  // Predicated region
  $region14: #{lenet_forward.1} parent=0 // pred_check
    _
  $region15: #{lenet_forward.1} parent=0 // pred_check_branch
    %28 = sbr.rel (0) target = $region17
  $region16: #{lenet_forward.1} parent=0 // pred_region
    _
  $region17: #{lenet_forward.1} parent=0 // pred_fallthru
    _
  // Predicated region
  $region18: #{lenet_forward.1} parent=0 // pred_check
    _
  $region19: #{lenet_forward.1} parent=0 // pred_check_branch
    %30 = sbr.rel (0) target = $region21
  $region20: #{lenet_forward.1} parent=0 // pred_region
    _
  $region21: #{lenet_forward.1} parent=0 // pred_fallthru
    _
  // Predicated region
  $region22: #{lenet_forward.1} parent=0 // pred_check
    _
  $region23: #{lenet_forward.1} parent=0 // pred_check_branch
    %32 = sbr.rel (0) target = $region25
  $region24: #{lenet_forward.1} parent=0 // pred_region
    _
  $region25: #{lenet_forward.1} parent=0 // pred_fallthru
    _
  // Predicated region
  $region26: #{lenet_forward.1} parent=0 // pred_check
    _
  $region27: #{lenet_forward.1} parent=0 // pred_check_branch
    %34 = sbr.rel (0) target = $region29
  $region28: #{lenet_forward.1} parent=0 // pred_region
    _
  $region29: #{lenet_forward.1} parent=0 // pred_fallthru
    _
  // Predicated region
  $region30: #{lenet_forward.1} parent=0 // pred_check
    _
  $region31: #{lenet_forward.1} parent=0 // pred_check_branch
    %36 = sbr.rel (0) target = $region33
  $region32: #{lenet_forward.1} parent=0 // pred_region
    _
  $region33: #{lenet_forward.1} parent=0 // pred_fallthru
    _
  // Predicated region
  $region34: #{lenet_forward.1} parent=0 // pred_check
    _
  $region35: #{lenet_forward.1} parent=0 // pred_check_branch
    %38 = sbr.rel (0) target = $region37
  $region36: #{lenet_forward.1} parent=0 // pred_region
    _
  $region37: #{lenet_forward.1} parent=0 // pred_fallthru
    _
  // Predicated region
  $region38: #{lenet_forward.1} parent=0 // pred_check
    _
  $region39: #{lenet_forward.1} parent=0 // pred_check_branch
    %40 = sbr.rel (0) target = $region41
  $region40: #{lenet_forward.1} parent=0 // pred_region
    _
  $region41: #{lenet_forward.1} parent=0 // pred_fallthru
    _
  // Predicated region
  $region42: #{lenet_forward.1} parent=0 // pred_check
    _
  $region43: #{lenet_forward.1} parent=0 // pred_check_branch
    %42 = sbr.rel (0) target = $region45
  $region44: #{lenet_forward.1} parent=0 // pred_region
    _
  $region45: #{lenet_forward.1} parent=0 // pred_fallthru
    _
  // Predicated region
  $region46: #{lenet_forward.1} parent=0 // pred_check
    _
  $region47: #{lenet_forward.1} parent=0 // pred_check_branch
    %44 = sbr.rel (0) target = $region49
  $region48: #{lenet_forward.1} parent=0 // pred_region
    _
  $region49: #{lenet_forward.1} parent=0 // pred_fallthru
    _
  // Predicated region
  $region50: #{lenet_forward.1} parent=0 // pred_check
    _
  $region51: #{lenet_forward.1} parent=0 // pred_check_branch
    %46 = sbr.rel (0) target = $region53
  $region52: #{lenet_forward.1} parent=0 // pred_region
    _
  $region53: #{lenet_forward.1} parent=0 // pred_fallthru
    _
  // Predicated region
  $region54: #{lenet_forward.1} parent=0 // pred_check
    _
  $region55: #{lenet_forward.1} parent=0 // pred_check_branch
    %48 = sbr.rel (0) target = $region57
  $region56: #{lenet_forward.1} parent=0 // pred_region
    _
  $region57: #{lenet_forward.1} parent=0 // pred_fallthru
    _
  // Predicated region
  $region58: #{lenet_forward.1} parent=0 // pred_check
    _
  $region59: #{lenet_forward.1} parent=0 // pred_check_branch
    %50 = sbr.rel (0) target = $region61
  $region60: #{lenet_forward.1} parent=0 // pred_region
    _
  $region61: #{lenet_forward.1} parent=0 // pred_fallthru
    _
  // Predicated region
  $region62: #{lenet_forward.1} parent=0 // pred_check
    _
  $region63: #{lenet_forward.1} parent=0 // pred_check_branch
    %52 = sbr.rel (0) target = $region65
  $region64: #{lenet_forward.1} parent=0 // pred_region
    _
  $region65: #{lenet_forward.1} parent=0 // pred_fallthru
    _
  %v53 = vld [vmem:[%s0] sm:$0xff]
  %v54 = vld [vmem:[%s0 + $0x8] sm:$0xff]
  %v55 = vld [vmem:[%s0 + $0x10] sm:$0xff]
  %v56 = vld [vmem:[%s0 + $0x18] sm:$0xff]
  %v57 = vld [vmem:[%s0 + $0x20] sm:$0xff]
  %v58 = vld [vmem:[%s0 + $0x28] sm:$0xff]
  %v59 = vld [vmem:[%s0 + $0x30] sm:$0xff]
  %v60 = vld [vmem:[%s0 + $0x38] sm:$0xff]
  %v61 = vld [vmem:[%s0 + $0x40] sm:$0xff]
  %v62 = vld [vmem:[%s0 + $0x48] sm:$0xff]
  %v63 = vld [vmem:[%s0 + $0x50] sm:$0xff]
  %v64 = vld [vmem:[%s0 + $0x58] sm:$0xff]
  %v65 = vld [vmem:[%s0 + $0x60] sm:$0xff]
  %v66 = vld [vmem:[%s0 + $0x68] sm:$0xff]
  %v67 = vld [vmem:[%s0 + $0x70] sm:$0xff]
  %v68 = vld [vmem:[%s0 + $0x78] sm:$0xff]
  %v69 = vld [vmem:[%s0 + $0x80] sm:$0xff]
  %v70 = vld [vmem:[%s0 + $0x88] sm:$0xff]
  %v71 = vld [vmem:[%s0 + $0x90] sm:$0xff]
  %v72 = vld [vmem:[%s0 + $0x98] sm:$0xff]
  %v73 = vld [vmem:[%s0 + $0xa0] sm:$0xff]
  %v74 = vld [vmem:[%s0 + $0xa8] sm:$0xff]
  %v75 = vld [vmem:[%s0 + $0xb0] sm:$0xff]
  %v76 = vld [vmem:[%s0 + $0xb8] sm:$0xff]
  %v77 = vld [vmem:[%s0 + $0xc0] sm:$0xff]
  %v78 = vld [vmem:[%s0 + $0xc8] sm:$0xff]
  %v79 = vld [vmem:[%s0 + $0xd0] sm:$0xff]
  %v80 = vld [vmem:[%s0 + $0xd8] sm:$0xff]
  %v81 = vld [vmem:[%s0 + $0xe0] sm:$0xff]
  %v82 = vld [vmem:[%s0 + $0xe8] sm:$0xff]
  %v83 = vld [vmem:[%s0 + $0xf0] sm:$0xff]
  %v84 = vld [vmem:[%s0 + $0xf8] sm:$0xff]
  %v85 = vld [vmem:[%s1] sm:$0xff]
  %v86 = vld [vmem:[%s1 + $0x8] sm:$0xff]
  %v87 = vld [vmem:[%s1 + $0x10] sm:$0xff]
  %v88 = vld [vmem:[%s1 + $0x18] sm:$0xff]
  %v89 = vld [vmem:[%s1 + $0x20] sm:$0xff]
  %v90 = vld [vmem:[%s1 + $0x28] sm:$0xff]
  %v91 = vld [vmem:[%s1 + $0x30] sm:$0xff]
  %v92 = vld [vmem:[%s1 + $0x38] sm:$0xff]
  %v93 = vld [vmem:[%s1 + $0x40] sm:$0xff]
  %v94 = vld [vmem:[%s1 + $0x48] sm:$0xff]
  %v95 = vld [vmem:[%s1 + $0x50] sm:$0xff]
  %v96 = vld [vmem:[%s1 + $0x58] sm:$0xff]
  %v97 = vld [vmem:[%s1 + $0x60] sm:$0xff]
  %v98 = vld [vmem:[%s1 + $0x68] sm:$0xff]
  %v99 = vld [vmem:[%s1 + $0x70] sm:$0xff]
  %v100 = vld [vmem:[%s1 + $0x78] sm:$0xff]
  %v101 = vld [vmem:[%s1 + $0x80] sm:$0xff]
  %v102 = vld [vmem:[%s1 + $0x88] sm:$0xff]
  %v103 = vld [vmem:[%s1 + $0x90] sm:$0xff]
  %v104 = vld [vmem:[%s1 + $0x98] sm:$0xff]
  %v105 = vld [vmem:[%s1 + $0xa0] sm:$0xff]
  %v106 = vld [vmem:[%s1 + $0xa8] sm:$0xff]
  %v107 = vld [vmem:[%s1 + $0xb0] sm:$0xff]
  %v108 = vld [vmem:[%s1 + $0xb8] sm:$0xff]
  %s109 = scalar_lea.vmem %s1, 192
  %v110 = vld [vmem:[%s109] sm:$0xff]
  %v111 = vld [vmem:[%s109 + $0x8] sm:$0xff]
  %v112 = vld [vmem:[%s109 + $0x10] sm:$0xff]
  %v113 = vld [vmem:[%s109 + $0x18] sm:$0xff]
  %v114 = vld [vmem:[%s109 + $0x20] sm:$0xff]
  %v115 = vld [vmem:[%s109 + $0x28] sm:$0xff]
  %v116 = vld [vmem:[%s109 + $0x30] sm:$0xff]
  %v117 = vld [vmem:[%s109 + $0x38] sm:$0xff]
  %v118 = vld [vmem:[%s109 + $0x40] sm:$0xff]
  %v119 = vld [vmem:[%s109 + $0x48] sm:$0xff]
  %v120 = vld [vmem:[%s109 + $0x50] sm:$0xff]
  %v121 = vld [vmem:[%s109 + $0x58] sm:$0xff]
  %v122 = vld [vmem:[%s109 + $0x60] sm:$0xff]
  %v123 = vld [vmem:[%s109 + $0x68] sm:$0xff]
  %v124 = vld [vmem:[%s109 + $0x70] sm:$0xff]
  %v125 = vld [vmem:[%s109 + $0x78] sm:$0xff]
  %v126 = vld [vmem:[%s109 + $0x80] sm:$0xff]
  %v127 = vld [vmem:[%s109 + $0x88] sm:$0xff]
  %v128 = vld [vmem:[%s109 + $0x90] sm:$0xff]
  %v129 = vld [vmem:[%s109 + $0x98] sm:$0xff]
  %v130 = vld [vmem:[%s109 + $0xa0] sm:$0xff]
  %v131 = vld [vmem:[%s109 + $0xa8] sm:$0xff]
  %v132 = vld [vmem:[%s109 + $0xb0] sm:$0xff]
  %v133 = vld [vmem:[%s109 + $0xb8] sm:$0xff]
  %vm166 = vcmask 1046528
  %v167 = vrot.slane %v53, 1
  %v168 = vrot.slane %v54, 1
  %v169 = vsel %vm166, %v167, %v168
  %v170 = vrot.slane %v55, 1
  %v171 = vsel %vm166, %v168, %v170
  %v172 = vrot.slane %v56, 1
  %v173 = vsel %vm166, %v170, %v172
  %v174 = vrot.slane %v57, 1
  %v175 = vsel %vm166, %v172, %v174
  %v176 = vrot.slane %v58, 1
  %v177 = vsel %vm166, %v174, %v176
  %v178 = vrot.slane %v59, 1
  %v179 = vsel %vm166, %v176, %v178
  %v180 = vrot.slane %v60, 1
  %v181 = vsel %vm166, %v178, %v180
  %v182 = vrot.slane %v61, 1
  %v183 = vsel %vm166, %v180, %v182
  %v184 = vrot.slane %v62, 1
  %v185 = vsel %vm166, %v182, %v184
  %v186 = vrot.slane %v63, 1
  %v187 = vsel %vm166, %v184, %v186
  %v188 = vrot.slane %v64, 1
  %v189 = vsel %vm166, %v186, %v188
  %v190 = vrot.slane %v65, 1
  %v191 = vsel %vm166, %v188, %v190
  %v192 = vrot.slane %v66, 1
  %v193 = vsel %vm166, %v190, %v192
  %v194 = vrot.slane %v67, 1
  %v195 = vsel %vm166, %v192, %v194
  %v196 = vrot.slane %v68, 1
  %v197 = vsel %vm166, %v194, %v196
  %v198 = vrot.slane %v69, 1
  %v199 = vsel %vm166, %v196, %v198
  %v200 = vrot.slane %v70, 1
  %v201 = vsel %vm166, %v198, %v200
  %v202 = vrot.slane %v71, 1
  %v203 = vsel %vm166, %v200, %v202
  %v204 = vrot.slane %v72, 1
  %v205 = vsel %vm166, %v202, %v204
  %v206 = vrot.slane %v73, 1
  %v207 = vsel %vm166, %v204, %v206
  %v208 = vrot.slane %v74, 1
  %v209 = vsel %vm166, %v206, %v208
  %v210 = vrot.slane %v75, 1
  %v211 = vsel %vm166, %v208, %v210
  %v212 = vrot.slane %v76, 1
  %v213 = vsel %vm166, %v210, %v212
  %v214 = vrot.slane %v77, 1
  %v215 = vsel %vm166, %v212, %v214
  %v216 = vrot.slane %v78, 1
  %v217 = vsel %vm166, %v214, %v216
  %v218 = vrot.slane %v79, 1
  %v219 = vsel %vm166, %v216, %v218
  %v220 = vrot.slane %v80, 1
  %v221 = vsel %vm166, %v218, %v220
  %v222 = vrot.slane %v81, 1
  %v223 = vsel %vm166, %v220, %v222
  %v224 = vrot.slane %v82, 1
  %v225 = vsel %vm166, %v222, %v224
  %v226 = vrot.slane %v83, 1
  %v227 = vsel %vm166, %v224, %v226
  %v228 = vrot.slane %v84, 1
  %v229 = vsel %vm166, %v226, %v228
  %vm230 = vcmask 785408
  %v231 = vsel %vm230, %v169, 0
  %v233 = vsel %vm230, %v171, 0
  %v235 = vsel %vm230, %v173, 0
  %v237 = vsel %vm230, %v175, 0
  %v239 = vsel %vm230, %v177, 0
  %v241 = vsel %vm230, %v179, 0
  %v243 = vsel %vm230, %v181, 0
  %v245 = vsel %vm230, %v183, 0
  %v247 = vsel %vm230, %v185, 0
  %v249 = vsel %vm230, %v187, 0
  %v251 = vsel %vm230, %v189, 0
  %v253 = vsel %vm230, %v191, 0
  %v255 = vsel %vm230, %v193, 0
  %v257 = vsel %vm230, %v195, 0
  %v259 = vsel %vm230, %v197, 0
  %v261 = vsel %vm230, %v199, 0
  %v263 = vsel %vm230, %v201, 0
  %v265 = vsel %vm230, %v203, 0
  %v267 = vsel %vm230, %v205, 0
  %v269 = vsel %vm230, %v207, 0
  %v271 = vsel %vm230, %v209, 0
  %v273 = vsel %vm230, %v211, 0
  %v275 = vsel %vm230, %v213, 0
  %v277 = vsel %vm230, %v215, 0
  %v279 = vsel %vm230, %v217, 0
  %v281 = vsel %vm230, %v219, 0
  %v283 = vsel %vm230, %v221, 0
  %v285 = vsel %vm230, %v223, 0
  %v287 = vsel %vm230, %v225, 0
  %v289 = vsel %vm230, %v227, 0
  %v291 = vsel %vm230, %v229, 0
  %v293 = vsel %vm230, %v228, 0
  %295 = vmatprep.subr.mxu0 0.0
  %296 = vmatpush1.msra.mxu0 0.0
  %297 = vmatprep.subr.mxu0 0.0
  %298 = vmatpush1.msra.mxu0 0.0
  %299 = vmatprep.subr.mxu0 0.0
  %300 = vmatpush1.msra.mxu0 0.0
  %301 = vmatprep.subr.mxu0 0.0
  %302 = vmatpush1.msra.mxu0 0.0
  %303 = vmatprep.subr.mxu0 %v133
  %304 = vmatpush1.msra.mxu0 %v132
  %305 = vmatprep.subr.mxu0 %v131
  %306 = vmatpush1.msra.mxu0 %v130
  %307 = vmatprep.subr.mxu0 %v129
  %308 = vmatpush1.msra.mxu0 %v128
  %309 = vmatprep.subr.mxu0 %v127
  %310 = vmatpush1.msra.mxu0 %v126
  %311 = vmatprep.subr.mxu0 %v125
  %312 = vmatpush1.msra.mxu0 %v124
  %313 = vmatprep.subr.mxu0 %v123
  %314 = vmatpush1.msra.mxu0 %v122
  %315 = vmatprep.subr.mxu0 %v121
  %316 = vmatpush1.msra.mxu0 %v120
  %317 = vmatprep.subr.mxu0 %v119
  %318 = vmatpush1.msra.mxu0 %v118
  %319 = vmatprep.subr.mxu0 %v117
  %320 = vmatpush1.msra.mxu0 %v116
  %321 = vmatprep.subr.mxu0 %v115
  %322 = vmatpush1.msra.mxu0 %v114
  %323 = vmatprep.subr.mxu0 %v113
  %324 = vmatpush1.msra.mxu0 %v112
  %325 = vmatprep.subr.mxu0 %v111
  %326 = vmatpush1.msra.mxu0 %v110
  %327 = vmatprep.subr.mxu0 0.0
  %328 = vmatpush2.msra.mxu0 0.0
  %329 = vmatprep.subr.mxu0 0.0
  %330 = vmatpush2.msra.mxu0 0.0
  %331 = vmatprep.subr.mxu0 0.0
  %332 = vmatpush2.msra.mxu0 0.0
  %333 = vmatprep.subr.mxu0 0.0
  %334 = vmatpush2.msra.mxu0 0.0
  %335 = vmatprep.subr.mxu0 0.0
  %336 = vmatpush2.msra.mxu0 0.0
  %337 = vmatprep.subr.mxu0 0.0
  %338 = vmatpush2.msra.mxu0 0.0
  %339 = vmatprep.subr.mxu0 0.0
  %340 = vmatpush2.msra.mxu0 0.0
  %341 = vmatprep.subr.mxu0 0.0
  %342 = vmatpush2.msra.mxu0 0.0
  %343 = vmatprep.subr.mxu0 0.0
  %344 = vmatpush2.msra.mxu0 0.0
  %345 = vmatprep.subr.mxu0 0.0
  %346 = vmatpush2.msra.mxu0 0.0
  %347 = vmatprep.subr.mxu0 0.0
  %348 = vmatpush2.msra.mxu0 0.0
  %349 = vmatprep.subr.mxu0 0.0
  %350 = vmatpush2.msra.mxu0 0.0
  %351 = vmatprep.subr.mxu0 0.0
  %352 = vmatpush2.msra.mxu0 0.0
  %353 = vmatprep.subr.mxu0 0.0
  %354 = vmatpush2.msra.mxu0 0.0
  %355 = vmatprep.subr.mxu0 0.0
  %356 = vmatpush2.msra.mxu0 0.0
  %357 = vmatprep.subr.mxu0 0.0
  %358 = vmatpush2.msra.mxu0 0.0
  %359 = vmatprep.mubr.f32.mxu0 0.0
  %360 = vmatmul.mubr.f32.gmra.mxu0 %v231
  %v361 = vpop.f32.mrf.mxu0
  %v362 = vadd.f32 0.0, %v361
  %v363 = vpop.f32.mrf.mxu0
  %v364 = vadd.f32 0.0, %v363
  %365 = vmatprep.mubr.f32.mxu0 0.0
  %366 = vmatmul.mubr.f32.gmra.mxu0 %v233
  %v367 = vpop.f32.mrf.mxu0
  %v368 = vadd.f32 0.0, %v367
  %v369 = vpop.f32.mrf.mxu0
  %v370 = vadd.f32 0.0, %v369
  %371 = vmatprep.mubr.f32.mxu0 0.0
  %372 = vmatmul.mubr.f32.gmra.mxu0 %v235
  %v373 = vpop.f32.mrf.mxu0
  %v374 = vadd.f32 0.0, %v373
  %v375 = vpop.f32.mrf.mxu0
  %v376 = vadd.f32 0.0, %v375
  %377 = vmatprep.mubr.f32.mxu0 0.0
  %378 = vmatmul.mubr.f32.gmra.mxu0 %v237
  %v379 = vpop.f32.mrf.mxu0
  %v380 = vadd.f32 0.0, %v379
  %v381 = vpop.f32.mrf.mxu0
  %v382 = vadd.f32 0.0, %v381
  %383 = vmatprep.mubr.f32.mxu0 0.0
  %384 = vmatmul.mubr.f32.gmra.mxu0 %v239
  %v385 = vpop.f32.mrf.mxu0
  %v386 = vadd.f32 0.0, %v385
  %v387 = vpop.f32.mrf.mxu0
  %v388 = vadd.f32 0.0, %v387
  %389 = vmatprep.mubr.f32.mxu0 0.0
  %390 = vmatmul.mubr.f32.gmra.mxu0 %v241
  %v391 = vpop.f32.mrf.mxu0
  %v392 = vadd.f32 0.0, %v391
  %v393 = vpop.f32.mrf.mxu0
  %v394 = vadd.f32 0.0, %v393
  %395 = vmatprep.mubr.f32.mxu0 0.0
  %396 = vmatmul.mubr.f32.gmra.mxu0 %v243
  %v397 = vpop.f32.mrf.mxu0
  %v398 = vadd.f32 0.0, %v397
  %v399 = vpop.f32.mrf.mxu0
  %v400 = vadd.f32 0.0, %v399
  %401 = vmatprep.mubr.f32.mxu0 0.0
  %402 = vmatmul.mubr.f32.gmra.mxu0 %v245
  %v403 = vpop.f32.mrf.mxu0
  %v404 = vadd.f32 0.0, %v403
  %v405 = vpop.f32.mrf.mxu0
  %v406 = vadd.f32 0.0, %v405
  %407 = vmatprep.mubr.f32.mxu0 0.0
  %408 = vmatmul.mubr.f32.gmra.mxu0 %v247
  %v409 = vpop.f32.mrf.mxu0
  %v410 = vadd.f32 0.0, %v409
  %v411 = vpop.f32.mrf.mxu0
  %v412 = vadd.f32 0.0, %v411
  %413 = vmatprep.mubr.f32.mxu0 0.0
  %414 = vmatmul.mubr.f32.gmra.mxu0 %v249
  %v415 = vpop.f32.mrf.mxu0
  %v416 = vadd.f32 0.0, %v415
  %v417 = vpop.f32.mrf.mxu0
  %v418 = vadd.f32 0.0, %v417
  %419 = vmatprep.mubr.f32.mxu0 0.0
  %420 = vmatmul.mubr.f32.gmra.mxu0 %v251
  %v421 = vpop.f32.mrf.mxu0
  %v422 = vadd.f32 0.0, %v421
  %v423 = vpop.f32.mrf.mxu0
  %v424 = vadd.f32 0.0, %v423
  %425 = vmatprep.mubr.f32.mxu0 0.0
  %426 = vmatmul.mubr.f32.gmra.mxu0 %v253
  %v427 = vpop.f32.mrf.mxu0
  %v428 = vadd.f32 0.0, %v427
  %v429 = vpop.f32.mrf.mxu0
  %v430 = vadd.f32 0.0, %v429
  %431 = vmatprep.mubr.f32.mxu0 0.0
  %432 = vmatmul.mubr.f32.gmra.mxu0 %v255
  %v433 = vpop.f32.mrf.mxu0
  %v434 = vadd.f32 0.0, %v433
  %v435 = vpop.f32.mrf.mxu0
  %v436 = vadd.f32 0.0, %v435
  %437 = vmatprep.mubr.f32.mxu0 0.0
  %438 = vmatmul.mubr.f32.gmra.mxu0 %v257
  %v439 = vpop.f32.mrf.mxu0
  %v440 = vadd.f32 0.0, %v439
  %v441 = vpop.f32.mrf.mxu0
  %v442 = vadd.f32 0.0, %v441
  %443 = vmatprep.mubr.f32.mxu0 0.0
  %444 = vmatmul.mubr.f32.gmra.mxu0 %v259
  %v445 = vpop.f32.mrf.mxu0
  %v446 = vadd.f32 0.0, %v445
  %v447 = vpop.f32.mrf.mxu0
  %v448 = vadd.f32 0.0, %v447
  %449 = vmatprep.mubr.f32.mxu0 0.0
  %450 = vmatmul.mubr.f32.gmra.mxu0 %v261
  %v451 = vpop.f32.mrf.mxu0
  %v452 = vadd.f32 0.0, %v451
  %v453 = vpop.f32.mrf.mxu0
  %v454 = vadd.f32 0.0, %v453
  %455 = vmatprep.mubr.f32.mxu0 0.0
  %456 = vmatmul.mubr.f32.gmra.mxu0 %v263
  %v457 = vpop.f32.mrf.mxu0
  %v458 = vadd.f32 0.0, %v457
  %v459 = vpop.f32.mrf.mxu0
  %v460 = vadd.f32 0.0, %v459
  %461 = vmatprep.mubr.f32.mxu0 0.0
  %462 = vmatmul.mubr.f32.gmra.mxu0 %v265
  %v463 = vpop.f32.mrf.mxu0
  %v464 = vadd.f32 0.0, %v463
  %v465 = vpop.f32.mrf.mxu0
  %v466 = vadd.f32 0.0, %v465
  %467 = vmatprep.mubr.f32.mxu0 0.0
  %468 = vmatmul.mubr.f32.gmra.mxu0 %v267
  %v469 = vpop.f32.mrf.mxu0
  %v470 = vadd.f32 0.0, %v469
  %v471 = vpop.f32.mrf.mxu0
  %v472 = vadd.f32 0.0, %v471
  %473 = vmatprep.mubr.f32.mxu0 0.0
  %474 = vmatmul.mubr.f32.gmra.mxu0 %v269
  %v475 = vpop.f32.mrf.mxu0
  %v476 = vadd.f32 0.0, %v475
  %v477 = vpop.f32.mrf.mxu0
  %v478 = vadd.f32 0.0, %v477
  %479 = vmatprep.mubr.f32.mxu0 0.0
  %480 = vmatmul.mubr.f32.gmra.mxu0 %v271
  %v481 = vpop.f32.mrf.mxu0
  %v482 = vadd.f32 0.0, %v481
  %v483 = vpop.f32.mrf.mxu0
  %v484 = vadd.f32 0.0, %v483
  %485 = vmatprep.mubr.f32.mxu0 0.0
  %486 = vmatmul.mubr.f32.gmra.mxu0 %v273
  %v487 = vpop.f32.mrf.mxu0
  %v488 = vadd.f32 0.0, %v487
  %v489 = vpop.f32.mrf.mxu0
  %v490 = vadd.f32 0.0, %v489
  %491 = vmatprep.mubr.f32.mxu0 0.0
  %492 = vmatmul.mubr.f32.gmra.mxu0 %v275
  %v493 = vpop.f32.mrf.mxu0
  %v494 = vadd.f32 0.0, %v493
  %v495 = vpop.f32.mrf.mxu0
  %v496 = vadd.f32 0.0, %v495
  %497 = vmatprep.mubr.f32.mxu0 0.0
  %498 = vmatmul.mubr.f32.gmra.mxu0 %v277
  %v499 = vpop.f32.mrf.mxu0
  %v500 = vadd.f32 0.0, %v499
  %v501 = vpop.f32.mrf.mxu0
  %v502 = vadd.f32 0.0, %v501
  %503 = vmatprep.mubr.f32.mxu0 0.0
  %504 = vmatmul.mubr.f32.gmra.mxu0 %v279
  %v505 = vpop.f32.mrf.mxu0
  %v506 = vadd.f32 0.0, %v505
  %v507 = vpop.f32.mrf.mxu0
  %v508 = vadd.f32 0.0, %v507
  %509 = vmatprep.mubr.f32.mxu0 0.0
  %510 = vmatmul.mubr.f32.gmra.mxu0 %v281
  %v511 = vpop.f32.mrf.mxu0
  %v512 = vadd.f32 0.0, %v511
  %v513 = vpop.f32.mrf.mxu0
  %v514 = vadd.f32 0.0, %v513
  %515 = vmatprep.mubr.f32.mxu0 0.0
  %516 = vmatmul.mubr.f32.gmra.mxu0 %v283
  %v517 = vpop.f32.mrf.mxu0
  %v518 = vadd.f32 0.0, %v517
  %v519 = vpop.f32.mrf.mxu0
  %v520 = vadd.f32 0.0, %v519
  %521 = vmatprep.mubr.f32.mxu0 0.0
  %522 = vmatmul.mubr.f32.gmra.mxu0 %v285
  %v523 = vpop.f32.mrf.mxu0
  %v524 = vadd.f32 0.0, %v523
  %v525 = vpop.f32.mrf.mxu0
  %v526 = vadd.f32 0.0, %v525
  %527 = vmatprep.mubr.f32.mxu0 0.0
  %528 = vmatmul.mubr.f32.gmra.mxu0 %v287
  %v529 = vpop.f32.mrf.mxu0
  %v530 = vadd.f32 0.0, %v529
  %v531 = vpop.f32.mrf.mxu0
  %v532 = vadd.f32 0.0, %v531
  %533 = vmatprep.mubr.f32.mxu0 0.0
  %534 = vmatmul.mubr.f32.gmra.mxu0 %v289
  %v535 = vpop.f32.mrf.mxu0
  %v536 = vadd.f32 0.0, %v535
  %v537 = vpop.f32.mrf.mxu0
  %v538 = vadd.f32 0.0, %v537
  %539 = vmatprep.mubr.f32.mxu0 0.0
  %540 = vmatmul.mubr.f32.gmra.mxu0 %v291
  %v541 = vpop.f32.mrf.mxu0
  %v542 = vadd.f32 0.0, %v541
  %v543 = vpop.f32.mrf.mxu0
  %v544 = vadd.f32 0.0, %v543
  %545 = vmatprep.mubr.f32.mxu0 0.0
  %546 = vmatmul.mubr.f32.gmra.mxu0 %v293
  %v547 = vpop.f32.mrf.mxu0
  %v548 = vadd.f32 0.0, %v547
  %v549 = vpop.f32.mrf.mxu0
  %v550 = vadd.f32 0.0, %v549
  %551 = vdwg.mxu0
  %v552 = vsel %vm230, %v53, 0
  %v554 = vsel %vm230, %v54, 0
  %v556 = vsel %vm230, %v55, 0
  %v558 = vsel %vm230, %v56, 0
  %v560 = vsel %vm230, %v57, 0
  %v562 = vsel %vm230, %v58, 0
  %v564 = vsel %vm230, %v59, 0
  %v566 = vsel %vm230, %v60, 0
  %v568 = vsel %vm230, %v61, 0
  %v570 = vsel %vm230, %v62, 0
  %v572 = vsel %vm230, %v63, 0
  %v574 = vsel %vm230, %v64, 0
  %v576 = vsel %vm230, %v65, 0
  %v578 = vsel %vm230, %v66, 0
  %v580 = vsel %vm230, %v67, 0
  %v582 = vsel %vm230, %v68, 0
  %v584 = vsel %vm230, %v69, 0
  %v586 = vsel %vm230, %v70, 0
  %v588 = vsel %vm230, %v71, 0
  %v590 = vsel %vm230, %v72, 0
  %v592 = vsel %vm230, %v73, 0
  %v594 = vsel %vm230, %v74, 0
  %v596 = vsel %vm230, %v75, 0
  %v598 = vsel %vm230, %v76, 0
  %v600 = vsel %vm230, %v77, 0
  %v602 = vsel %vm230, %v78, 0
  %v604 = vsel %vm230, %v79, 0
  %v606 = vsel %vm230, %v80, 0
  %v608 = vsel %vm230, %v81, 0
  %v610 = vsel %vm230, %v82, 0
  %v612 = vsel %vm230, %v83, 0
  %v614 = vsel %vm230, %v84, 0
  %616 = vmatprep.subr.mxu0 0.0
  %617 = vmatpush1.msra.mxu0 0.0
  %618 = vmatprep.subr.mxu0 0.0
  %619 = vmatpush1.msra.mxu0 0.0
  %620 = vmatprep.subr.mxu0 0.0
  %621 = vmatpush1.msra.mxu0 0.0
  %622 = vmatprep.subr.mxu0 0.0
  %623 = vmatpush1.msra.mxu0 0.0
  %624 = vmatprep.subr.mxu0 %v108
  %625 = vmatpush1.msra.mxu0 %v107
  %626 = vmatprep.subr.mxu0 %v106
  %627 = vmatpush1.msra.mxu0 %v105
  %628 = vmatprep.subr.mxu0 %v104
  %629 = vmatpush1.msra.mxu0 %v103
  %630 = vmatprep.subr.mxu0 %v102
  %631 = vmatpush1.msra.mxu0 %v101
  %632 = vmatprep.subr.mxu0 %v100
  %633 = vmatpush1.msra.mxu0 %v99
  %634 = vmatprep.subr.mxu0 %v98
  %635 = vmatpush1.msra.mxu0 %v97
  %636 = vmatprep.subr.mxu0 %v96
  %637 = vmatpush1.msra.mxu0 %v95
  %638 = vmatprep.subr.mxu0 %v94
  %639 = vmatpush1.msra.mxu0 %v93
  %640 = vmatprep.subr.mxu0 %v92
  %641 = vmatpush1.msra.mxu0 %v91
  %642 = vmatprep.subr.mxu0 %v90
  %643 = vmatpush1.msra.mxu0 %v89
  %644 = vmatprep.subr.mxu0 %v88
  %645 = vmatpush1.msra.mxu0 %v87
  %646 = vmatprep.subr.mxu0 %v86
  %647 = vmatpush1.msra.mxu0 %v85
  %648 = vmatprep.subr.mxu0 0.0
  %649 = vmatpush2.msra.mxu0 0.0
  %650 = vmatprep.subr.mxu0 0.0
  %651 = vmatpush2.msra.mxu0 0.0
  %652 = vmatprep.subr.mxu0 0.0
  %653 = vmatpush2.msra.mxu0 0.0
  %654 = vmatprep.subr.mxu0 0.0
  %655 = vmatpush2.msra.mxu0 0.0
  %656 = vmatprep.subr.mxu0 0.0
  %657 = vmatpush2.msra.mxu0 0.0
  %658 = vmatprep.subr.mxu0 0.0
  %659 = vmatpush2.msra.mxu0 0.0
  %660 = vmatprep.subr.mxu0 0.0
  %661 = vmatpush2.msra.mxu0 0.0
  %662 = vmatprep.subr.mxu0 0.0
  %663 = vmatpush2.msra.mxu0 0.0
  %664 = vmatprep.subr.mxu0 0.0
  %665 = vmatpush2.msra.mxu0 0.0
  %666 = vmatprep.subr.mxu0 0.0
  %667 = vmatpush2.msra.mxu0 0.0
  %668 = vmatprep.subr.mxu0 0.0
  %669 = vmatpush2.msra.mxu0 0.0
  %670 = vmatprep.subr.mxu0 0.0
  %671 = vmatpush2.msra.mxu0 0.0
  %672 = vmatprep.subr.mxu0 0.0
  %673 = vmatpush2.msra.mxu0 0.0
  %674 = vmatprep.subr.mxu0 0.0
  %675 = vmatpush2.msra.mxu0 0.0
  %676 = vmatprep.subr.mxu0 0.0
  %677 = vmatpush2.msra.mxu0 0.0
  %678 = vmatprep.subr.mxu0 0.0
  %679 = vmatpush2.msra.mxu0 0.0
  %680 = vmatprep.mubr.f32.mxu0 0.0
  %681 = vmatmul.mubr.f32.gmra.mxu0 %v552
  %v682 = vpop.f32.mrf.mxu0
  %v683 = vadd.f32 %v362, %v682
  %v684 = vpop.f32.mrf.mxu0
  %v685 = vadd.f32 %v364, %v684
  %686 = vmatprep.mubr.f32.mxu0 0.0
  %687 = vmatmul.mubr.f32.gmra.mxu0 %v554
  %v688 = vpop.f32.mrf.mxu0
  %v689 = vadd.f32 %v368, %v688
  %v690 = vpop.f32.mrf.mxu0
  %v691 = vadd.f32 %v370, %v690
  %692 = vmatprep.mubr.f32.mxu0 0.0
  %693 = vmatmul.mubr.f32.gmra.mxu0 %v556
  %v694 = vpop.f32.mrf.mxu0
  %v695 = vadd.f32 %v374, %v694
  %v696 = vpop.f32.mrf.mxu0
  %v697 = vadd.f32 %v376, %v696
  %698 = vmatprep.mubr.f32.mxu0 0.0
  %699 = vmatmul.mubr.f32.gmra.mxu0 %v558
  %v700 = vpop.f32.mrf.mxu0
  %v701 = vadd.f32 %v380, %v700
  %v702 = vpop.f32.mrf.mxu0
  %v703 = vadd.f32 %v382, %v702
  %704 = vmatprep.mubr.f32.mxu0 0.0
  %705 = vmatmul.mubr.f32.gmra.mxu0 %v560
  %v706 = vpop.f32.mrf.mxu0
  %v707 = vadd.f32 %v386, %v706
  %v708 = vpop.f32.mrf.mxu0
  %v709 = vadd.f32 %v388, %v708
  %710 = vmatprep.mubr.f32.mxu0 0.0
  %711 = vmatmul.mubr.f32.gmra.mxu0 %v562
  %v712 = vpop.f32.mrf.mxu0
  %v713 = vadd.f32 %v392, %v712
  %v714 = vpop.f32.mrf.mxu0
  %v715 = vadd.f32 %v394, %v714
  %716 = vmatprep.mubr.f32.mxu0 0.0
  %717 = vmatmul.mubr.f32.gmra.mxu0 %v564
  %v718 = vpop.f32.mrf.mxu0
  %v719 = vadd.f32 %v398, %v718
  %v720 = vpop.f32.mrf.mxu0
  %v721 = vadd.f32 %v400, %v720
  %722 = vmatprep.mubr.f32.mxu0 0.0
  %723 = vmatmul.mubr.f32.gmra.mxu0 %v566
  %v724 = vpop.f32.mrf.mxu0
  %v725 = vadd.f32 %v404, %v724
  %v726 = vpop.f32.mrf.mxu0
  %v727 = vadd.f32 %v406, %v726
  %728 = vmatprep.mubr.f32.mxu0 0.0
  %729 = vmatmul.mubr.f32.gmra.mxu0 %v568
  %v730 = vpop.f32.mrf.mxu0
  %v731 = vadd.f32 %v410, %v730
  %v732 = vpop.f32.mrf.mxu0
  %v733 = vadd.f32 %v412, %v732
  %734 = vmatprep.mubr.f32.mxu0 0.0
  %735 = vmatmul.mubr.f32.gmra.mxu0 %v570
  %v736 = vpop.f32.mrf.mxu0
  %v737 = vadd.f32 %v416, %v736
  %v738 = vpop.f32.mrf.mxu0
  %v739 = vadd.f32 %v418, %v738
  %740 = vmatprep.mubr.f32.mxu0 0.0
  %741 = vmatmul.mubr.f32.gmra.mxu0 %v572
  %v742 = vpop.f32.mrf.mxu0
  %v743 = vadd.f32 %v422, %v742
  %v744 = vpop.f32.mrf.mxu0
  %v745 = vadd.f32 %v424, %v744
  %746 = vmatprep.mubr.f32.mxu0 0.0
  %747 = vmatmul.mubr.f32.gmra.mxu0 %v574
  %v748 = vpop.f32.mrf.mxu0
  %v749 = vadd.f32 %v428, %v748
  %v750 = vpop.f32.mrf.mxu0
  %v751 = vadd.f32 %v430, %v750
  %752 = vmatprep.mubr.f32.mxu0 0.0
  %753 = vmatmul.mubr.f32.gmra.mxu0 %v576
  %v754 = vpop.f32.mrf.mxu0
  %v755 = vadd.f32 %v434, %v754
  %v756 = vpop.f32.mrf.mxu0
  %v757 = vadd.f32 %v436, %v756
  %758 = vmatprep.mubr.f32.mxu0 0.0
  %759 = vmatmul.mubr.f32.gmra.mxu0 %v578
  %v760 = vpop.f32.mrf.mxu0
  %v761 = vadd.f32 %v440, %v760
  %v762 = vpop.f32.mrf.mxu0
  %v763 = vadd.f32 %v442, %v762
  %764 = vmatprep.mubr.f32.mxu0 0.0
  %765 = vmatmul.mubr.f32.gmra.mxu0 %v580
  %v766 = vpop.f32.mrf.mxu0
  %v767 = vadd.f32 %v446, %v766
  %v768 = vpop.f32.mrf.mxu0
  %v769 = vadd.f32 %v448, %v768
  %770 = vmatprep.mubr.f32.mxu0 0.0
  %771 = vmatmul.mubr.f32.gmra.mxu0 %v582
  %v772 = vpop.f32.mrf.mxu0
  %v773 = vadd.f32 %v452, %v772
  %v774 = vpop.f32.mrf.mxu0
  %v775 = vadd.f32 %v454, %v774
  %776 = vmatprep.mubr.f32.mxu0 0.0
  %777 = vmatmul.mubr.f32.gmra.mxu0 %v584
  %v778 = vpop.f32.mrf.mxu0
  %v779 = vadd.f32 %v458, %v778
  %v780 = vpop.f32.mrf.mxu0
  %v781 = vadd.f32 %v460, %v780
  %782 = vmatprep.mubr.f32.mxu0 0.0
  %783 = vmatmul.mubr.f32.gmra.mxu0 %v586
  %v784 = vpop.f32.mrf.mxu0
  %v785 = vadd.f32 %v464, %v784
  %v786 = vpop.f32.mrf.mxu0
  %v787 = vadd.f32 %v466, %v786
  %788 = vmatprep.mubr.f32.mxu0 0.0
  %789 = vmatmul.mubr.f32.gmra.mxu0 %v588
  %v790 = vpop.f32.mrf.mxu0
  %v791 = vadd.f32 %v470, %v790
  %v792 = vpop.f32.mrf.mxu0
  %v793 = vadd.f32 %v472, %v792
  %794 = vmatprep.mubr.f32.mxu0 0.0
  %795 = vmatmul.mubr.f32.gmra.mxu0 %v590
  %v796 = vpop.f32.mrf.mxu0
  %v797 = vadd.f32 %v476, %v796
  %v798 = vpop.f32.mrf.mxu0
  %v799 = vadd.f32 %v478, %v798
  %800 = vmatprep.mubr.f32.mxu0 0.0
  %801 = vmatmul.mubr.f32.gmra.mxu0 %v592
  %v802 = vpop.f32.mrf.mxu0
  %v803 = vadd.f32 %v482, %v802
  %v804 = vpop.f32.mrf.mxu0
  %v805 = vadd.f32 %v484, %v804
  %806 = vmatprep.mubr.f32.mxu0 0.0
  %807 = vmatmul.mubr.f32.gmra.mxu0 %v594
  %v808 = vpop.f32.mrf.mxu0
  %v809 = vadd.f32 %v488, %v808
  %v810 = vpop.f32.mrf.mxu0
  %v811 = vadd.f32 %v490, %v810
  %812 = vmatprep.mubr.f32.mxu0 0.0
  %813 = vmatmul.mubr.f32.gmra.mxu0 %v596
  %v814 = vpop.f32.mrf.mxu0
  %v815 = vadd.f32 %v494, %v814
  %v816 = vpop.f32.mrf.mxu0
  %v817 = vadd.f32 %v496, %v816
  %818 = vmatprep.mubr.f32.mxu0 0.0
  %819 = vmatmul.mubr.f32.gmra.mxu0 %v598
  %v820 = vpop.f32.mrf.mxu0
  %v821 = vadd.f32 %v500, %v820
  %v822 = vpop.f32.mrf.mxu0
  %v823 = vadd.f32 %v502, %v822
  %824 = vmatprep.mubr.f32.mxu0 0.0
  %825 = vmatmul.mubr.f32.gmra.mxu0 %v600
  %v826 = vpop.f32.mrf.mxu0
  %v827 = vadd.f32 %v506, %v826
  %v828 = vpop.f32.mrf.mxu0
  %v829 = vadd.f32 %v508, %v828
  %830 = vmatprep.mubr.f32.mxu0 0.0
  %831 = vmatmul.mubr.f32.gmra.mxu0 %v602
  %v832 = vpop.f32.mrf.mxu0
  %v833 = vadd.f32 %v512, %v832
  %v834 = vpop.f32.mrf.mxu0
  %v835 = vadd.f32 %v514, %v834
  %836 = vmatprep.mubr.f32.mxu0 0.0
  %837 = vmatmul.mubr.f32.gmra.mxu0 %v604
  %v838 = vpop.f32.mrf.mxu0
  %v839 = vadd.f32 %v518, %v838
  %v840 = vpop.f32.mrf.mxu0
  %v841 = vadd.f32 %v520, %v840
  %842 = vmatprep.mubr.f32.mxu0 0.0
  %843 = vmatmul.mubr.f32.gmra.mxu0 %v606
  %v844 = vpop.f32.mrf.mxu0
  %v845 = vadd.f32 %v524, %v844
  %v846 = vpop.f32.mrf.mxu0
  %v847 = vadd.f32 %v526, %v846
  %848 = vmatprep.mubr.f32.mxu0 0.0
  %849 = vmatmul.mubr.f32.gmra.mxu0 %v608
  %v850 = vpop.f32.mrf.mxu0
  %v851 = vadd.f32 %v530, %v850
  %v852 = vpop.f32.mrf.mxu0
  %v853 = vadd.f32 %v532, %v852
  %854 = vmatprep.mubr.f32.mxu0 0.0
  %855 = vmatmul.mubr.f32.gmra.mxu0 %v610
  %v856 = vpop.f32.mrf.mxu0
  %v857 = vadd.f32 %v536, %v856
  %v858 = vpop.f32.mrf.mxu0
  %v859 = vadd.f32 %v538, %v858
  %860 = vmatprep.mubr.f32.mxu0 0.0
  %861 = vmatmul.mubr.f32.gmra.mxu0 %v612
  %v862 = vpop.f32.mrf.mxu0
  %v863 = vadd.f32 %v542, %v862
  %v864 = vpop.f32.mrf.mxu0
  %v865 = vadd.f32 %v544, %v864
  %866 = vmatprep.mubr.f32.mxu0 0.0
  %867 = vmatmul.mubr.f32.gmra.mxu0 %v614
  %v868 = vpop.f32.mrf.mxu0
  %v869 = vadd.f32 %v548, %v868
  %v870 = vpop.f32.mrf.mxu0
  %v871 = vadd.f32 %v550, %v870
  %872 = vdwg.mxu0
  %s873 = scalar_lea.vmem %s1, 384
  %v874 = vld [vmem:[%s873] sm:$0xff]
  %v875 = vld [vmem:[%s873 + $0x8] sm:$0xff]
  %v876 = vld [vmem:[%s873 + $0x10] sm:$0xff]
  %v877 = vld [vmem:[%s873 + $0x18] sm:$0xff]
  %v878 = vld [vmem:[%s873 + $0x20] sm:$0xff]
  %v879 = vld [vmem:[%s873 + $0x28] sm:$0xff]
  %v880 = vld [vmem:[%s873 + $0x30] sm:$0xff]
  %v881 = vld [vmem:[%s873 + $0x38] sm:$0xff]
  %v882 = vld [vmem:[%s873 + $0x40] sm:$0xff]
  %v883 = vld [vmem:[%s873 + $0x48] sm:$0xff]
  %v884 = vld [vmem:[%s873 + $0x50] sm:$0xff]
  %v885 = vld [vmem:[%s873 + $0x58] sm:$0xff]
  %v886 = vld [vmem:[%s873 + $0x60] sm:$0xff]
  %v887 = vld [vmem:[%s873 + $0x68] sm:$0xff]
  %v888 = vld [vmem:[%s873 + $0x70] sm:$0xff]
  %v889 = vld [vmem:[%s873 + $0x78] sm:$0xff]
  %v890 = vld [vmem:[%s873 + $0x80] sm:$0xff]
  %v891 = vld [vmem:[%s873 + $0x88] sm:$0xff]
  %v892 = vld [vmem:[%s873 + $0x90] sm:$0xff]
  %v893 = vld [vmem:[%s873 + $0x98] sm:$0xff]
  %v894 = vld [vmem:[%s873 + $0xa0] sm:$0xff]
  %v895 = vld [vmem:[%s873 + $0xa8] sm:$0xff]
  %v896 = vld [vmem:[%s873 + $0xb0] sm:$0xff]
  %v897 = vld [vmem:[%s873 + $0xb8] sm:$0xff]
  %vm898 = vcmask 1045504
  %v899 = vrot.slane %v53, 2
  %v900 = vrot.slane %v54, 2
  %v901 = vsel %vm898, %v899, %v900
  %v902 = vrot.slane %v55, 2
  %v903 = vsel %vm898, %v900, %v902
  %v904 = vrot.slane %v56, 2
  %v905 = vsel %vm898, %v902, %v904
  %v906 = vrot.slane %v57, 2
  %v907 = vsel %vm898, %v904, %v906
  %v908 = vrot.slane %v58, 2
  %v909 = vsel %vm898, %v906, %v908
  %v910 = vrot.slane %v59, 2
  %v911 = vsel %vm898, %v908, %v910
  %v912 = vrot.slane %v60, 2
  %v913 = vsel %vm898, %v910, %v912
  %v914 = vrot.slane %v61, 2
  %v915 = vsel %vm898, %v912, %v914
  %v916 = vrot.slane %v62, 2
  %v917 = vsel %vm898, %v914, %v916
  %v918 = vrot.slane %v63, 2
  %v919 = vsel %vm898, %v916, %v918
  %v920 = vrot.slane %v64, 2
  %v921 = vsel %vm898, %v918, %v920
  %v922 = vrot.slane %v65, 2
  %v923 = vsel %vm898, %v920, %v922
  %v924 = vrot.slane %v66, 2
  %v925 = vsel %vm898, %v922, %v924
  %v926 = vrot.slane %v67, 2
  %v927 = vsel %vm898, %v924, %v926
  %v928 = vrot.slane %v68, 2
  %v929 = vsel %vm898, %v926, %v928
  %v930 = vrot.slane %v69, 2
  %v931 = vsel %vm898, %v928, %v930
  %v932 = vrot.slane %v70, 2
  %v933 = vsel %vm898, %v930, %v932
  %v934 = vrot.slane %v71, 2
  %v935 = vsel %vm898, %v932, %v934
  %v936 = vrot.slane %v72, 2
  %v937 = vsel %vm898, %v934, %v936
  %v938 = vrot.slane %v73, 2
  %v939 = vsel %vm898, %v936, %v938
  %v940 = vrot.slane %v74, 2
  %v941 = vsel %vm898, %v938, %v940
  %v942 = vrot.slane %v75, 2
  %v943 = vsel %vm898, %v940, %v942
  %v944 = vrot.slane %v76, 2
  %v945 = vsel %vm898, %v942, %v944
  %v946 = vrot.slane %v77, 2
  %v947 = vsel %vm898, %v944, %v946
  %v948 = vrot.slane %v78, 2
  %v949 = vsel %vm898, %v946, %v948
  %v950 = vrot.slane %v79, 2
  %v951 = vsel %vm898, %v948, %v950
  %v952 = vrot.slane %v80, 2
  %v953 = vsel %vm898, %v950, %v952
  %v954 = vrot.slane %v81, 2
  %v955 = vsel %vm898, %v952, %v954
  %v956 = vrot.slane %v82, 2
  %v957 = vsel %vm898, %v954, %v956
  %v958 = vrot.slane %v83, 2
  %v959 = vsel %vm898, %v956, %v958
  %v960 = vrot.slane %v84, 2
  %v961 = vsel %vm898, %v958, %v960
  %v962 = vsel %vm230, %v901, 0
  %v964 = vsel %vm230, %v903, 0
  %v966 = vsel %vm230, %v905, 0
  %v968 = vsel %vm230, %v907, 0
  %v970 = vsel %vm230, %v909, 0
  %v972 = vsel %vm230, %v911, 0
  %v974 = vsel %vm230, %v913, 0
  %v976 = vsel %vm230, %v915, 0
  %v978 = vsel %vm230, %v917, 0
  %v980 = vsel %vm230, %v919, 0
  %v982 = vsel %vm230, %v921, 0
  %v984 = vsel %vm230, %v923, 0
  %v986 = vsel %vm230, %v925, 0
  %v988 = vsel %vm230, %v927, 0
  %v990 = vsel %vm230, %v929, 0
  %v992 = vsel %vm230, %v931, 0
  %v994 = vsel %vm230, %v933, 0
  %v996 = vsel %vm230, %v935, 0
  %v998 = vsel %vm230, %v937, 0
  %v1000 = vsel %vm230, %v939, 0
  %v1002 = vsel %vm230, %v941, 0
  %v1004 = vsel %vm230, %v943, 0
  %v1006 = vsel %vm230, %v945, 0
  %v1008 = vsel %vm230, %v947, 0
  %v1010 = vsel %vm230, %v949, 0
  %v1012 = vsel %vm230, %v951, 0
  %v1014 = vsel %vm230, %v953, 0
  %v1016 = vsel %vm230, %v955, 0
  %v1018 = vsel %vm230, %v957, 0
  %v1020 = vsel %vm230, %v959, 0
  %v1022 = vsel %vm230, %v961, 0
  %v1024 = vsel %vm230, %v960, 0
  %1026 = vmatprep.subr.mxu0 0.0
  %1027 = vmatpush1.msra.mxu0 0.0
  %1028 = vmatprep.subr.mxu0 0.0
  %1029 = vmatpush1.msra.mxu0 0.0
  %1030 = vmatprep.subr.mxu0 0.0
  %1031 = vmatpush1.msra.mxu0 0.0
  %1032 = vmatprep.subr.mxu0 0.0
  %1033 = vmatpush1.msra.mxu0 0.0
  %1034 = vmatprep.subr.mxu0 %v897
  %1035 = vmatpush1.msra.mxu0 %v896
  %1036 = vmatprep.subr.mxu0 %v895
  %1037 = vmatpush1.msra.mxu0 %v894
  %1038 = vmatprep.subr.mxu0 %v893
  %1039 = vmatpush1.msra.mxu0 %v892
  %1040 = vmatprep.subr.mxu0 %v891
  %1041 = vmatpush1.msra.mxu0 %v890
  %1042 = vmatprep.subr.mxu0 %v889
  %1043 = vmatpush1.msra.mxu0 %v888
  %1044 = vmatprep.subr.mxu0 %v887
  %1045 = vmatpush1.msra.mxu0 %v886
  %1046 = vmatprep.subr.mxu0 %v885
  %1047 = vmatpush1.msra.mxu0 %v884
  %1048 = vmatprep.subr.mxu0 %v883
  %1049 = vmatpush1.msra.mxu0 %v882
  %1050 = vmatprep.subr.mxu0 %v881
  %1051 = vmatpush1.msra.mxu0 %v880
  %1052 = vmatprep.subr.mxu0 %v879
  %1053 = vmatpush1.msra.mxu0 %v878
  %1054 = vmatprep.subr.mxu0 %v877
  %1055 = vmatpush1.msra.mxu0 %v876
  %1056 = vmatprep.subr.mxu0 %v875
  %1057 = vmatpush1.msra.mxu0 %v874
  %1058 = vmatprep.subr.mxu0 0.0
  %1059 = vmatpush2.msra.mxu0 0.0
  %1060 = vmatprep.subr.mxu0 0.0
  %1061 = vmatpush2.msra.mxu0 0.0
  %1062 = vmatprep.subr.mxu0 0.0
  %1063 = vmatpush2.msra.mxu0 0.0
  %1064 = vmatprep.subr.mxu0 0.0
  %1065 = vmatpush2.msra.mxu0 0.0
  %1066 = vmatprep.subr.mxu0 0.0
  %1067 = vmatpush2.msra.mxu0 0.0
  %1068 = vmatprep.subr.mxu0 0.0
  %1069 = vmatpush2.msra.mxu0 0.0
  %1070 = vmatprep.subr.mxu0 0.0
  %1071 = vmatpush2.msra.mxu0 0.0
  %1072 = vmatprep.subr.mxu0 0.0
  %1073 = vmatpush2.msra.mxu0 0.0
  %1074 = vmatprep.subr.mxu0 0.0
  %1075 = vmatpush2.msra.mxu0 0.0
  %1076 = vmatprep.subr.mxu0 0.0
  %1077 = vmatpush2.msra.mxu0 0.0
  %1078 = vmatprep.subr.mxu0 0.0
  %1079 = vmatpush2.msra.mxu0 0.0
  %1080 = vmatprep.subr.mxu0 0.0
  %1081 = vmatpush2.msra.mxu0 0.0
  %1082 = vmatprep.subr.mxu0 0.0
  %1083 = vmatpush2.msra.mxu0 0.0
  %1084 = vmatprep.subr.mxu0 0.0
  %1085 = vmatpush2.msra.mxu0 0.0
  %1086 = vmatprep.subr.mxu0 0.0
  %1087 = vmatpush2.msra.mxu0 0.0
  %1088 = vmatprep.subr.mxu0 0.0
  %1089 = vmatpush2.msra.mxu0 0.0
  %1090 = vmatprep.mubr.f32.mxu0 0.0
  %1091 = vmatmul.mubr.f32.gmra.mxu0 %v962
  %v1092 = vpop.f32.mrf.mxu0
  %v1093 = vadd.f32 0.0, %v1092
  %v1094 = vpop.f32.mrf.mxu0
  %v1095 = vadd.f32 0.0, %v1094
  %1096 = vmatprep.mubr.f32.mxu0 0.0
  %1097 = vmatmul.mubr.f32.gmra.mxu0 %v964
  %v1098 = vpop.f32.mrf.mxu0
  %v1099 = vadd.f32 0.0, %v1098
  %v1100 = vpop.f32.mrf.mxu0
  %v1101 = vadd.f32 0.0, %v1100
  %1102 = vmatprep.mubr.f32.mxu0 0.0
  %1103 = vmatmul.mubr.f32.gmra.mxu0 %v966
  %v1104 = vpop.f32.mrf.mxu0
  %v1105 = vadd.f32 0.0, %v1104
  %v1106 = vpop.f32.mrf.mxu0
  %v1107 = vadd.f32 0.0, %v1106
  %1108 = vmatprep.mubr.f32.mxu0 0.0
  %1109 = vmatmul.mubr.f32.gmra.mxu0 %v968
  %v1110 = vpop.f32.mrf.mxu0
  %v1111 = vadd.f32 0.0, %v1110
  %v1112 = vpop.f32.mrf.mxu0
  %v1113 = vadd.f32 0.0, %v1112
  %1114 = vmatprep.mubr.f32.mxu0 0.0
  %1115 = vmatmul.mubr.f32.gmra.mxu0 %v970
  %v1116 = vpop.f32.mrf.mxu0
  %v1117 = vadd.f32 0.0, %v1116
  %v1118 = vpop.f32.mrf.mxu0
  %v1119 = vadd.f32 0.0, %v1118
  %1120 = vmatprep.mubr.f32.mxu0 0.0
  %1121 = vmatmul.mubr.f32.gmra.mxu0 %v972
  %v1122 = vpop.f32.mrf.mxu0
  %v1123 = vadd.f32 0.0, %v1122
  %v1124 = vpop.f32.mrf.mxu0
  %v1125 = vadd.f32 0.0, %v1124
  %1126 = vmatprep.mubr.f32.mxu0 0.0
  %1127 = vmatmul.mubr.f32.gmra.mxu0 %v974
  %v1128 = vpop.f32.mrf.mxu0
  %v1129 = vadd.f32 0.0, %v1128
  %v1130 = vpop.f32.mrf.mxu0
  %v1131 = vadd.f32 0.0, %v1130
  %1132 = vmatprep.mubr.f32.mxu0 0.0
  %1133 = vmatmul.mubr.f32.gmra.mxu0 %v976
  %v1134 = vpop.f32.mrf.mxu0
  %v1135 = vadd.f32 0.0, %v1134
  %v1136 = vpop.f32.mrf.mxu0
  %v1137 = vadd.f32 0.0, %v1136
  %1138 = vmatprep.mubr.f32.mxu0 0.0
  %1139 = vmatmul.mubr.f32.gmra.mxu0 %v978
  %v1140 = vpop.f32.mrf.mxu0
  %v1141 = vadd.f32 0.0, %v1140
  %v1142 = vpop.f32.mrf.mxu0
  %v1143 = vadd.f32 0.0, %v1142
  %1144 = vmatprep.mubr.f32.mxu0 0.0
  %1145 = vmatmul.mubr.f32.gmra.mxu0 %v980
  %v1146 = vpop.f32.mrf.mxu0
  %v1147 = vadd.f32 0.0, %v1146
  %v1148 = vpop.f32.mrf.mxu0
  %v1149 = vadd.f32 0.0, %v1148
  %1150 = vmatprep.mubr.f32.mxu0 0.0
  %1151 = vmatmul.mubr.f32.gmra.mxu0 %v982
  %v1152 = vpop.f32.mrf.mxu0
  %v1153 = vadd.f32 0.0, %v1152
  %v1154 = vpop.f32.mrf.mxu0
  %v1155 = vadd.f32 0.0, %v1154
  %1156 = vmatprep.mubr.f32.mxu0 0.0
  %1157 = vmatmul.mubr.f32.gmra.mxu0 %v984
  %v1158 = vpop.f32.mrf.mxu0
  %v1159 = vadd.f32 0.0, %v1158
  %v1160 = vpop.f32.mrf.mxu0
  %v1161 = vadd.f32 0.0, %v1160
  %1162 = vmatprep.mubr.f32.mxu0 0.0
  %1163 = vmatmul.mubr.f32.gmra.mxu0 %v986
  %v1164 = vpop.f32.mrf.mxu0
  %v1165 = vadd.f32 0.0, %v1164
  %v1166 = vpop.f32.mrf.mxu0
  %v1167 = vadd.f32 0.0, %v1166
  %1168 = vmatprep.mubr.f32.mxu0 0.0
  %1169 = vmatmul.mubr.f32.gmra.mxu0 %v988
  %v1170 = vpop.f32.mrf.mxu0
  %v1171 = vadd.f32 0.0, %v1170
  %v1172 = vpop.f32.mrf.mxu0
  %v1173 = vadd.f32 0.0, %v1172
  %1174 = vmatprep.mubr.f32.mxu0 0.0
  %1175 = vmatmul.mubr.f32.gmra.mxu0 %v990
  %v1176 = vpop.f32.mrf.mxu0
  %v1177 = vadd.f32 0.0, %v1176
  %v1178 = vpop.f32.mrf.mxu0
  %v1179 = vadd.f32 0.0, %v1178
  %1180 = vmatprep.mubr.f32.mxu0 0.0
  %1181 = vmatmul.mubr.f32.gmra.mxu0 %v992
  %v1182 = vpop.f32.mrf.mxu0
  %v1183 = vadd.f32 0.0, %v1182
  %v1184 = vpop.f32.mrf.mxu0
  %v1185 = vadd.f32 0.0, %v1184
  %1186 = vmatprep.mubr.f32.mxu0 0.0
  %1187 = vmatmul.mubr.f32.gmra.mxu0 %v994
  %v1188 = vpop.f32.mrf.mxu0
  %v1189 = vadd.f32 0.0, %v1188
  %v1190 = vpop.f32.mrf.mxu0
  %v1191 = vadd.f32 0.0, %v1190
  %1192 = vmatprep.mubr.f32.mxu0 0.0
  %1193 = vmatmul.mubr.f32.gmra.mxu0 %v996
  %v1194 = vpop.f32.mrf.mxu0
  %v1195 = vadd.f32 0.0, %v1194
  %v1196 = vpop.f32.mrf.mxu0
  %v1197 = vadd.f32 0.0, %v1196
  %1198 = vmatprep.mubr.f32.mxu0 0.0
  %1199 = vmatmul.mubr.f32.gmra.mxu0 %v998
  %v1200 = vpop.f32.mrf.mxu0
  %v1201 = vadd.f32 0.0, %v1200
  %v1202 = vpop.f32.mrf.mxu0
  %v1203 = vadd.f32 0.0, %v1202
  %1204 = vmatprep.mubr.f32.mxu0 0.0
  %1205 = vmatmul.mubr.f32.gmra.mxu0 %v1000
  %v1206 = vpop.f32.mrf.mxu0
  %v1207 = vadd.f32 0.0, %v1206
  %v1208 = vpop.f32.mrf.mxu0
  %v1209 = vadd.f32 0.0, %v1208
  %1210 = vmatprep.mubr.f32.mxu0 0.0
  %1211 = vmatmul.mubr.f32.gmra.mxu0 %v1002
  %v1212 = vpop.f32.mrf.mxu0
  %v1213 = vadd.f32 0.0, %v1212
  %v1214 = vpop.f32.mrf.mxu0
  %v1215 = vadd.f32 0.0, %v1214
  %1216 = vmatprep.mubr.f32.mxu0 0.0
  %1217 = vmatmul.mubr.f32.gmra.mxu0 %v1004
  %v1218 = vpop.f32.mrf.mxu0
  %v1219 = vadd.f32 0.0, %v1218
  %v1220 = vpop.f32.mrf.mxu0
  %v1221 = vadd.f32 0.0, %v1220
  %1222 = vmatprep.mubr.f32.mxu0 0.0
  %1223 = vmatmul.mubr.f32.gmra.mxu0 %v1006
  %v1224 = vpop.f32.mrf.mxu0
  %v1225 = vadd.f32 0.0, %v1224
  %v1226 = vpop.f32.mrf.mxu0
  %v1227 = vadd.f32 0.0, %v1226
  %1228 = vmatprep.mubr.f32.mxu0 0.0
  %1229 = vmatmul.mubr.f32.gmra.mxu0 %v1008
  %v1230 = vpop.f32.mrf.mxu0
  %v1231 = vadd.f32 0.0, %v1230
  %v1232 = vpop.f32.mrf.mxu0
  %v1233 = vadd.f32 0.0, %v1232
  %1234 = vmatprep.mubr.f32.mxu0 0.0
  %1235 = vmatmul.mubr.f32.gmra.mxu0 %v1010
  %v1236 = vpop.f32.mrf.mxu0
  %v1237 = vadd.f32 0.0, %v1236
  %v1238 = vpop.f32.mrf.mxu0
  %v1239 = vadd.f32 0.0, %v1238
  %1240 = vmatprep.mubr.f32.mxu0 0.0
  %1241 = vmatmul.mubr.f32.gmra.mxu0 %v1012
  %v1242 = vpop.f32.mrf.mxu0
  %v1243 = vadd.f32 0.0, %v1242
  %v1244 = vpop.f32.mrf.mxu0
  %v1245 = vadd.f32 0.0, %v1244
  %1246 = vmatprep.mubr.f32.mxu0 0.0
  %1247 = vmatmul.mubr.f32.gmra.mxu0 %v1014
  %v1248 = vpop.f32.mrf.mxu0
  %v1249 = vadd.f32 0.0, %v1248
  %v1250 = vpop.f32.mrf.mxu0
  %v1251 = vadd.f32 0.0, %v1250
  %1252 = vmatprep.mubr.f32.mxu0 0.0
  %1253 = vmatmul.mubr.f32.gmra.mxu0 %v1016
  %v1254 = vpop.f32.mrf.mxu0
  %v1255 = vadd.f32 0.0, %v1254
  %v1256 = vpop.f32.mrf.mxu0
  %v1257 = vadd.f32 0.0, %v1256
  %1258 = vmatprep.mubr.f32.mxu0 0.0
  %1259 = vmatmul.mubr.f32.gmra.mxu0 %v1018
  %v1260 = vpop.f32.mrf.mxu0
  %v1261 = vadd.f32 0.0, %v1260
  %v1262 = vpop.f32.mrf.mxu0
  %v1263 = vadd.f32 0.0, %v1262
  %1264 = vmatprep.mubr.f32.mxu0 0.0
  %1265 = vmatmul.mubr.f32.gmra.mxu0 %v1020
  %v1266 = vpop.f32.mrf.mxu0
  %v1267 = vadd.f32 0.0, %v1266
  %v1268 = vpop.f32.mrf.mxu0
  %v1269 = vadd.f32 0.0, %v1268
  %1270 = vmatprep.mubr.f32.mxu0 0.0
  %1271 = vmatmul.mubr.f32.gmra.mxu0 %v1022
  %v1272 = vpop.f32.mrf.mxu0
  %v1273 = vadd.f32 0.0, %v1272
  %v1274 = vpop.f32.mrf.mxu0
  %v1275 = vadd.f32 0.0, %v1274
  %1276 = vmatprep.mubr.f32.mxu0 0.0
  %1277 = vmatmul.mubr.f32.gmra.mxu0 %v1024
  %v1278 = vpop.f32.mrf.mxu0
  %v1279 = vadd.f32 0.0, %v1278
  %v1280 = vpop.f32.mrf.mxu0
  %v1281 = vadd.f32 0.0, %v1280
  %1282 = vdwg.mxu0
  %v1283 = vadd.f32 %v683, %v1093
  %v1284 = vadd.f32 %v685, %v1095
  %v1285 = vadd.f32 %v689, %v1099
  %v1286 = vadd.f32 %v691, %v1101
  %v1287 = vadd.f32 %v695, %v1105
  %v1288 = vadd.f32 %v697, %v1107
  %v1289 = vadd.f32 %v701, %v1111
  %v1290 = vadd.f32 %v703, %v1113
  %v1291 = vadd.f32 %v707, %v1117
  %v1292 = vadd.f32 %v709, %v1119
  %v1293 = vadd.f32 %v713, %v1123
  %v1294 = vadd.f32 %v715, %v1125
  %v1295 = vadd.f32 %v719, %v1129
  %v1296 = vadd.f32 %v721, %v1131
  %v1297 = vadd.f32 %v725, %v1135
  %v1298 = vadd.f32 %v727, %v1137
  %v1299 = vadd.f32 %v731, %v1141
  %v1300 = vadd.f32 %v733, %v1143
  %v1301 = vadd.f32 %v737, %v1147
  %v1302 = vadd.f32 %v739, %v1149
  %v1303 = vadd.f32 %v743, %v1153
  %v1304 = vadd.f32 %v745, %v1155
  %v1305 = vadd.f32 %v749, %v1159
  %v1306 = vadd.f32 %v751, %v1161
  %v1307 = vadd.f32 %v755, %v1165
  %v1308 = vadd.f32 %v757, %v1167
  %v1309 = vadd.f32 %v761, %v1171
  %v1310 = vadd.f32 %v763, %v1173
  %v1311 = vadd.f32 %v767, %v1177
  %v1312 = vadd.f32 %v769, %v1179
  %v1313 = vadd.f32 %v773, %v1183
  %v1314 = vadd.f32 %v775, %v1185
  %v1315 = vadd.f32 %v779, %v1189
  %v1316 = vadd.f32 %v781, %v1191
  %v1317 = vadd.f32 %v785, %v1195
  %v1318 = vadd.f32 %v787, %v1197
  %v1319 = vadd.f32 %v791, %v1201
  %v1320 = vadd.f32 %v793, %v1203
  %v1321 = vadd.f32 %v797, %v1207
  %v1322 = vadd.f32 %v799, %v1209
  %v1323 = vadd.f32 %v803, %v1213
  %v1324 = vadd.f32 %v805, %v1215
  %v1325 = vadd.f32 %v809, %v1219
  %v1326 = vadd.f32 %v811, %v1221
  %v1327 = vadd.f32 %v815, %v1225
  %v1328 = vadd.f32 %v817, %v1227
  %v1329 = vadd.f32 %v821, %v1231
  %v1330 = vadd.f32 %v823, %v1233
  %v1331 = vadd.f32 %v827, %v1237
  %v1332 = vadd.f32 %v829, %v1239
  %v1333 = vadd.f32 %v833, %v1243
  %v1334 = vadd.f32 %v835, %v1245
  %v1335 = vadd.f32 %v839, %v1249
  %v1336 = vadd.f32 %v841, %v1251
  %v1337 = vadd.f32 %v845, %v1255
  %v1338 = vadd.f32 %v847, %v1257
  %v1339 = vadd.f32 %v851, %v1261
  %v1340 = vadd.f32 %v853, %v1263
  %v1341 = vadd.f32 %v857, %v1267
  %v1342 = vadd.f32 %v859, %v1269
  %v1343 = vadd.f32 %v863, %v1273
  %v1344 = vadd.f32 %v865, %v1275
  %v1345 = vadd.f32 %v869, %v1279
  %v1346 = vadd.f32 %v871, %v1281
  %s1347 = scalar_lea.vmem %s1, 576
  %v1348 = vld [vmem:[%s1347] sm:$0xff]
  %v1349 = vld [vmem:[%s1347 + $0x8] sm:$0xff]
  %v1350 = vld [vmem:[%s1347 + $0x10] sm:$0xff]
  %v1351 = vld [vmem:[%s1347 + $0x18] sm:$0xff]
  %v1352 = vld [vmem:[%s1347 + $0x20] sm:$0xff]
  %v1353 = vld [vmem:[%s1347 + $0x28] sm:$0xff]
  %v1354 = vld [vmem:[%s1347 + $0x30] sm:$0xff]
  %v1355 = vld [vmem:[%s1347 + $0x38] sm:$0xff]
  %v1356 = vld [vmem:[%s1347 + $0x40] sm:$0xff]
  %v1357 = vld [vmem:[%s1347 + $0x48] sm:$0xff]
  %v1358 = vld [vmem:[%s1347 + $0x50] sm:$0xff]
  %v1359 = vld [vmem:[%s1347 + $0x58] sm:$0xff]
  %v1360 = vld [vmem:[%s1347 + $0x60] sm:$0xff]
  %v1361 = vld [vmem:[%s1347 + $0x68] sm:$0xff]
  %v1362 = vld [vmem:[%s1347 + $0x70] sm:$0xff]
  %v1363 = vld [vmem:[%s1347 + $0x78] sm:$0xff]
  %v1364 = vld [vmem:[%s1347 + $0x80] sm:$0xff]
  %v1365 = vld [vmem:[%s1347 + $0x88] sm:$0xff]
  %v1366 = vld [vmem:[%s1347 + $0x90] sm:$0xff]
  %v1367 = vld [vmem:[%s1347 + $0x98] sm:$0xff]
  %v1368 = vld [vmem:[%s1347 + $0xa0] sm:$0xff]
  %v1369 = vld [vmem:[%s1347 + $0xa8] sm:$0xff]
  %v1370 = vld [vmem:[%s1347 + $0xb0] sm:$0xff]
  %v1371 = vld [vmem:[%s1347 + $0xb8] sm:$0xff]
  %vm1372 = vcmask 1044480
  %v1373 = vrot.slane %v53, 3
  %v1374 = vrot.slane %v54, 3
  %v1375 = vsel %vm1372, %v1373, %v1374
  %v1376 = vrot.slane %v55, 3
  %v1377 = vsel %vm1372, %v1374, %v1376
  %v1378 = vrot.slane %v56, 3
  %v1379 = vsel %vm1372, %v1376, %v1378
  %v1380 = vrot.slane %v57, 3
  %v1381 = vsel %vm1372, %v1378, %v1380
  %v1382 = vrot.slane %v58, 3
  %v1383 = vsel %vm1372, %v1380, %v1382
  %v1384 = vrot.slane %v59, 3
  %v1385 = vsel %vm1372, %v1382, %v1384
  %v1386 = vrot.slane %v60, 3
  %v1387 = vsel %vm1372, %v1384, %v1386
  %v1388 = vrot.slane %v61, 3
  %v1389 = vsel %vm1372, %v1386, %v1388
  %v1390 = vrot.slane %v62, 3
  %v1391 = vsel %vm1372, %v1388, %v1390
  %v1392 = vrot.slane %v63, 3
  %v1393 = vsel %vm1372, %v1390, %v1392
  %v1394 = vrot.slane %v64, 3
  %v1395 = vsel %vm1372, %v1392, %v1394
  %v1396 = vrot.slane %v65, 3
  %v1397 = vsel %vm1372, %v1394, %v1396
  %v1398 = vrot.slane %v66, 3
  %v1399 = vsel %vm1372, %v1396, %v1398
  %v1400 = vrot.slane %v67, 3
  %v1401 = vsel %vm1372, %v1398, %v1400
  %v1402 = vrot.slane %v68, 3
  %v1403 = vsel %vm1372, %v1400, %v1402
  %v1404 = vrot.slane %v69, 3
  %v1405 = vsel %vm1372, %v1402, %v1404
  %v1406 = vrot.slane %v70, 3
  %v1407 = vsel %vm1372, %v1404, %v1406
  %v1408 = vrot.slane %v71, 3
  %v1409 = vsel %vm1372, %v1406, %v1408
  %v1410 = vrot.slane %v72, 3
  %v1411 = vsel %vm1372, %v1408, %v1410
  %v1412 = vrot.slane %v73, 3
  %v1413 = vsel %vm1372, %v1410, %v1412
  %v1414 = vrot.slane %v74, 3
  %v1415 = vsel %vm1372, %v1412, %v1414
  %v1416 = vrot.slane %v75, 3
  %v1417 = vsel %vm1372, %v1414, %v1416
  %v1418 = vrot.slane %v76, 3
  %v1419 = vsel %vm1372, %v1416, %v1418
  %v1420 = vrot.slane %v77, 3
  %v1421 = vsel %vm1372, %v1418, %v1420
  %v1422 = vrot.slane %v78, 3
  %v1423 = vsel %vm1372, %v1420, %v1422
  %v1424 = vrot.slane %v79, 3
  %v1425 = vsel %vm1372, %v1422, %v1424
  %v1426 = vrot.slane %v80, 3
  %v1427 = vsel %vm1372, %v1424, %v1426
  %v1428 = vrot.slane %v81, 3
  %v1429 = vsel %vm1372, %v1426, %v1428
  %v1430 = vrot.slane %v82, 3
  %v1431 = vsel %vm1372, %v1428, %v1430
  %v1432 = vrot.slane %v83, 3
  %v1433 = vsel %vm1372, %v1430, %v1432
  %v1434 = vrot.slane %v84, 3
  %v1435 = vsel %vm1372, %v1432, %v1434
  %v1436 = vsel %vm230, %v1375, 0
  %v1438 = vsel %vm230, %v1377, 0
  %v1440 = vsel %vm230, %v1379, 0
  %v1442 = vsel %vm230, %v1381, 0
  %v1444 = vsel %vm230, %v1383, 0
  %v1446 = vsel %vm230, %v1385, 0
  %v1448 = vsel %vm230, %v1387, 0
  %v1450 = vsel %vm230, %v1389, 0
  %v1452 = vsel %vm230, %v1391, 0
  %v1454 = vsel %vm230, %v1393, 0
  %v1456 = vsel %vm230, %v1395, 0
  %v1458 = vsel %vm230, %v1397, 0
  %v1460 = vsel %vm230, %v1399, 0
  %v1462 = vsel %vm230, %v1401, 0
  %v1464 = vsel %vm230, %v1403, 0
  %v1466 = vsel %vm230, %v1405, 0
  %v1468 = vsel %vm230, %v1407, 0
  %v1470 = vsel %vm230, %v1409, 0
  %v1472 = vsel %vm230, %v1411, 0
  %v1474 = vsel %vm230, %v1413, 0
  %v1476 = vsel %vm230, %v1415, 0
  %v1478 = vsel %vm230, %v1417, 0
  %v1480 = vsel %vm230, %v1419, 0
  %v1482 = vsel %vm230, %v1421, 0
  %v1484 = vsel %vm230, %v1423, 0
  %v1486 = vsel %vm230, %v1425, 0
  %v1488 = vsel %vm230, %v1427, 0
  %v1490 = vsel %vm230, %v1429, 0
  %v1492 = vsel %vm230, %v1431, 0
  %v1494 = vsel %vm230, %v1433, 0
  %v1496 = vsel %vm230, %v1435, 0
  %v1498 = vsel %vm230, %v1434, 0
  %1500 = vmatprep.subr.mxu0 0.0
  %1501 = vmatpush1.msra.mxu0 0.0
  %1502 = vmatprep.subr.mxu0 0.0
  %1503 = vmatpush1.msra.mxu0 0.0
  %1504 = vmatprep.subr.mxu0 0.0
  %1505 = vmatpush1.msra.mxu0 0.0
  %1506 = vmatprep.subr.mxu0 0.0
  %1507 = vmatpush1.msra.mxu0 0.0
  %1508 = vmatprep.subr.mxu0 %v1371
  %1509 = vmatpush1.msra.mxu0 %v1370
  %1510 = vmatprep.subr.mxu0 %v1369
  %1511 = vmatpush1.msra.mxu0 %v1368
  %1512 = vmatprep.subr.mxu0 %v1367
  %1513 = vmatpush1.msra.mxu0 %v1366
  %1514 = vmatprep.subr.mxu0 %v1365
  %1515 = vmatpush1.msra.mxu0 %v1364
  %1516 = vmatprep.subr.mxu0 %v1363
  %1517 = vmatpush1.msra.mxu0 %v1362
  %1518 = vmatprep.subr.mxu0 %v1361
  %1519 = vmatpush1.msra.mxu0 %v1360
  %1520 = vmatprep.subr.mxu0 %v1359
  %1521 = vmatpush1.msra.mxu0 %v1358
  %1522 = vmatprep.subr.mxu0 %v1357
  %1523 = vmatpush1.msra.mxu0 %v1356
  %1524 = vmatprep.subr.mxu0 %v1355
  %1525 = vmatpush1.msra.mxu0 %v1354
  %1526 = vmatprep.subr.mxu0 %v1353
  %1527 = vmatpush1.msra.mxu0 %v1352
  %1528 = vmatprep.subr.mxu0 %v1351
  %1529 = vmatpush1.msra.mxu0 %v1350
  %1530 = vmatprep.subr.mxu0 %v1349
  %1531 = vmatpush1.msra.mxu0 %v1348
  %1532 = vmatprep.subr.mxu0 0.0
  %1533 = vmatpush2.msra.mxu0 0.0
  %1534 = vmatprep.subr.mxu0 0.0
  %1535 = vmatpush2.msra.mxu0 0.0
  %1536 = vmatprep.subr.mxu0 0.0
  %1537 = vmatpush2.msra.mxu0 0.0
  %1538 = vmatprep.subr.mxu0 0.0
  %1539 = vmatpush2.msra.mxu0 0.0
  %1540 = vmatprep.subr.mxu0 0.0
  %1541 = vmatpush2.msra.mxu0 0.0
  %1542 = vmatprep.subr.mxu0 0.0
  %1543 = vmatpush2.msra.mxu0 0.0
  %1544 = vmatprep.subr.mxu0 0.0
  %1545 = vmatpush2.msra.mxu0 0.0
  %1546 = vmatprep.subr.mxu0 0.0
  %1547 = vmatpush2.msra.mxu0 0.0
  %1548 = vmatprep.subr.mxu0 0.0
  %1549 = vmatpush2.msra.mxu0 0.0
  %1550 = vmatprep.subr.mxu0 0.0
  %1551 = vmatpush2.msra.mxu0 0.0
  %1552 = vmatprep.subr.mxu0 0.0
  %1553 = vmatpush2.msra.mxu0 0.0
  %1554 = vmatprep.subr.mxu0 0.0
  %1555 = vmatpush2.msra.mxu0 0.0
  %1556 = vmatprep.subr.mxu0 0.0
  %1557 = vmatpush2.msra.mxu0 0.0
  %1558 = vmatprep.subr.mxu0 0.0
  %1559 = vmatpush2.msra.mxu0 0.0
  %1560 = vmatprep.subr.mxu0 0.0
  %1561 = vmatpush2.msra.mxu0 0.0
  %1562 = vmatprep.subr.mxu0 0.0
  %1563 = vmatpush2.msra.mxu0 0.0
  %1564 = vmatprep.mubr.f32.mxu0 0.0
  %1565 = vmatmul.mubr.f32.gmra.mxu0 %v1436
  %v1566 = vpop.f32.mrf.mxu0
  %v1567 = vadd.f32 0.0, %v1566
  %v1568 = vpop.f32.mrf.mxu0
  %v1569 = vadd.f32 0.0, %v1568
  %1570 = vmatprep.mubr.f32.mxu0 0.0
  %1571 = vmatmul.mubr.f32.gmra.mxu0 %v1438
  %v1572 = vpop.f32.mrf.mxu0
  %v1573 = vadd.f32 0.0, %v1572
  %v1574 = vpop.f32.mrf.mxu0
  %v1575 = vadd.f32 0.0, %v1574
  %1576 = vmatprep.mubr.f32.mxu0 0.0
  %1577 = vmatmul.mubr.f32.gmra.mxu0 %v1440
  %v1578 = vpop.f32.mrf.mxu0
  %v1579 = vadd.f32 0.0, %v1578
  %v1580 = vpop.f32.mrf.mxu0
  %v1581 = vadd.f32 0.0, %v1580
  %1582 = vmatprep.mubr.f32.mxu0 0.0
  %1583 = vmatmul.mubr.f32.gmra.mxu0 %v1442
  %v1584 = vpop.f32.mrf.mxu0
  %v1585 = vadd.f32 0.0, %v1584
  %v1586 = vpop.f32.mrf.mxu0
  %v1587 = vadd.f32 0.0, %v1586
  %1588 = vmatprep.mubr.f32.mxu0 0.0
  %1589 = vmatmul.mubr.f32.gmra.mxu0 %v1444
  %v1590 = vpop.f32.mrf.mxu0
  %v1591 = vadd.f32 0.0, %v1590
  %v1592 = vpop.f32.mrf.mxu0
  %v1593 = vadd.f32 0.0, %v1592
  %1594 = vmatprep.mubr.f32.mxu0 0.0
  %1595 = vmatmul.mubr.f32.gmra.mxu0 %v1446
  %v1596 = vpop.f32.mrf.mxu0
  %v1597 = vadd.f32 0.0, %v1596
  %v1598 = vpop.f32.mrf.mxu0
  %v1599 = vadd.f32 0.0, %v1598
  %1600 = vmatprep.mubr.f32.mxu0 0.0
  %1601 = vmatmul.mubr.f32.gmra.mxu0 %v1448
  %v1602 = vpop.f32.mrf.mxu0
  %v1603 = vadd.f32 0.0, %v1602
  %v1604 = vpop.f32.mrf.mxu0
  %v1605 = vadd.f32 0.0, %v1604
  %1606 = vmatprep.mubr.f32.mxu0 0.0
  %1607 = vmatmul.mubr.f32.gmra.mxu0 %v1450
  %v1608 = vpop.f32.mrf.mxu0
  %v1609 = vadd.f32 0.0, %v1608
  %v1610 = vpop.f32.mrf.mxu0
  %v1611 = vadd.f32 0.0, %v1610
  %1612 = vmatprep.mubr.f32.mxu0 0.0
  %1613 = vmatmul.mubr.f32.gmra.mxu0 %v1452
  %v1614 = vpop.f32.mrf.mxu0
  %v1615 = vadd.f32 0.0, %v1614
  %v1616 = vpop.f32.mrf.mxu0
  %v1617 = vadd.f32 0.0, %v1616
  %1618 = vmatprep.mubr.f32.mxu0 0.0
  %1619 = vmatmul.mubr.f32.gmra.mxu0 %v1454
  %v1620 = vpop.f32.mrf.mxu0
  %v1621 = vadd.f32 0.0, %v1620
  %v1622 = vpop.f32.mrf.mxu0
  %v1623 = vadd.f32 0.0, %v1622
  %1624 = vmatprep.mubr.f32.mxu0 0.0
  %1625 = vmatmul.mubr.f32.gmra.mxu0 %v1456
  %v1626 = vpop.f32.mrf.mxu0
  %v1627 = vadd.f32 0.0, %v1626
  %v1628 = vpop.f32.mrf.mxu0
  %v1629 = vadd.f32 0.0, %v1628
  %1630 = vmatprep.mubr.f32.mxu0 0.0
  %1631 = vmatmul.mubr.f32.gmra.mxu0 %v1458
  %v1632 = vpop.f32.mrf.mxu0
  %v1633 = vadd.f32 0.0, %v1632
  %v1634 = vpop.f32.mrf.mxu0
  %v1635 = vadd.f32 0.0, %v1634
  %1636 = vmatprep.mubr.f32.mxu0 0.0
  %1637 = vmatmul.mubr.f32.gmra.mxu0 %v1460
  %v1638 = vpop.f32.mrf.mxu0
  %v1639 = vadd.f32 0.0, %v1638
  %v1640 = vpop.f32.mrf.mxu0
  %v1641 = vadd.f32 0.0, %v1640
  %1642 = vmatprep.mubr.f32.mxu0 0.0
  %1643 = vmatmul.mubr.f32.gmra.mxu0 %v1462
  %v1644 = vpop.f32.mrf.mxu0
  %v1645 = vadd.f32 0.0, %v1644
  %v1646 = vpop.f32.mrf.mxu0
  %v1647 = vadd.f32 0.0, %v1646
  %1648 = vmatprep.mubr.f32.mxu0 0.0
  %1649 = vmatmul.mubr.f32.gmra.mxu0 %v1464
  %v1650 = vpop.f32.mrf.mxu0
  %v1651 = vadd.f32 0.0, %v1650
  %v1652 = vpop.f32.mrf.mxu0
  %v1653 = vadd.f32 0.0, %v1652
  %1654 = vmatprep.mubr.f32.mxu0 0.0
  %1655 = vmatmul.mubr.f32.gmra.mxu0 %v1466
  %v1656 = vpop.f32.mrf.mxu0
  %v1657 = vadd.f32 0.0, %v1656
  %v1658 = vpop.f32.mrf.mxu0
  %v1659 = vadd.f32 0.0, %v1658
  %1660 = vmatprep.mubr.f32.mxu0 0.0
  %1661 = vmatmul.mubr.f32.gmra.mxu0 %v1468
  %v1662 = vpop.f32.mrf.mxu0
  %v1663 = vadd.f32 0.0, %v1662
  %v1664 = vpop.f32.mrf.mxu0
  %v1665 = vadd.f32 0.0, %v1664
  %1666 = vmatprep.mubr.f32.mxu0 0.0
  %1667 = vmatmul.mubr.f32.gmra.mxu0 %v1470
  %v1668 = vpop.f32.mrf.mxu0
  %v1669 = vadd.f32 0.0, %v1668
  %v1670 = vpop.f32.mrf.mxu0
  %v1671 = vadd.f32 0.0, %v1670
  %1672 = vmatprep.mubr.f32.mxu0 0.0
  %1673 = vmatmul.mubr.f32.gmra.mxu0 %v1472
  %v1674 = vpop.f32.mrf.mxu0
  %v1675 = vadd.f32 0.0, %v1674
  %v1676 = vpop.f32.mrf.mxu0
  %v1677 = vadd.f32 0.0, %v1676
  %1678 = vmatprep.mubr.f32.mxu0 0.0
  %1679 = vmatmul.mubr.f32.gmra.mxu0 %v1474
  %v1680 = vpop.f32.mrf.mxu0
  %v1681 = vadd.f32 0.0, %v1680
  %v1682 = vpop.f32.mrf.mxu0
  %v1683 = vadd.f32 0.0, %v1682
  %1684 = vmatprep.mubr.f32.mxu0 0.0
  %1685 = vmatmul.mubr.f32.gmra.mxu0 %v1476
  %v1686 = vpop.f32.mrf.mxu0
  %v1687 = vadd.f32 0.0, %v1686
  %v1688 = vpop.f32.mrf.mxu0
  %v1689 = vadd.f32 0.0, %v1688
  %1690 = vmatprep.mubr.f32.mxu0 0.0
  %1691 = vmatmul.mubr.f32.gmra.mxu0 %v1478
  %v1692 = vpop.f32.mrf.mxu0
  %v1693 = vadd.f32 0.0, %v1692
  %v1694 = vpop.f32.mrf.mxu0
  %v1695 = vadd.f32 0.0, %v1694
  %1696 = vmatprep.mubr.f32.mxu0 0.0
  %1697 = vmatmul.mubr.f32.gmra.mxu0 %v1480
  %v1698 = vpop.f32.mrf.mxu0
  %v1699 = vadd.f32 0.0, %v1698
  %v1700 = vpop.f32.mrf.mxu0
  %v1701 = vadd.f32 0.0, %v1700
  %1702 = vmatprep.mubr.f32.mxu0 0.0
  %1703 = vmatmul.mubr.f32.gmra.mxu0 %v1482
  %v1704 = vpop.f32.mrf.mxu0
  %v1705 = vadd.f32 0.0, %v1704
  %v1706 = vpop.f32.mrf.mxu0
  %v1707 = vadd.f32 0.0, %v1706
  %1708 = vmatprep.mubr.f32.mxu0 0.0
  %1709 = vmatmul.mubr.f32.gmra.mxu0 %v1484
  %v1710 = vpop.f32.mrf.mxu0
  %v1711 = vadd.f32 0.0, %v1710
  %v1712 = vpop.f32.mrf.mxu0
  %v1713 = vadd.f32 0.0, %v1712
  %1714 = vmatprep.mubr.f32.mxu0 0.0
  %1715 = vmatmul.mubr.f32.gmra.mxu0 %v1486
  %v1716 = vpop.f32.mrf.mxu0
  %v1717 = vadd.f32 0.0, %v1716
  %v1718 = vpop.f32.mrf.mxu0
  %v1719 = vadd.f32 0.0, %v1718
  %1720 = vmatprep.mubr.f32.mxu0 0.0
  %1721 = vmatmul.mubr.f32.gmra.mxu0 %v1488
  %v1722 = vpop.f32.mrf.mxu0
  %v1723 = vadd.f32 0.0, %v1722
  %v1724 = vpop.f32.mrf.mxu0
  %v1725 = vadd.f32 0.0, %v1724
  %1726 = vmatprep.mubr.f32.mxu0 0.0
  %1727 = vmatmul.mubr.f32.gmra.mxu0 %v1490
  %v1728 = vpop.f32.mrf.mxu0
  %v1729 = vadd.f32 0.0, %v1728
  %v1730 = vpop.f32.mrf.mxu0
  %v1731 = vadd.f32 0.0, %v1730
  %1732 = vmatprep.mubr.f32.mxu0 0.0
  %1733 = vmatmul.mubr.f32.gmra.mxu0 %v1492
  %v1734 = vpop.f32.mrf.mxu0
  %v1735 = vadd.f32 0.0, %v1734
  %v1736 = vpop.f32.mrf.mxu0
  %v1737 = vadd.f32 0.0, %v1736
  %1738 = vmatprep.mubr.f32.mxu0 0.0
  %1739 = vmatmul.mubr.f32.gmra.mxu0 %v1494
  %v1740 = vpop.f32.mrf.mxu0
  %v1741 = vadd.f32 0.0, %v1740
  %v1742 = vpop.f32.mrf.mxu0
  %v1743 = vadd.f32 0.0, %v1742
  %1744 = vmatprep.mubr.f32.mxu0 0.0
  %1745 = vmatmul.mubr.f32.gmra.mxu0 %v1496
  %v1746 = vpop.f32.mrf.mxu0
  %v1747 = vadd.f32 0.0, %v1746
  %v1748 = vpop.f32.mrf.mxu0
  %v1749 = vadd.f32 0.0, %v1748
  %1750 = vmatprep.mubr.f32.mxu0 0.0
  %1751 = vmatmul.mubr.f32.gmra.mxu0 %v1498
  %v1752 = vpop.f32.mrf.mxu0
  %v1753 = vadd.f32 0.0, %v1752
  %v1754 = vpop.f32.mrf.mxu0
  %v1755 = vadd.f32 0.0, %v1754
  %1756 = vdwg.mxu0
  %v1757 = vadd.f32 %v1283, %v1567
  %v1758 = vadd.f32 %v1284, %v1569
  %v1759 = vadd.f32 %v1285, %v1573
  %v1760 = vadd.f32 %v1286, %v1575
  %v1761 = vadd.f32 %v1287, %v1579
  %v1762 = vadd.f32 %v1288, %v1581
  %v1763 = vadd.f32 %v1289, %v1585
  %v1764 = vadd.f32 %v1290, %v1587
  %v1765 = vadd.f32 %v1291, %v1591
  %v1766 = vadd.f32 %v1292, %v1593
  %v1767 = vadd.f32 %v1293, %v1597
  %v1768 = vadd.f32 %v1294, %v1599
  %v1769 = vadd.f32 %v1295, %v1603
  %v1770 = vadd.f32 %v1296, %v1605
  %v1771 = vadd.f32 %v1297, %v1609
  %v1772 = vadd.f32 %v1298, %v1611
  %v1773 = vadd.f32 %v1299, %v1615
  %v1774 = vadd.f32 %v1300, %v1617
  %v1775 = vadd.f32 %v1301, %v1621
  %v1776 = vadd.f32 %v1302, %v1623
  %v1777 = vadd.f32 %v1303, %v1627
  %v1778 = vadd.f32 %v1304, %v1629
  %v1779 = vadd.f32 %v1305, %v1633
  %v1780 = vadd.f32 %v1306, %v1635
  %v1781 = vadd.f32 %v1307, %v1639
  %v1782 = vadd.f32 %v1308, %v1641
  %v1783 = vadd.f32 %v1309, %v1645
  %v1784 = vadd.f32 %v1310, %v1647
  %v1785 = vadd.f32 %v1311, %v1651
  %v1786 = vadd.f32 %v1312, %v1653
  %v1787 = vadd.f32 %v1313, %v1657
  %v1788 = vadd.f32 %v1314, %v1659
  %v1789 = vadd.f32 %v1315, %v1663
  %v1790 = vadd.f32 %v1316, %v1665
  %v1791 = vadd.f32 %v1317, %v1669
  %v1792 = vadd.f32 %v1318, %v1671
  %v1793 = vadd.f32 %v1319, %v1675
  %v1794 = vadd.f32 %v1320, %v1677
  %v1795 = vadd.f32 %v1321, %v1681
  %v1796 = vadd.f32 %v1322, %v1683
  %v1797 = vadd.f32 %v1323, %v1687
  %v1798 = vadd.f32 %v1324, %v1689
  %v1799 = vadd.f32 %v1325, %v1693
  %v1800 = vadd.f32 %v1326, %v1695
  %v1801 = vadd.f32 %v1327, %v1699
  %v1802 = vadd.f32 %v1328, %v1701
  %v1803 = vadd.f32 %v1329, %v1705
  %v1804 = vadd.f32 %v1330, %v1707
  %v1805 = vadd.f32 %v1331, %v1711
  %v1806 = vadd.f32 %v1332, %v1713
  %v1807 = vadd.f32 %v1333, %v1717
  %v1808 = vadd.f32 %v1334, %v1719
  %v1809 = vadd.f32 %v1335, %v1723
  %v1810 = vadd.f32 %v1336, %v1725
  %v1811 = vadd.f32 %v1337, %v1729
  %v1812 = vadd.f32 %v1338, %v1731
  %v1813 = vadd.f32 %v1339, %v1735
  %v1814 = vadd.f32 %v1340, %v1737
  %v1815 = vadd.f32 %v1341, %v1741
  %v1816 = vadd.f32 %v1342, %v1743
  %v1817 = vadd.f32 %v1343, %v1747
  %v1818 = vadd.f32 %v1344, %v1749
  %v1819 = vadd.f32 %v1345, %v1753
  %v1820 = vadd.f32 %v1346, %v1755
  %s1821 = scalar_lea.vmem %s1, 768
  %v1822 = vld [vmem:[%s1821] sm:$0xff]
  %v1823 = vld [vmem:[%s1821 + $0x8] sm:$0xff]
  %v1824 = vld [vmem:[%s1821 + $0x10] sm:$0xff]
  %v1825 = vld [vmem:[%s1821 + $0x18] sm:$0xff]
  %v1826 = vld [vmem:[%s1821 + $0x20] sm:$0xff]
  %v1827 = vld [vmem:[%s1821 + $0x28] sm:$0xff]
  %v1828 = vld [vmem:[%s1821 + $0x30] sm:$0xff]
  %v1829 = vld [vmem:[%s1821 + $0x38] sm:$0xff]
  %v1830 = vld [vmem:[%s1821 + $0x40] sm:$0xff]
  %v1831 = vld [vmem:[%s1821 + $0x48] sm:$0xff]
  %v1832 = vld [vmem:[%s1821 + $0x50] sm:$0xff]
  %v1833 = vld [vmem:[%s1821 + $0x58] sm:$0xff]
  %v1834 = vld [vmem:[%s1821 + $0x60] sm:$0xff]
  %v1835 = vld [vmem:[%s1821 + $0x68] sm:$0xff]
  %v1836 = vld [vmem:[%s1821 + $0x70] sm:$0xff]
  %v1837 = vld [vmem:[%s1821 + $0x78] sm:$0xff]
  %v1838 = vld [vmem:[%s1821 + $0x80] sm:$0xff]
  %v1839 = vld [vmem:[%s1821 + $0x88] sm:$0xff]
  %v1840 = vld [vmem:[%s1821 + $0x90] sm:$0xff]
  %v1841 = vld [vmem:[%s1821 + $0x98] sm:$0xff]
  %v1842 = vld [vmem:[%s1821 + $0xa0] sm:$0xff]
  %v1843 = vld [vmem:[%s1821 + $0xa8] sm:$0xff]
  %v1844 = vld [vmem:[%s1821 + $0xb0] sm:$0xff]
  %v1845 = vld [vmem:[%s1821 + $0xb8] sm:$0xff]
  %vm1846 = vcmask 1043456
  %v1847 = vrot.slane %v53, 4
  %v1848 = vrot.slane %v54, 4
  %v1849 = vsel %vm1846, %v1847, %v1848
  %v1850 = vrot.slane %v55, 4
  %v1851 = vsel %vm1846, %v1848, %v1850
  %v1852 = vrot.slane %v56, 4
  %v1853 = vsel %vm1846, %v1850, %v1852
  %v1854 = vrot.slane %v57, 4
  %v1855 = vsel %vm1846, %v1852, %v1854
  %v1856 = vrot.slane %v58, 4
  %v1857 = vsel %vm1846, %v1854, %v1856
  %v1858 = vrot.slane %v59, 4
  %v1859 = vsel %vm1846, %v1856, %v1858
  %v1860 = vrot.slane %v60, 4
  %v1861 = vsel %vm1846, %v1858, %v1860
  %v1862 = vrot.slane %v61, 4
  %v1863 = vsel %vm1846, %v1860, %v1862
  %v1864 = vrot.slane %v62, 4
  %v1865 = vsel %vm1846, %v1862, %v1864
  %v1866 = vrot.slane %v63, 4
  %v1867 = vsel %vm1846, %v1864, %v1866
  %v1868 = vrot.slane %v64, 4
  %v1869 = vsel %vm1846, %v1866, %v1868
  %v1870 = vrot.slane %v65, 4
  %v1871 = vsel %vm1846, %v1868, %v1870
  %v1872 = vrot.slane %v66, 4
  %v1873 = vsel %vm1846, %v1870, %v1872
  %v1874 = vrot.slane %v67, 4
  %v1875 = vsel %vm1846, %v1872, %v1874
  %v1876 = vrot.slane %v68, 4
  %v1877 = vsel %vm1846, %v1874, %v1876
  %v1878 = vrot.slane %v69, 4
  %v1879 = vsel %vm1846, %v1876, %v1878
  %v1880 = vrot.slane %v70, 4
  %v1881 = vsel %vm1846, %v1878, %v1880
  %v1882 = vrot.slane %v71, 4
  %v1883 = vsel %vm1846, %v1880, %v1882
  %v1884 = vrot.slane %v72, 4
  %v1885 = vsel %vm1846, %v1882, %v1884
  %v1886 = vrot.slane %v73, 4
  %v1887 = vsel %vm1846, %v1884, %v1886
  %v1888 = vrot.slane %v74, 4
  %v1889 = vsel %vm1846, %v1886, %v1888
  %v1890 = vrot.slane %v75, 4
  %v1891 = vsel %vm1846, %v1888, %v1890
  %v1892 = vrot.slane %v76, 4
  %v1893 = vsel %vm1846, %v1890, %v1892
  %v1894 = vrot.slane %v77, 4
  %v1895 = vsel %vm1846, %v1892, %v1894
  %v1896 = vrot.slane %v78, 4
  %v1897 = vsel %vm1846, %v1894, %v1896
  %v1898 = vrot.slane %v79, 4
  %v1899 = vsel %vm1846, %v1896, %v1898
  %v1900 = vrot.slane %v80, 4
  %v1901 = vsel %vm1846, %v1898, %v1900
  %v1902 = vrot.slane %v81, 4
  %v1903 = vsel %vm1846, %v1900, %v1902
  %v1904 = vrot.slane %v82, 4
  %v1905 = vsel %vm1846, %v1902, %v1904
  %v1906 = vrot.slane %v83, 4
  %v1907 = vsel %vm1846, %v1904, %v1906
  %v1908 = vrot.slane %v84, 4
  %v1909 = vsel %vm1846, %v1906, %v1908
  %v1910 = vsel %vm230, %v1849, 0
  %v1912 = vsel %vm230, %v1851, 0
  %v1914 = vsel %vm230, %v1853, 0
  %v1916 = vsel %vm230, %v1855, 0
  %v1918 = vsel %vm230, %v1857, 0
  %v1920 = vsel %vm230, %v1859, 0
  %v1922 = vsel %vm230, %v1861, 0
  %v1924 = vsel %vm230, %v1863, 0
  %v1926 = vsel %vm230, %v1865, 0
  %v1928 = vsel %vm230, %v1867, 0
  %v1930 = vsel %vm230, %v1869, 0
  %v1932 = vsel %vm230, %v1871, 0
  %v1934 = vsel %vm230, %v1873, 0
  %v1936 = vsel %vm230, %v1875, 0
  %v1938 = vsel %vm230, %v1877, 0
  %v1940 = vsel %vm230, %v1879, 0
  %v1942 = vsel %vm230, %v1881, 0
  %v1944 = vsel %vm230, %v1883, 0
  %v1946 = vsel %vm230, %v1885, 0
  %v1948 = vsel %vm230, %v1887, 0
  %v1950 = vsel %vm230, %v1889, 0
  %v1952 = vsel %vm230, %v1891, 0
  %v1954 = vsel %vm230, %v1893, 0
  %v1956 = vsel %vm230, %v1895, 0
  %v1958 = vsel %vm230, %v1897, 0
  %v1960 = vsel %vm230, %v1899, 0
  %v1962 = vsel %vm230, %v1901, 0
  %v1964 = vsel %vm230, %v1903, 0
  %v1966 = vsel %vm230, %v1905, 0
  %v1968 = vsel %vm230, %v1907, 0
  %v1970 = vsel %vm230, %v1909, 0
  %v1972 = vsel %vm230, %v1908, 0
  %1974 = vmatprep.subr.mxu0 0.0
  %1975 = vmatpush1.msra.mxu0 0.0
  %1976 = vmatprep.subr.mxu0 0.0
  %1977 = vmatpush1.msra.mxu0 0.0
  %1978 = vmatprep.subr.mxu0 0.0
  %1979 = vmatpush1.msra.mxu0 0.0
  %1980 = vmatprep.subr.mxu0 0.0
  %1981 = vmatpush1.msra.mxu0 0.0
  %1982 = vmatprep.subr.mxu0 %v1845
  %1983 = vmatpush1.msra.mxu0 %v1844
  %1984 = vmatprep.subr.mxu0 %v1843
  %1985 = vmatpush1.msra.mxu0 %v1842
  %1986 = vmatprep.subr.mxu0 %v1841
  %1987 = vmatpush1.msra.mxu0 %v1840
  %1988 = vmatprep.subr.mxu0 %v1839
  %1989 = vmatpush1.msra.mxu0 %v1838
  %1990 = vmatprep.subr.mxu0 %v1837
  %1991 = vmatpush1.msra.mxu0 %v1836
  %1992 = vmatprep.subr.mxu0 %v1835
  %1993 = vmatpush1.msra.mxu0 %v1834
  %1994 = vmatprep.subr.mxu0 %v1833
  %1995 = vmatpush1.msra.mxu0 %v1832
  %1996 = vmatprep.subr.mxu0 %v1831
  %1997 = vmatpush1.msra.mxu0 %v1830
  %1998 = vmatprep.subr.mxu0 %v1829
  %1999 = vmatpush1.msra.mxu0 %v1828
  %2000 = vmatprep.subr.mxu0 %v1827
  %2001 = vmatpush1.msra.mxu0 %v1826
  %2002 = vmatprep.subr.mxu0 %v1825
  %2003 = vmatpush1.msra.mxu0 %v1824
  %2004 = vmatprep.subr.mxu0 %v1823
  %2005 = vmatpush1.msra.mxu0 %v1822
  %2006 = vmatprep.subr.mxu0 0.0
  %2007 = vmatpush2.msra.mxu0 0.0
  %2008 = vmatprep.subr.mxu0 0.0
  %2009 = vmatpush2.msra.mxu0 0.0
  %2010 = vmatprep.subr.mxu0 0.0
  %2011 = vmatpush2.msra.mxu0 0.0
  %2012 = vmatprep.subr.mxu0 0.0
  %2013 = vmatpush2.msra.mxu0 0.0
  %2014 = vmatprep.subr.mxu0 0.0
  %2015 = vmatpush2.msra.mxu0 0.0
  %2016 = vmatprep.subr.mxu0 0.0
  %2017 = vmatpush2.msra.mxu0 0.0
  %2018 = vmatprep.subr.mxu0 0.0
  %2019 = vmatpush2.msra.mxu0 0.0
  %2020 = vmatprep.subr.mxu0 0.0
  %2021 = vmatpush2.msra.mxu0 0.0
  %2022 = vmatprep.subr.mxu0 0.0
  %2023 = vmatpush2.msra.mxu0 0.0
  %2024 = vmatprep.subr.mxu0 0.0
  %2025 = vmatpush2.msra.mxu0 0.0
  %2026 = vmatprep.subr.mxu0 0.0
  %2027 = vmatpush2.msra.mxu0 0.0
  %2028 = vmatprep.subr.mxu0 0.0
  %2029 = vmatpush2.msra.mxu0 0.0
  %2030 = vmatprep.subr.mxu0 0.0
  %2031 = vmatpush2.msra.mxu0 0.0
  %2032 = vmatprep.subr.mxu0 0.0
  %2033 = vmatpush2.msra.mxu0 0.0
  %2034 = vmatprep.subr.mxu0 0.0
  %2035 = vmatpush2.msra.mxu0 0.0
  %2036 = vmatprep.subr.mxu0 0.0
  %2037 = vmatpush2.msra.mxu0 0.0
  %2038 = vmatprep.mubr.f32.mxu0 0.0
  %2039 = vmatmul.mubr.f32.gmra.mxu0 %v1910
  %v2040 = vpop.f32.mrf.mxu0
  %v2041 = vadd.f32 0.0, %v2040
  %v2042 = vpop.f32.mrf.mxu0
  %v2043 = vadd.f32 0.0, %v2042
  %2044 = vmatprep.mubr.f32.mxu0 0.0
  %2045 = vmatmul.mubr.f32.gmra.mxu0 %v1912
  %v2046 = vpop.f32.mrf.mxu0
  %v2047 = vadd.f32 0.0, %v2046
  %v2048 = vpop.f32.mrf.mxu0
  %v2049 = vadd.f32 0.0, %v2048
  %2050 = vmatprep.mubr.f32.mxu0 0.0
  %2051 = vmatmul.mubr.f32.gmra.mxu0 %v1914
  %v2052 = vpop.f32.mrf.mxu0
  %v2053 = vadd.f32 0.0, %v2052
  %v2054 = vpop.f32.mrf.mxu0
  %v2055 = vadd.f32 0.0, %v2054
  %2056 = vmatprep.mubr.f32.mxu0 0.0
  %2057 = vmatmul.mubr.f32.gmra.mxu0 %v1916
  %v2058 = vpop.f32.mrf.mxu0
  %v2059 = vadd.f32 0.0, %v2058
  %v2060 = vpop.f32.mrf.mxu0
  %v2061 = vadd.f32 0.0, %v2060
  %2062 = vmatprep.mubr.f32.mxu0 0.0
  %2063 = vmatmul.mubr.f32.gmra.mxu0 %v1918
  %v2064 = vpop.f32.mrf.mxu0
  %v2065 = vadd.f32 0.0, %v2064
  %v2066 = vpop.f32.mrf.mxu0
  %v2067 = vadd.f32 0.0, %v2066
  %2068 = vmatprep.mubr.f32.mxu0 0.0
  %2069 = vmatmul.mubr.f32.gmra.mxu0 %v1920
  %v2070 = vpop.f32.mrf.mxu0
  %v2071 = vadd.f32 0.0, %v2070
  %v2072 = vpop.f32.mrf.mxu0
  %v2073 = vadd.f32 0.0, %v2072
  %2074 = vmatprep.mubr.f32.mxu0 0.0
  %2075 = vmatmul.mubr.f32.gmra.mxu0 %v1922
  %v2076 = vpop.f32.mrf.mxu0
  %v2077 = vadd.f32 0.0, %v2076
  %v2078 = vpop.f32.mrf.mxu0
  %v2079 = vadd.f32 0.0, %v2078
  %2080 = vmatprep.mubr.f32.mxu0 0.0
  %2081 = vmatmul.mubr.f32.gmra.mxu0 %v1924
  %v2082 = vpop.f32.mrf.mxu0
  %v2083 = vadd.f32 0.0, %v2082
  %v2084 = vpop.f32.mrf.mxu0
  %v2085 = vadd.f32 0.0, %v2084
  %2086 = vmatprep.mubr.f32.mxu0 0.0
  %2087 = vmatmul.mubr.f32.gmra.mxu0 %v1926
  %v2088 = vpop.f32.mrf.mxu0
  %v2089 = vadd.f32 0.0, %v2088
  %v2090 = vpop.f32.mrf.mxu0
  %v2091 = vadd.f32 0.0, %v2090
  %2092 = vmatprep.mubr.f32.mxu0 0.0
  %2093 = vmatmul.mubr.f32.gmra.mxu0 %v1928
  %v2094 = vpop.f32.mrf.mxu0
  %v2095 = vadd.f32 0.0, %v2094
  %v2096 = vpop.f32.mrf.mxu0
  %v2097 = vadd.f32 0.0, %v2096
  %2098 = vmatprep.mubr.f32.mxu0 0.0
  %2099 = vmatmul.mubr.f32.gmra.mxu0 %v1930
  %v2100 = vpop.f32.mrf.mxu0
  %v2101 = vadd.f32 0.0, %v2100
  %v2102 = vpop.f32.mrf.mxu0
  %v2103 = vadd.f32 0.0, %v2102
  %2104 = vmatprep.mubr.f32.mxu0 0.0
  %2105 = vmatmul.mubr.f32.gmra.mxu0 %v1932
  %v2106 = vpop.f32.mrf.mxu0
  %v2107 = vadd.f32 0.0, %v2106
  %v2108 = vpop.f32.mrf.mxu0
  %v2109 = vadd.f32 0.0, %v2108
  %2110 = vmatprep.mubr.f32.mxu0 0.0
  %2111 = vmatmul.mubr.f32.gmra.mxu0 %v1934
  %v2112 = vpop.f32.mrf.mxu0
  %v2113 = vadd.f32 0.0, %v2112
  %v2114 = vpop.f32.mrf.mxu0
  %v2115 = vadd.f32 0.0, %v2114
  %2116 = vmatprep.mubr.f32.mxu0 0.0
  %2117 = vmatmul.mubr.f32.gmra.mxu0 %v1936
  %v2118 = vpop.f32.mrf.mxu0
  %v2119 = vadd.f32 0.0, %v2118
  %v2120 = vpop.f32.mrf.mxu0
  %v2121 = vadd.f32 0.0, %v2120
  %2122 = vmatprep.mubr.f32.mxu0 0.0
  %2123 = vmatmul.mubr.f32.gmra.mxu0 %v1938
  %v2124 = vpop.f32.mrf.mxu0
  %v2125 = vadd.f32 0.0, %v2124
  %v2126 = vpop.f32.mrf.mxu0
  %v2127 = vadd.f32 0.0, %v2126
  %2128 = vmatprep.mubr.f32.mxu0 0.0
  %2129 = vmatmul.mubr.f32.gmra.mxu0 %v1940
  %v2130 = vpop.f32.mrf.mxu0
  %v2131 = vadd.f32 0.0, %v2130
  %v2132 = vpop.f32.mrf.mxu0
  %v2133 = vadd.f32 0.0, %v2132
  %2134 = vmatprep.mubr.f32.mxu0 0.0
  %2135 = vmatmul.mubr.f32.gmra.mxu0 %v1942
  %v2136 = vpop.f32.mrf.mxu0
  %v2137 = vadd.f32 0.0, %v2136
  %v2138 = vpop.f32.mrf.mxu0
  %v2139 = vadd.f32 0.0, %v2138
  %2140 = vmatprep.mubr.f32.mxu0 0.0
  %2141 = vmatmul.mubr.f32.gmra.mxu0 %v1944
  %v2142 = vpop.f32.mrf.mxu0
  %v2143 = vadd.f32 0.0, %v2142
  %v2144 = vpop.f32.mrf.mxu0
  %v2145 = vadd.f32 0.0, %v2144
  %2146 = vmatprep.mubr.f32.mxu0 0.0
  %2147 = vmatmul.mubr.f32.gmra.mxu0 %v1946
  %v2148 = vpop.f32.mrf.mxu0
  %v2149 = vadd.f32 0.0, %v2148
  %v2150 = vpop.f32.mrf.mxu0
  %v2151 = vadd.f32 0.0, %v2150
  %2152 = vmatprep.mubr.f32.mxu0 0.0
  %2153 = vmatmul.mubr.f32.gmra.mxu0 %v1948
  %v2154 = vpop.f32.mrf.mxu0
  %v2155 = vadd.f32 0.0, %v2154
  %v2156 = vpop.f32.mrf.mxu0
  %v2157 = vadd.f32 0.0, %v2156
  %2158 = vmatprep.mubr.f32.mxu0 0.0
  %2159 = vmatmul.mubr.f32.gmra.mxu0 %v1950
  %v2160 = vpop.f32.mrf.mxu0
  %v2161 = vadd.f32 0.0, %v2160
  %v2162 = vpop.f32.mrf.mxu0
  %v2163 = vadd.f32 0.0, %v2162
  %2164 = vmatprep.mubr.f32.mxu0 0.0
  %2165 = vmatmul.mubr.f32.gmra.mxu0 %v1952
  %v2166 = vpop.f32.mrf.mxu0
  %v2167 = vadd.f32 0.0, %v2166
  %v2168 = vpop.f32.mrf.mxu0
  %v2169 = vadd.f32 0.0, %v2168
  %2170 = vmatprep.mubr.f32.mxu0 0.0
  %2171 = vmatmul.mubr.f32.gmra.mxu0 %v1954
  %v2172 = vpop.f32.mrf.mxu0
  %v2173 = vadd.f32 0.0, %v2172
  %v2174 = vpop.f32.mrf.mxu0
  %v2175 = vadd.f32 0.0, %v2174
  %2176 = vmatprep.mubr.f32.mxu0 0.0
  %2177 = vmatmul.mubr.f32.gmra.mxu0 %v1956
  %v2178 = vpop.f32.mrf.mxu0
  %v2179 = vadd.f32 0.0, %v2178
  %v2180 = vpop.f32.mrf.mxu0
  %v2181 = vadd.f32 0.0, %v2180
  %2182 = vmatprep.mubr.f32.mxu0 0.0
  %2183 = vmatmul.mubr.f32.gmra.mxu0 %v1958
  %v2184 = vpop.f32.mrf.mxu0
  %v2185 = vadd.f32 0.0, %v2184
  %v2186 = vpop.f32.mrf.mxu0
  %v2187 = vadd.f32 0.0, %v2186
  %2188 = vmatprep.mubr.f32.mxu0 0.0
  %2189 = vmatmul.mubr.f32.gmra.mxu0 %v1960
  %v2190 = vpop.f32.mrf.mxu0
  %v2191 = vadd.f32 0.0, %v2190
  %v2192 = vpop.f32.mrf.mxu0
  %v2193 = vadd.f32 0.0, %v2192
  %2194 = vmatprep.mubr.f32.mxu0 0.0
  %2195 = vmatmul.mubr.f32.gmra.mxu0 %v1962
  %v2196 = vpop.f32.mrf.mxu0
  %v2197 = vadd.f32 0.0, %v2196
  %v2198 = vpop.f32.mrf.mxu0
  %v2199 = vadd.f32 0.0, %v2198
  %2200 = vmatprep.mubr.f32.mxu0 0.0
  %2201 = vmatmul.mubr.f32.gmra.mxu0 %v1964
  %v2202 = vpop.f32.mrf.mxu0
  %v2203 = vadd.f32 0.0, %v2202
  %v2204 = vpop.f32.mrf.mxu0
  %v2205 = vadd.f32 0.0, %v2204
  %2206 = vmatprep.mubr.f32.mxu0 0.0
  %2207 = vmatmul.mubr.f32.gmra.mxu0 %v1966
  %v2208 = vpop.f32.mrf.mxu0
  %v2209 = vadd.f32 0.0, %v2208
  %v2210 = vpop.f32.mrf.mxu0
  %v2211 = vadd.f32 0.0, %v2210
  %2212 = vmatprep.mubr.f32.mxu0 0.0
  %2213 = vmatmul.mubr.f32.gmra.mxu0 %v1968
  %v2214 = vpop.f32.mrf.mxu0
  %v2215 = vadd.f32 0.0, %v2214
  %v2216 = vpop.f32.mrf.mxu0
  %v2217 = vadd.f32 0.0, %v2216
  %2218 = vmatprep.mubr.f32.mxu0 0.0
  %2219 = vmatmul.mubr.f32.gmra.mxu0 %v1970
  %v2220 = vpop.f32.mrf.mxu0
  %v2221 = vadd.f32 0.0, %v2220
  %v2222 = vpop.f32.mrf.mxu0
  %v2223 = vadd.f32 0.0, %v2222
  %2224 = vmatprep.mubr.f32.mxu0 0.0
  %2225 = vmatmul.mubr.f32.gmra.mxu0 %v1972
  %v2226 = vpop.f32.mrf.mxu0
  %v2227 = vadd.f32 0.0, %v2226
  %v2228 = vpop.f32.mrf.mxu0
  %v2229 = vadd.f32 0.0, %v2228
  %2230 = vdwg.mxu0
  %v2231 = vadd.f32 %v1757, %v2041
  %v2232 = vadd.f32 %v1758, %v2043
  %v2233 = vadd.f32 %v1759, %v2047
  %v2234 = vadd.f32 %v1760, %v2049
  %v2235 = vadd.f32 %v1761, %v2053
  %v2236 = vadd.f32 %v1762, %v2055
  %v2237 = vadd.f32 %v1763, %v2059
  %v2238 = vadd.f32 %v1764, %v2061
  %v2239 = vadd.f32 %v1765, %v2065
  %v2240 = vadd.f32 %v1766, %v2067
  %v2241 = vadd.f32 %v1767, %v2071
  %v2242 = vadd.f32 %v1768, %v2073
  %v2243 = vadd.f32 %v1769, %v2077
  %v2244 = vadd.f32 %v1770, %v2079
  %v2245 = vadd.f32 %v1771, %v2083
  %v2246 = vadd.f32 %v1772, %v2085
  %v2247 = vadd.f32 %v1773, %v2089
  %v2248 = vadd.f32 %v1774, %v2091
  %v2249 = vadd.f32 %v1775, %v2095
  %v2250 = vadd.f32 %v1776, %v2097
  %v2251 = vadd.f32 %v1777, %v2101
  %v2252 = vadd.f32 %v1778, %v2103
  %v2253 = vadd.f32 %v1779, %v2107
  %v2254 = vadd.f32 %v1780, %v2109
  %v2255 = vadd.f32 %v1781, %v2113
  %v2256 = vadd.f32 %v1782, %v2115
  %v2257 = vadd.f32 %v1783, %v2119
  %v2258 = vadd.f32 %v1784, %v2121
  %v2259 = vadd.f32 %v1785, %v2125
  %v2260 = vadd.f32 %v1786, %v2127
  %v2261 = vadd.f32 %v1787, %v2131
  %v2262 = vadd.f32 %v1788, %v2133
  %v2263 = vadd.f32 %v1789, %v2137
  %v2264 = vadd.f32 %v1790, %v2139
  %v2265 = vadd.f32 %v1791, %v2143
  %v2266 = vadd.f32 %v1792, %v2145
  %v2267 = vadd.f32 %v1793, %v2149
  %v2268 = vadd.f32 %v1794, %v2151
  %v2269 = vadd.f32 %v1795, %v2155
  %v2270 = vadd.f32 %v1796, %v2157
  %v2271 = vadd.f32 %v1797, %v2161
  %v2272 = vadd.f32 %v1798, %v2163
  %v2273 = vadd.f32 %v1799, %v2167
  %v2274 = vadd.f32 %v1800, %v2169
  %v2275 = vadd.f32 %v1801, %v2173
  %v2276 = vadd.f32 %v1802, %v2175
  %v2277 = vadd.f32 %v1803, %v2179
  %v2278 = vadd.f32 %v1804, %v2181
  %v2279 = vadd.f32 %v1805, %v2185
  %v2280 = vadd.f32 %v1806, %v2187
  %v2281 = vadd.f32 %v1807, %v2191
  %v2282 = vadd.f32 %v1808, %v2193
  %v2283 = vadd.f32 %v1809, %v2197
  %v2284 = vadd.f32 %v1810, %v2199
  %v2285 = vadd.f32 %v1811, %v2203
  %v2286 = vadd.f32 %v1812, %v2205
  %v2287 = vadd.f32 %v1813, %v2209
  %v2288 = vadd.f32 %v1814, %v2211
  %v2289 = vadd.f32 %v1815, %v2215
  %v2290 = vadd.f32 %v1816, %v2217
  %v2291 = vadd.f32 %v1817, %v2221
  %v2292 = vadd.f32 %v1818, %v2223
  %v2293 = vadd.f32 %v1819, %v2227
  %v2294 = vadd.f32 %v1820, %v2229
  %v2295 = vld [vmem:[%s2] sm:$0x3]
  %v2297 = vlaneseq
  %v2298 = vshrl.u32 %v2297, 7
  %v2299 = vsub.s32 0, %v2298
  %v2300 = vrot.slane %v2295, %v2299
  %v2301 = vlaneseq
  %v2302 = vshrl.u32 %v2301, 7
  %v2303 = vsub.s32 1, %v2302
  %v2304 = vrot.slane %v2295, %v2303
  %v2307 = vadd.f32 %v2231, %v2300
  %v2308 = vadd.f32 %v2232, %v2304
  %v2309 = vadd.f32 %v2233, %v2300
  %v2310 = vadd.f32 %v2234, %v2304
  %v2311 = vadd.f32 %v2235, %v2300
  %v2312 = vadd.f32 %v2236, %v2304
  %v2313 = vadd.f32 %v2237, %v2300
  %v2314 = vadd.f32 %v2238, %v2304
  %v2315 = vadd.f32 %v2239, %v2300
  %v2316 = vadd.f32 %v2240, %v2304
  %v2317 = vadd.f32 %v2241, %v2300
  %v2318 = vadd.f32 %v2242, %v2304
  %v2319 = vadd.f32 %v2243, %v2300
  %v2320 = vadd.f32 %v2244, %v2304
  %v2321 = vadd.f32 %v2245, %v2300
  %v2322 = vadd.f32 %v2246, %v2304
  %v2323 = vadd.f32 %v2247, %v2300
  %v2324 = vadd.f32 %v2248, %v2304
  %v2325 = vadd.f32 %v2249, %v2300
  %v2326 = vadd.f32 %v2250, %v2304
  %v2327 = vadd.f32 %v2251, %v2300
  %v2328 = vadd.f32 %v2252, %v2304
  %v2329 = vadd.f32 %v2253, %v2300
  %v2330 = vadd.f32 %v2254, %v2304
  %v2331 = vadd.f32 %v2255, %v2300
  %v2332 = vadd.f32 %v2256, %v2304
  %v2333 = vadd.f32 %v2257, %v2300
  %v2334 = vadd.f32 %v2258, %v2304
  %v2335 = vadd.f32 %v2259, %v2300
  %v2336 = vadd.f32 %v2260, %v2304
  %v2337 = vadd.f32 %v2261, %v2300
  %v2338 = vadd.f32 %v2262, %v2304
  %v2339 = vadd.f32 %v2263, %v2300
  %v2340 = vadd.f32 %v2264, %v2304
  %v2341 = vadd.f32 %v2265, %v2300
  %v2342 = vadd.f32 %v2266, %v2304
  %v2343 = vadd.f32 %v2267, %v2300
  %v2344 = vadd.f32 %v2268, %v2304
  %v2345 = vadd.f32 %v2269, %v2300
  %v2346 = vadd.f32 %v2270, %v2304
  %v2347 = vadd.f32 %v2271, %v2300
  %v2348 = vadd.f32 %v2272, %v2304
  %v2349 = vadd.f32 %v2273, %v2300
  %v2350 = vadd.f32 %v2274, %v2304
  %v2351 = vadd.f32 %v2275, %v2300
  %v2352 = vadd.f32 %v2276, %v2304
  %v2353 = vadd.f32 %v2277, %v2300
  %v2354 = vadd.f32 %v2278, %v2304
  %v2355 = vadd.f32 %v2279, %v2300
  %v2356 = vadd.f32 %v2280, %v2304
  %v2357 = vadd.f32 %v2281, %v2300
  %v2358 = vadd.f32 %v2282, %v2304
  %v2359 = vadd.f32 %v2283, %v2300
  %v2360 = vadd.f32 %v2284, %v2304
  %v2361 = vadd.f32 %v2285, %v2300
  %v2362 = vadd.f32 %v2286, %v2304
  %v2363 = vadd.f32 %v2287, %v2300
  %v2364 = vadd.f32 %v2288, %v2304
  %v2365 = vadd.f32 %v2289, %v2300
  %v2366 = vadd.f32 %v2290, %v2304
  %v2367 = vadd.f32 %v2291, %v2300
  %v2368 = vadd.f32 %v2292, %v2304
  %v2369 = vadd.f32 %v2293, %v2300
  %v2370 = vadd.f32 %v2294, %v2304
  %v2371 = vtanh.pop %v2307
  %v2372 = vtanh.pop %v2308
  %v2373 = vtanh.pop %v2309
  %v2374 = vtanh.pop %v2310
  %v2375 = vtanh.pop %v2311
  %v2376 = vtanh.pop %v2312
  %v2377 = vtanh.pop %v2313
  %v2378 = vtanh.pop %v2314
  %v2379 = vtanh.pop %v2315
  %v2380 = vtanh.pop %v2316
  %v2381 = vtanh.pop %v2317
  %v2382 = vtanh.pop %v2318
  %v2383 = vtanh.pop %v2319
  %v2384 = vtanh.pop %v2320
  %v2385 = vtanh.pop %v2321
  %v2386 = vtanh.pop %v2322
  %v2387 = vtanh.pop %v2323
  %v2388 = vtanh.pop %v2324
  %v2389 = vtanh.pop %v2325
  %v2390 = vtanh.pop %v2326
  %v2391 = vtanh.pop %v2327
  %v2392 = vtanh.pop %v2328
  %v2393 = vtanh.pop %v2329
  %v2394 = vtanh.pop %v2330
  %v2395 = vtanh.pop %v2331
  %v2396 = vtanh.pop %v2332
  %v2397 = vtanh.pop %v2333
  %v2398 = vtanh.pop %v2334
  %v2399 = vtanh.pop %v2335
  %v2400 = vtanh.pop %v2336
  %v2401 = vtanh.pop %v2337
  %v2402 = vtanh.pop %v2338
  %v2403 = vtanh.pop %v2339
  %v2404 = vtanh.pop %v2340
  %v2405 = vtanh.pop %v2341
  %v2406 = vtanh.pop %v2342
  %v2407 = vtanh.pop %v2343
  %v2408 = vtanh.pop %v2344
  %v2409 = vtanh.pop %v2345
  %v2410 = vtanh.pop %v2346
  %v2411 = vtanh.pop %v2347
  %v2412 = vtanh.pop %v2348
  %v2413 = vtanh.pop %v2349
  %v2414 = vtanh.pop %v2350
  %v2415 = vtanh.pop %v2351
  %v2416 = vtanh.pop %v2352
  %v2417 = vtanh.pop %v2353
  %v2418 = vtanh.pop %v2354
  %v2419 = vtanh.pop %v2355
  %v2420 = vtanh.pop %v2356
  %v2421 = vtanh.pop %v2357
  %v2422 = vtanh.pop %v2358
  %v2423 = vtanh.pop %v2359
  %v2424 = vtanh.pop %v2360
  %v2425 = vtanh.pop %v2361
  %v2426 = vtanh.pop %v2362
  %v2427 = vtanh.pop %v2363
  %v2428 = vtanh.pop %v2364
  %v2429 = vtanh.pop %v2365
  %v2430 = vtanh.pop %v2366
  %v2431 = vtanh.pop %v2367
  %v2432 = vtanh.pop %v2368
  %v2433 = vtanh.pop %v2369
  %v2434 = vtanh.pop %v2370
  %v2435 = vld [vmem:[%s3] sm:$0xff]
  %v2436 = vld [vmem:[%s3 + $0x8] sm:$0xff]
  %v2437 = vld [vmem:[%s3 + $0x10] sm:$0xff]
  %v2438 = vld [vmem:[%s3 + $0x18] sm:$0xff]
  %v2439 = vld [vmem:[%s3 + $0x20] sm:$0xff]
  %v2440 = vld [vmem:[%s3 + $0x28] sm:$0xff]
  %v2441 = vld [vmem:[%s3 + $0x30] sm:$0xff]
  %v2442 = vld [vmem:[%s3 + $0x38] sm:$0xff]
  %v2443 = vld [vmem:[%s3 + $0x40] sm:$0xff]
  %v2444 = vld [vmem:[%s3 + $0x48] sm:$0xff]
  %v2445 = vld [vmem:[%s3 + $0x50] sm:$0xff]
  %v2446 = vld [vmem:[%s3 + $0x58] sm:$0xff]
  %v2447 = vld [vmem:[%s3 + $0x60] sm:$0xff]
  %v2448 = vld [vmem:[%s3 + $0x68] sm:$0xff]
  %v2449 = vld [vmem:[%s3 + $0x70] sm:$0xff]
  %v2450 = vld [vmem:[%s3 + $0x78] sm:$0xff]
  %v2451 = vld [vmem:[%s3 + $0x80] sm:$0xff]
  %v2452 = vld [vmem:[%s3 + $0x88] sm:$0xff]
  %v2453 = vld [vmem:[%s3 + $0x90] sm:$0xff]
  %v2454 = vld [vmem:[%s3 + $0x98] sm:$0xff]
  %v2455 = vld [vmem:[%s3 + $0xa0] sm:$0xff]
  %v2456 = vld [vmem:[%s3 + $0xa8] sm:$0xff]
  %v2457 = vld [vmem:[%s3 + $0xb0] sm:$0xff]
  %v2458 = vld [vmem:[%s3 + $0xb8] sm:$0xff]
  %v2459 = vld [vmem:[%s3 + $0xc0] sm:$0xff]
  %v2460 = vld [vmem:[%s3 + $0xc8] sm:$0xff]
  %v2461 = vld [vmem:[%s3 + $0xd0] sm:$0xff]
  %v2462 = vld [vmem:[%s3 + $0xd8] sm:$0xff]
  %vm2463 = vcmask 1014784
  %v2465 = vsel %vm2463, %v2436, 0
  %v2468 = vsel %vm2463, %v2438, 0
  %v2471 = vsel %vm2463, %v2440, 0
  %v2474 = vsel %vm2463, %v2442, 0
  %v2477 = vsel %vm2463, %v2444, 0
  %v2480 = vsel %vm2463, %v2446, 0
  %v2483 = vsel %vm2463, %v2448, 0
  %v2486 = vsel %vm2463, %v2450, 0
  %v2489 = vsel %vm2463, %v2452, 0
  %v2492 = vsel %vm2463, %v2454, 0
  %v2495 = vsel %vm2463, %v2456, 0
  %v2498 = vsel %vm2463, %v2458, 0
  %v2501 = vsel %vm2463, %v2460, 0
  %v2504 = vsel %vm2463, %v2462, 0
  %v2507 = vsel %vm1846, %v2433, 0
  %v2510 = vsel %vm1846, %v2434, 0
  %2512 = vmatprep.subr.mxu0 %v2402
  %2513 = vmatpush1.msra.mxu0 %v2401
  %2514 = vmatprep.subr.mxu0 %v2400
  %2515 = vmatpush1.msra.mxu0 %v2399
  %2516 = vmatprep.subr.mxu0 %v2398
  %2517 = vmatpush1.msra.mxu0 %v2397
  %2518 = vmatprep.subr.mxu0 %v2396
  %2519 = vmatpush1.msra.mxu0 %v2395
  %2520 = vmatprep.subr.mxu0 %v2394
  %2521 = vmatpush1.msra.mxu0 %v2393
  %2522 = vmatprep.subr.mxu0 %v2392
  %2523 = vmatpush1.msra.mxu0 %v2391
  %2524 = vmatprep.subr.mxu0 %v2390
  %2525 = vmatpush1.msra.mxu0 %v2389
  %2526 = vmatprep.subr.mxu0 %v2388
  %2527 = vmatpush1.msra.mxu0 %v2387
  %2528 = vmatprep.subr.mxu0 %v2386
  %2529 = vmatpush1.msra.mxu0 %v2385
  %2530 = vmatprep.subr.mxu0 %v2384
  %2531 = vmatpush1.msra.mxu0 %v2383
  %2532 = vmatprep.subr.mxu0 %v2382
  %2533 = vmatpush1.msra.mxu0 %v2381
  %2534 = vmatprep.subr.mxu0 %v2380
  %2535 = vmatpush1.msra.mxu0 %v2379
  %2536 = vmatprep.subr.mxu0 %v2378
  %2537 = vmatpush1.msra.mxu0 %v2377
  %2538 = vmatprep.subr.mxu0 %v2376
  %2539 = vmatpush1.msra.mxu0 %v2375
  %2540 = vmatprep.subr.mxu0 %v2374
  %2541 = vmatpush1.msra.mxu0 %v2373
  %2542 = vmatprep.subr.mxu0 %v2372
  %2543 = vmatpush1.msra.mxu0 %v2371
  %2544 = vmatprep.subr.mxu0 %v2510
  %2545 = vmatpush2.msra.mxu0 %v2507
  %2546 = vmatprep.subr.mxu0 %v2432
  %2547 = vmatpush2.msra.mxu0 %v2431
  %2548 = vmatprep.subr.mxu0 %v2430
  %2549 = vmatpush2.msra.mxu0 %v2429
  %2550 = vmatprep.subr.mxu0 %v2428
  %2551 = vmatpush2.msra.mxu0 %v2427
  %2552 = vmatprep.subr.mxu0 %v2426
  %2553 = vmatpush2.msra.mxu0 %v2425
  %2554 = vmatprep.subr.mxu0 %v2424
  %2555 = vmatpush2.msra.mxu0 %v2423
  %2556 = vmatprep.subr.mxu0 %v2422
  %2557 = vmatpush2.msra.mxu0 %v2421
  %2558 = vmatprep.subr.mxu0 %v2420
  %2559 = vmatpush2.msra.mxu0 %v2419
  %2560 = vmatprep.subr.mxu0 %v2418
  %2561 = vmatpush2.msra.mxu0 %v2417
  %2562 = vmatprep.subr.mxu0 %v2416
  %2563 = vmatpush2.msra.mxu0 %v2415
  %2564 = vmatprep.subr.mxu0 %v2414
  %2565 = vmatpush2.msra.mxu0 %v2413
  %2566 = vmatprep.subr.mxu0 %v2412
  %2567 = vmatpush2.msra.mxu0 %v2411
  %2568 = vmatprep.subr.mxu0 %v2410
  %2569 = vmatpush2.msra.mxu0 %v2409
  %2570 = vmatprep.subr.mxu0 %v2408
  %2571 = vmatpush2.msra.mxu0 %v2407
  %2572 = vmatprep.subr.mxu0 %v2406
  %2573 = vmatpush2.msra.mxu0 %v2405
  %2574 = vmatprep.subr.mxu0 %v2404
  %2575 = vmatpush2.msra.mxu0 %v2403
  %2576 = vmatprep.mubr.f32.mxu0 %v2465
  %2577 = vmatmul.mubr.f32.gmra.mxu0 %v2435
  %v2578 = vpop.f32.mrf.mxu0
  %v2579 = vadd.f32 0.0, %v2578
  %v2580 = vpop.f32.mrf.mxu0
  %v2581 = vadd.f32 0.0, %v2580
  %2582 = vmatprep.mubr.f32.mxu0 %v2468
  %2583 = vmatmul.mubr.f32.gmra.mxu0 %v2437
  %v2584 = vpop.f32.mrf.mxu0
  %v2585 = vadd.f32 0.0, %v2584
  %v2586 = vpop.f32.mrf.mxu0
  %v2587 = vadd.f32 0.0, %v2586
  %2588 = vmatprep.mubr.f32.mxu0 %v2471
  %2589 = vmatmul.mubr.f32.gmra.mxu0 %v2439
  %v2590 = vpop.f32.mrf.mxu0
  %v2591 = vadd.f32 0.0, %v2590
  %v2592 = vpop.f32.mrf.mxu0
  %v2593 = vadd.f32 0.0, %v2592
  %2594 = vmatprep.mubr.f32.mxu0 %v2474
  %2595 = vmatmul.mubr.f32.gmra.mxu0 %v2441
  %v2596 = vpop.f32.mrf.mxu0
  %v2597 = vadd.f32 0.0, %v2596
  %v2598 = vpop.f32.mrf.mxu0
  %v2599 = vadd.f32 0.0, %v2598
  %2600 = vmatprep.mubr.f32.mxu0 %v2477
  %2601 = vmatmul.mubr.f32.gmra.mxu0 %v2443
  %v2602 = vpop.f32.mrf.mxu0
  %v2603 = vadd.f32 0.0, %v2602
  %v2604 = vpop.f32.mrf.mxu0
  %v2605 = vadd.f32 0.0, %v2604
  %2606 = vmatprep.mubr.f32.mxu0 %v2480
  %2607 = vmatmul.mubr.f32.gmra.mxu0 %v2445
  %v2608 = vpop.f32.mrf.mxu0
  %v2609 = vadd.f32 0.0, %v2608
  %v2610 = vpop.f32.mrf.mxu0
  %v2611 = vadd.f32 0.0, %v2610
  %2612 = vmatprep.mubr.f32.mxu0 %v2483
  %2613 = vmatmul.mubr.f32.gmra.mxu0 %v2447
  %v2614 = vpop.f32.mrf.mxu0
  %v2615 = vadd.f32 0.0, %v2614
  %v2616 = vpop.f32.mrf.mxu0
  %v2617 = vadd.f32 0.0, %v2616
  %2618 = vmatprep.mubr.f32.mxu0 %v2486
  %2619 = vmatmul.mubr.f32.gmra.mxu0 %v2449
  %v2620 = vpop.f32.mrf.mxu0
  %v2621 = vadd.f32 0.0, %v2620
  %v2622 = vpop.f32.mrf.mxu0
  %v2623 = vadd.f32 0.0, %v2622
  %2624 = vmatprep.mubr.f32.mxu0 %v2489
  %2625 = vmatmul.mubr.f32.gmra.mxu0 %v2451
  %v2626 = vpop.f32.mrf.mxu0
  %v2627 = vadd.f32 0.0, %v2626
  %v2628 = vpop.f32.mrf.mxu0
  %v2629 = vadd.f32 0.0, %v2628
  %2630 = vmatprep.mubr.f32.mxu0 %v2492
  %2631 = vmatmul.mubr.f32.gmra.mxu0 %v2453
  %v2632 = vpop.f32.mrf.mxu0
  %v2633 = vadd.f32 0.0, %v2632
  %v2634 = vpop.f32.mrf.mxu0
  %v2635 = vadd.f32 0.0, %v2634
  %2636 = vmatprep.mubr.f32.mxu0 %v2495
  %2637 = vmatmul.mubr.f32.gmra.mxu0 %v2455
  %v2638 = vpop.f32.mrf.mxu0
  %v2639 = vadd.f32 0.0, %v2638
  %v2640 = vpop.f32.mrf.mxu0
  %v2641 = vadd.f32 0.0, %v2640
  %2642 = vmatprep.mubr.f32.mxu0 %v2498
  %2643 = vmatmul.mubr.f32.gmra.mxu0 %v2457
  %v2644 = vpop.f32.mrf.mxu0
  %v2645 = vadd.f32 0.0, %v2644
  %v2646 = vpop.f32.mrf.mxu0
  %v2647 = vadd.f32 0.0, %v2646
  %2648 = vmatprep.mubr.f32.mxu0 %v2501
  %2649 = vmatmul.mubr.f32.gmra.mxu0 %v2459
  %v2650 = vpop.f32.mrf.mxu0
  %v2651 = vadd.f32 0.0, %v2650
  %v2652 = vpop.f32.mrf.mxu0
  %v2653 = vadd.f32 0.0, %v2652
  %2654 = vmatprep.mubr.f32.mxu0 %v2504
  %2655 = vmatmul.mubr.f32.gmra.mxu0 %v2461
  %v2656 = vpop.f32.mrf.mxu0
  %v2657 = vadd.f32 0.0, %v2656
  %v2658 = vpop.f32.mrf.mxu0
  %v2659 = vadd.f32 0.0, %v2658
  %2660 = vdwg.mxu0
  %v2661 = vld [vmem:[%s4] sm:$0xff]
  %v2662 = vld [vmem:[%s4 + $0x8] sm:$0xff]
  %v2663 = vld [vmem:[%s4 + $0x10] sm:$0xff]
  %v2664 = vld [vmem:[%s4 + $0x18] sm:$0xff]
  %v2665 = vld [vmem:[%s4 + $0x20] sm:$0xff]
  %v2666 = vld [vmem:[%s4 + $0x28] sm:$0xff]
  %v2667 = vld [vmem:[%s4 + $0x30] sm:$0xff]
  %v2668 = vld [vmem:[%s4 + $0x38] sm:$0xff]
  %v2669 = vld [vmem:[%s4 + $0x40] sm:$0xff]
  %v2670 = vld [vmem:[%s4 + $0x48] sm:$0xff]
  %v2671 = vld [vmem:[%s4 + $0x50] sm:$0xff]
  %v2672 = vld [vmem:[%s4 + $0x58] sm:$0xff]
  %v2673 = vld [vmem:[%s4 + $0x60] sm:$0xff]
  %v2674 = vld [vmem:[%s4 + $0x68] sm:$0xff]
  %v2675 = vld [vmem:[%s4 + $0x70] sm:$0xff]
  %v2676 = vld [vmem:[%s4 + $0x78] sm:$0xff]
  %v2677 = vld [vmem:[%s4 + $0x80] sm:$0xff]
  %v2678 = vld [vmem:[%s4 + $0x88] sm:$0xff]
  %v2679 = vld [vmem:[%s4 + $0x90] sm:$0xff]
  %v2680 = vld [vmem:[%s4 + $0x98] sm:$0xff]
  %v2681 = vld [vmem:[%s4 + $0xa0] sm:$0xff]
  %vm2682 = vcmask 326656
  %v2684 = vsel %vm2682, %v2581, 0
  %v2687 = vsel %vm2682, %v2587, 0
  %v2690 = vsel %vm2682, %v2593, 0
  %v2693 = vsel %vm2682, %v2599, 0
  %v2696 = vsel %vm2682, %v2605, 0
  %v2699 = vsel %vm2682, %v2611, 0
  %v2702 = vsel %vm2682, %v2617, 0
  %v2705 = vsel %vm2682, %v2623, 0
  %v2708 = vsel %vm2682, %v2629, 0
  %v2711 = vsel %vm2682, %v2635, 0
  %v2714 = vsel %vm2682, %v2641, 0
  %v2717 = vsel %vm2682, %v2647, 0
  %v2720 = vsel %vm2682, %v2653, 0
  %v2723 = vsel %vm2682, %v2659, 0
  %2725 = vmatprep.subr.mxu0 0.0
  %2726 = vmatpush1.msra.mxu0 %v2676
  %2727 = vmatprep.subr.mxu0 0.0
  %2728 = vmatpush1.msra.mxu0 %v2675
  %2729 = vmatprep.subr.mxu0 0.0
  %2730 = vmatpush1.msra.mxu0 %v2674
  %2731 = vmatprep.subr.mxu0 0.0
  %2732 = vmatpush1.msra.mxu0 %v2673
  %2733 = vmatprep.subr.mxu0 0.0
  %2734 = vmatpush1.msra.mxu0 %v2672
  %2735 = vmatprep.subr.mxu0 0.0
  %2736 = vmatpush1.msra.mxu0 %v2671
  %2737 = vmatprep.subr.mxu0 0.0
  %2738 = vmatpush1.msra.mxu0 %v2670
  %2739 = vmatprep.subr.mxu0 0.0
  %2740 = vmatpush1.msra.mxu0 %v2669
  %2741 = vmatprep.subr.mxu0 0.0
  %2742 = vmatpush1.msra.mxu0 %v2668
  %2743 = vmatprep.subr.mxu0 0.0
  %2744 = vmatpush1.msra.mxu0 %v2667
  %2745 = vmatprep.subr.mxu0 0.0
  %2746 = vmatpush1.msra.mxu0 %v2666
  %2747 = vmatprep.subr.mxu0 0.0
  %2748 = vmatpush1.msra.mxu0 %v2665
  %2749 = vmatprep.subr.mxu0 0.0
  %2750 = vmatpush1.msra.mxu0 %v2664
  %2751 = vmatprep.subr.mxu0 0.0
  %2752 = vmatpush1.msra.mxu0 %v2663
  %2753 = vmatprep.subr.mxu0 0.0
  %2754 = vmatpush1.msra.mxu0 %v2662
  %2755 = vmatprep.subr.mxu0 0.0
  %2756 = vmatpush1.msra.mxu0 %v2661
  %2757 = vmatprep.subr.mxu0 0.0
  %2758 = vmatpush2.msra.mxu0 0.0
  %2759 = vmatprep.subr.mxu0 0.0
  %2760 = vmatpush2.msra.mxu0 0.0
  %2761 = vmatprep.subr.mxu0 0.0
  %2762 = vmatpush2.msra.mxu0 0.0
  %2763 = vmatprep.subr.mxu0 0.0
  %2764 = vmatpush2.msra.mxu0 0.0
  %2765 = vmatprep.subr.mxu0 0.0
  %2766 = vmatpush2.msra.mxu0 0.0
  %2767 = vmatprep.subr.mxu0 0.0
  %2768 = vmatpush2.msra.mxu0 0.0
  %2769 = vmatprep.subr.mxu0 0.0
  %2770 = vmatpush2.msra.mxu0 0.0
  %2771 = vmatprep.subr.mxu0 0.0
  %2772 = vmatpush2.msra.mxu0 0.0
  %2773 = vmatprep.subr.mxu0 0.0
  %2774 = vmatpush2.msra.mxu0 0.0
  %2775 = vmatprep.subr.mxu0 0.0
  %2776 = vmatpush2.msra.mxu0 0.0
  %2777 = vmatprep.subr.mxu0 0.0
  %2778 = vmatpush2.msra.mxu0 0.0
  %2779 = vmatprep.subr.mxu0 0.0
  %2780 = vmatpush2.msra.mxu0 %v2681
  %2781 = vmatprep.subr.mxu0 0.0
  %2782 = vmatpush2.msra.mxu0 %v2680
  %2783 = vmatprep.subr.mxu0 0.0
  %2784 = vmatpush2.msra.mxu0 %v2679
  %2785 = vmatprep.subr.mxu0 0.0
  %2786 = vmatpush2.msra.mxu0 %v2678
  %2787 = vmatprep.subr.mxu0 0.0
  %2788 = vmatpush2.msra.mxu0 %v2677
  %2789 = vmatprep.mubr.f32.mxu0 %v2684
  %2790 = vmatmul.mubr.f32.gmra.mxu0 %v2579
  %v2791 = vpop.f32.mrf.mxu0
  %v2792 = vadd.f32 0.0, %v2791
  %v2793 = vpop.f32.mrf.mxu0
  %2794 = vmatprep.mubr.f32.mxu0 %v2687
  %2795 = vmatmul.mubr.f32.gmra.mxu0 %v2585
  %v2796 = vpop.f32.mrf.mxu0
  %v2797 = vadd.f32 0.0, %v2796
  %v2798 = vpop.f32.mrf.mxu0
  %2799 = vmatprep.mubr.f32.mxu0 %v2690
  %2800 = vmatmul.mubr.f32.gmra.mxu0 %v2591
  %v2801 = vpop.f32.mrf.mxu0
  %v2802 = vadd.f32 0.0, %v2801
  %v2803 = vpop.f32.mrf.mxu0
  %2804 = vmatprep.mubr.f32.mxu0 %v2693
  %2805 = vmatmul.mubr.f32.gmra.mxu0 %v2597
  %v2806 = vpop.f32.mrf.mxu0
  %v2807 = vadd.f32 0.0, %v2806
  %v2808 = vpop.f32.mrf.mxu0
  %2809 = vmatprep.mubr.f32.mxu0 %v2696
  %2810 = vmatmul.mubr.f32.gmra.mxu0 %v2603
  %v2811 = vpop.f32.mrf.mxu0
  %v2812 = vadd.f32 0.0, %v2811
  %v2813 = vpop.f32.mrf.mxu0
  %2814 = vmatprep.mubr.f32.mxu0 %v2699
  %2815 = vmatmul.mubr.f32.gmra.mxu0 %v2609
  %v2816 = vpop.f32.mrf.mxu0
  %v2817 = vadd.f32 0.0, %v2816
  %v2818 = vpop.f32.mrf.mxu0
  %2819 = vmatprep.mubr.f32.mxu0 %v2702
  %2820 = vmatmul.mubr.f32.gmra.mxu0 %v2615
  %v2821 = vpop.f32.mrf.mxu0
  %v2822 = vadd.f32 0.0, %v2821
  %v2823 = vpop.f32.mrf.mxu0
  %2824 = vmatprep.mubr.f32.mxu0 %v2705
  %2825 = vmatmul.mubr.f32.gmra.mxu0 %v2621
  %v2826 = vpop.f32.mrf.mxu0
  %v2827 = vadd.f32 0.0, %v2826
  %v2828 = vpop.f32.mrf.mxu0
  %2829 = vmatprep.mubr.f32.mxu0 %v2708
  %2830 = vmatmul.mubr.f32.gmra.mxu0 %v2627
  %v2831 = vpop.f32.mrf.mxu0
  %v2832 = vadd.f32 0.0, %v2831
  %v2833 = vpop.f32.mrf.mxu0
  %2834 = vmatprep.mubr.f32.mxu0 %v2711
  %2835 = vmatmul.mubr.f32.gmra.mxu0 %v2633
  %v2836 = vpop.f32.mrf.mxu0
  %v2837 = vadd.f32 0.0, %v2836
  %v2838 = vpop.f32.mrf.mxu0
  %2839 = vmatprep.mubr.f32.mxu0 %v2714
  %2840 = vmatmul.mubr.f32.gmra.mxu0 %v2639
  %v2841 = vpop.f32.mrf.mxu0
  %v2842 = vadd.f32 0.0, %v2841
  %v2843 = vpop.f32.mrf.mxu0
  %2844 = vmatprep.mubr.f32.mxu0 %v2717
  %2845 = vmatmul.mubr.f32.gmra.mxu0 %v2645
  %v2846 = vpop.f32.mrf.mxu0
  %v2847 = vadd.f32 0.0, %v2846
  %v2848 = vpop.f32.mrf.mxu0
  %2849 = vmatprep.mubr.f32.mxu0 %v2720
  %2850 = vmatmul.mubr.f32.gmra.mxu0 %v2651
  %v2851 = vpop.f32.mrf.mxu0
  %v2852 = vadd.f32 0.0, %v2851
  %v2853 = vpop.f32.mrf.mxu0
  %2854 = vmatprep.mubr.f32.mxu0 %v2723
  %2855 = vmatmul.mubr.f32.gmra.mxu0 %v2657
  %v2856 = vpop.f32.mrf.mxu0
  %v2857 = vadd.f32 0.0, %v2856
  %v2858 = vpop.f32.mrf.mxu0
  %2859 = vdwg.mxu0
  %v2860 = vld [vmem:[%s5] sm:$0xff]
  %v2861 = vld [vmem:[%s5 + $0x8] sm:$0xff]
  %v2862 = vld [vmem:[%s5 + $0x10] sm:$0xff]
  %v2863 = vld [vmem:[%s5 + $0x18] sm:$0xff]
  %v2864 = vld [vmem:[%s5 + $0x20] sm:$0xff]
  %v2865 = vld [vmem:[%s5 + $0x28] sm:$0xff]
  %v2866 = vld [vmem:[%s5 + $0x30] sm:$0xff]
  %v2867 = vld [vmem:[%s5 + $0x38] sm:$0xff]
  %v2868 = vld [vmem:[%s5 + $0x40] sm:$0xff]
  %v2869 = vld [vmem:[%s5 + $0x48] sm:$0xff]
  %v2870 = vld [vmem:[%s5 + $0x50] sm:$0xff]
  %v2871 = vld [vmem:[%s5 + $0x58] sm:$0xff]
  %v2872 = vld [vmem:[%s5 + $0x60] sm:$0xff]
  %v2873 = vld [vmem:[%s5 + $0x68] sm:$0xff]
  %v2874 = vld [vmem:[%s5 + $0x70] sm:$0xff]
  %v2875 = vld [vmem:[%s5 + $0x78] sm:$0xff]
  %v2876 = vld [vmem:[%s5 + $0x80] sm:$0xff]
  %v2877 = vld [vmem:[%s5 + $0x88] sm:$0xff]
  %v2878 = vld [vmem:[%s5 + $0x90] sm:$0xff]
  %v2879 = vld [vmem:[%s5 + $0x98] sm:$0xff]
  %v2880 = vld [vmem:[%s5 + $0xa0] sm:$0xf]
  %v2881 = vld [vmem:[%s5 + $0xa8] sm:$0xf]
  %s2882 = scalar_lea.vmem %s5, 176
  %v2883 = vld [vmem:[%s2882] sm:$0xff]
  %v2884 = vld [vmem:[%s2882 + $0x8] sm:$0xff]
  %v2885 = vld [vmem:[%s2882 + $0x10] sm:$0xff]
  %v2886 = vld [vmem:[%s2882 + $0x18] sm:$0xff]
  %v2887 = vld [vmem:[%s2882 + $0x20] sm:$0xff]
  %v2888 = vld [vmem:[%s2882 + $0x28] sm:$0xff]
  %v2889 = vld [vmem:[%s2882 + $0x30] sm:$0xff]
  %v2890 = vld [vmem:[%s2882 + $0x38] sm:$0xff]
  %v2891 = vld [vmem:[%s2882 + $0x40] sm:$0xff]
  %v2892 = vld [vmem:[%s2882 + $0x48] sm:$0xff]
  %v2893 = vld [vmem:[%s2882 + $0x50] sm:$0xff]
  %v2894 = vld [vmem:[%s2882 + $0x58] sm:$0xff]
  %v2895 = vld [vmem:[%s2882 + $0x60] sm:$0xff]
  %v2896 = vld [vmem:[%s2882 + $0x68] sm:$0xff]
  %v2897 = vld [vmem:[%s2882 + $0x70] sm:$0xff]
  %v2898 = vld [vmem:[%s2882 + $0x78] sm:$0xff]
  %v2899 = vld [vmem:[%s2882 + $0x80] sm:$0xff]
  %v2900 = vld [vmem:[%s2882 + $0x88] sm:$0xff]
  %v2901 = vld [vmem:[%s2882 + $0x90] sm:$0xff]
  %v2902 = vld [vmem:[%s2882 + $0x98] sm:$0xff]
  %v2903 = vld [vmem:[%s2882 + $0xa0] sm:$0xf]
  %v2904 = vld [vmem:[%s2882 + $0xa8] sm:$0xf]
  %v2919 = vrot.slane %v2792, 1
  %v2920 = vrot.slane %v2797, 1
  %v2921 = vsel %vm166, %v2919, %v2920
  %v2922 = vrot.slane %v2802, 1
  %v2923 = vsel %vm166, %v2920, %v2922
  %v2924 = vrot.slane %v2807, 1
  %v2925 = vsel %vm166, %v2922, %v2924
  %v2926 = vrot.slane %v2812, 1
  %v2927 = vsel %vm166, %v2924, %v2926
  %v2928 = vrot.slane %v2817, 1
  %v2929 = vsel %vm166, %v2926, %v2928
  %v2930 = vrot.slane %v2822, 1
  %v2931 = vsel %vm166, %v2928, %v2930
  %v2932 = vrot.slane %v2827, 1
  %v2933 = vsel %vm166, %v2930, %v2932
  %v2934 = vrot.slane %v2832, 1
  %v2935 = vsel %vm166, %v2932, %v2934
  %v2936 = vrot.slane %v2837, 1
  %v2937 = vsel %vm166, %v2934, %v2936
  %v2938 = vrot.slane %v2842, 1
  %v2939 = vsel %vm166, %v2936, %v2938
  %v2940 = vrot.slane %v2847, 1
  %v2941 = vsel %vm166, %v2938, %v2940
  %v2942 = vrot.slane %v2852, 1
  %v2943 = vsel %vm166, %v2940, %v2942
  %v2944 = vrot.slane %v2857, 1
  %v2945 = vsel %vm166, %v2942, %v2944
  %vm2946 = vcmask 687104
  %v2947 = vsel %vm2946, %v2921, 0
  %v2949 = vsel %vm2946, %v2923, 0
  %v2951 = vsel %vm2946, %v2925, 0
  %v2953 = vsel %vm2946, %v2927, 0
  %v2955 = vsel %vm2946, %v2929, 0
  %v2957 = vsel %vm2946, %v2931, 0
  %v2959 = vsel %vm2946, %v2933, 0
  %v2961 = vsel %vm2946, %v2935, 0
  %v2963 = vsel %vm2946, %v2937, 0
  %v2965 = vsel %vm2946, %v2939, 0
  %v2967 = vsel %vm2946, %v2941, 0
  %v2969 = vsel %vm2946, %v2943, 0
  %v2971 = vsel %vm2946, %v2945, 0
  %v2973 = vsel %vm2946, %v2944, 0
  %v2976 = vsel %vm1846, %v2903, 0
  %v2979 = vsel %vm1846, %v2904, 0
  %2981 = vmatprep.subr.mxu0 0.0
  %2982 = vmatpush1.msra.mxu0 0.0
  %2983 = vmatprep.subr.mxu0 0.0
  %2984 = vmatpush1.msra.mxu0 0.0
  %2985 = vmatprep.subr.mxu0 0.0
  %2986 = vmatpush1.msra.mxu0 0.0
  %2987 = vmatprep.subr.mxu0 0.0
  %2988 = vmatpush1.msra.mxu0 0.0
  %2989 = vmatprep.subr.mxu0 0.0
  %2990 = vmatpush1.msra.mxu0 0.0
  %2991 = vmatprep.subr.mxu0 %v2979
  %2992 = vmatpush1.msra.mxu0 %v2976
  %2993 = vmatprep.subr.mxu0 %v2902
  %2994 = vmatpush1.msra.mxu0 %v2901
  %2995 = vmatprep.subr.mxu0 %v2900
  %2996 = vmatpush1.msra.mxu0 %v2899
  %2997 = vmatprep.subr.mxu0 %v2898
  %2998 = vmatpush1.msra.mxu0 %v2897
  %2999 = vmatprep.subr.mxu0 %v2896
  %3000 = vmatpush1.msra.mxu0 %v2895
  %3001 = vmatprep.subr.mxu0 %v2894
  %3002 = vmatpush1.msra.mxu0 %v2893
  %3003 = vmatprep.subr.mxu0 %v2892
  %3004 = vmatpush1.msra.mxu0 %v2891
  %3005 = vmatprep.subr.mxu0 %v2890
  %3006 = vmatpush1.msra.mxu0 %v2889
  %3007 = vmatprep.subr.mxu0 %v2888
  %3008 = vmatpush1.msra.mxu0 %v2887
  %3009 = vmatprep.subr.mxu0 %v2886
  %3010 = vmatpush1.msra.mxu0 %v2885
  %3011 = vmatprep.subr.mxu0 %v2884
  %3012 = vmatpush1.msra.mxu0 %v2883
  %3013 = vmatprep.subr.mxu0 0.0
  %3014 = vmatpush2.msra.mxu0 0.0
  %3015 = vmatprep.subr.mxu0 0.0
  %3016 = vmatpush2.msra.mxu0 0.0
  %3017 = vmatprep.subr.mxu0 0.0
  %3018 = vmatpush2.msra.mxu0 0.0
  %3019 = vmatprep.subr.mxu0 0.0
  %3020 = vmatpush2.msra.mxu0 0.0
  %3021 = vmatprep.subr.mxu0 0.0
  %3022 = vmatpush2.msra.mxu0 0.0
  %3023 = vmatprep.subr.mxu0 0.0
  %3024 = vmatpush2.msra.mxu0 0.0
  %3025 = vmatprep.subr.mxu0 0.0
  %3026 = vmatpush2.msra.mxu0 0.0
  %3027 = vmatprep.subr.mxu0 0.0
  %3028 = vmatpush2.msra.mxu0 0.0
  %3029 = vmatprep.subr.mxu0 0.0
  %3030 = vmatpush2.msra.mxu0 0.0
  %3031 = vmatprep.subr.mxu0 0.0
  %3032 = vmatpush2.msra.mxu0 0.0
  %3033 = vmatprep.subr.mxu0 0.0
  %3034 = vmatpush2.msra.mxu0 0.0
  %3035 = vmatprep.subr.mxu0 0.0
  %3036 = vmatpush2.msra.mxu0 0.0
  %3037 = vmatprep.subr.mxu0 0.0
  %3038 = vmatpush2.msra.mxu0 0.0
  %3039 = vmatprep.subr.mxu0 0.0
  %3040 = vmatpush2.msra.mxu0 0.0
  %3041 = vmatprep.subr.mxu0 0.0
  %3042 = vmatpush2.msra.mxu0 0.0
  %3043 = vmatprep.subr.mxu0 0.0
  %3044 = vmatpush2.msra.mxu0 0.0
  %3045 = vmatprep.mubr.f32.mxu0 0.0
  %3046 = vmatmul.mubr.f32.gmra.mxu0 %v2947
  %v3047 = vpop.f32.mrf.mxu0
  %v3048 = vadd.f32 0.0, %v3047
  %v3049 = vpop.f32.mrf.mxu0
  %v3050 = vadd.f32 0.0, %v3049
  %3051 = vmatprep.mubr.f32.mxu0 0.0
  %3052 = vmatmul.mubr.f32.gmra.mxu0 %v2949
  %v3053 = vpop.f32.mrf.mxu0
  %v3054 = vadd.f32 0.0, %v3053
  %v3055 = vpop.f32.mrf.mxu0
  %v3056 = vadd.f32 0.0, %v3055
  %3057 = vmatprep.mubr.f32.mxu0 0.0
  %3058 = vmatmul.mubr.f32.gmra.mxu0 %v2951
  %v3059 = vpop.f32.mrf.mxu0
  %v3060 = vadd.f32 0.0, %v3059
  %v3061 = vpop.f32.mrf.mxu0
  %v3062 = vadd.f32 0.0, %v3061
  %3063 = vmatprep.mubr.f32.mxu0 0.0
  %3064 = vmatmul.mubr.f32.gmra.mxu0 %v2953
  %v3065 = vpop.f32.mrf.mxu0
  %v3066 = vadd.f32 0.0, %v3065
  %v3067 = vpop.f32.mrf.mxu0
  %v3068 = vadd.f32 0.0, %v3067
  %3069 = vmatprep.mubr.f32.mxu0 0.0
  %3070 = vmatmul.mubr.f32.gmra.mxu0 %v2955
  %v3071 = vpop.f32.mrf.mxu0
  %v3072 = vadd.f32 0.0, %v3071
  %v3073 = vpop.f32.mrf.mxu0
  %v3074 = vadd.f32 0.0, %v3073
  %3075 = vmatprep.mubr.f32.mxu0 0.0
  %3076 = vmatmul.mubr.f32.gmra.mxu0 %v2957
  %v3077 = vpop.f32.mrf.mxu0
  %v3078 = vadd.f32 0.0, %v3077
  %v3079 = vpop.f32.mrf.mxu0
  %v3080 = vadd.f32 0.0, %v3079
  %3081 = vmatprep.mubr.f32.mxu0 0.0
  %3082 = vmatmul.mubr.f32.gmra.mxu0 %v2959
  %v3083 = vpop.f32.mrf.mxu0
  %v3084 = vadd.f32 0.0, %v3083
  %v3085 = vpop.f32.mrf.mxu0
  %v3086 = vadd.f32 0.0, %v3085
  %3087 = vmatprep.mubr.f32.mxu0 0.0
  %3088 = vmatmul.mubr.f32.gmra.mxu0 %v2961
  %v3089 = vpop.f32.mrf.mxu0
  %v3090 = vadd.f32 0.0, %v3089
  %v3091 = vpop.f32.mrf.mxu0
  %v3092 = vadd.f32 0.0, %v3091
  %3093 = vmatprep.mubr.f32.mxu0 0.0
  %3094 = vmatmul.mubr.f32.gmra.mxu0 %v2963
  %v3095 = vpop.f32.mrf.mxu0
  %v3096 = vadd.f32 0.0, %v3095
  %v3097 = vpop.f32.mrf.mxu0
  %v3098 = vadd.f32 0.0, %v3097
  %3099 = vmatprep.mubr.f32.mxu0 0.0
  %3100 = vmatmul.mubr.f32.gmra.mxu0 %v2965
  %v3101 = vpop.f32.mrf.mxu0
  %v3102 = vadd.f32 0.0, %v3101
  %v3103 = vpop.f32.mrf.mxu0
  %v3104 = vadd.f32 0.0, %v3103
  %3105 = vmatprep.mubr.f32.mxu0 0.0
  %3106 = vmatmul.mubr.f32.gmra.mxu0 %v2967
  %v3107 = vpop.f32.mrf.mxu0
  %v3108 = vadd.f32 0.0, %v3107
  %v3109 = vpop.f32.mrf.mxu0
  %v3110 = vadd.f32 0.0, %v3109
  %3111 = vmatprep.mubr.f32.mxu0 0.0
  %3112 = vmatmul.mubr.f32.gmra.mxu0 %v2969
  %v3113 = vpop.f32.mrf.mxu0
  %v3114 = vadd.f32 0.0, %v3113
  %v3115 = vpop.f32.mrf.mxu0
  %v3116 = vadd.f32 0.0, %v3115
  %3117 = vmatprep.mubr.f32.mxu0 0.0
  %3118 = vmatmul.mubr.f32.gmra.mxu0 %v2971
  %v3119 = vpop.f32.mrf.mxu0
  %v3120 = vadd.f32 0.0, %v3119
  %v3121 = vpop.f32.mrf.mxu0
  %v3122 = vadd.f32 0.0, %v3121
  %3123 = vmatprep.mubr.f32.mxu0 0.0
  %3124 = vmatmul.mubr.f32.gmra.mxu0 %v2973
  %v3125 = vpop.f32.mrf.mxu0
  %v3126 = vadd.f32 0.0, %v3125
  %v3127 = vpop.f32.mrf.mxu0
  %v3128 = vadd.f32 0.0, %v3127
  %3129 = vdwg.mxu0
  %v3130 = vsel %vm2946, %v2792, 0
  %v3132 = vsel %vm2946, %v2797, 0
  %v3134 = vsel %vm2946, %v2802, 0
  %v3136 = vsel %vm2946, %v2807, 0
  %v3138 = vsel %vm2946, %v2812, 0
  %v3140 = vsel %vm2946, %v2817, 0
  %v3142 = vsel %vm2946, %v2822, 0
  %v3144 = vsel %vm2946, %v2827, 0
  %v3146 = vsel %vm2946, %v2832, 0
  %v3148 = vsel %vm2946, %v2837, 0
  %v3150 = vsel %vm2946, %v2842, 0
  %v3152 = vsel %vm2946, %v2847, 0
  %v3154 = vsel %vm2946, %v2852, 0
  %v3156 = vsel %vm2946, %v2857, 0
  %v3159 = vsel %vm1846, %v2880, 0
  %v3162 = vsel %vm1846, %v2881, 0
  %3164 = vmatprep.subr.mxu0 0.0
  %3165 = vmatpush1.msra.mxu0 0.0
  %3166 = vmatprep.subr.mxu0 0.0
  %3167 = vmatpush1.msra.mxu0 0.0
  %3168 = vmatprep.subr.mxu0 0.0
  %3169 = vmatpush1.msra.mxu0 0.0
  %3170 = vmatprep.subr.mxu0 0.0
  %3171 = vmatpush1.msra.mxu0 0.0
  %3172 = vmatprep.subr.mxu0 0.0
  %3173 = vmatpush1.msra.mxu0 0.0
  %3174 = vmatprep.subr.mxu0 %v3162
  %3175 = vmatpush1.msra.mxu0 %v3159
  %3176 = vmatprep.subr.mxu0 %v2879
  %3177 = vmatpush1.msra.mxu0 %v2878
  %3178 = vmatprep.subr.mxu0 %v2877
  %3179 = vmatpush1.msra.mxu0 %v2876
  %3180 = vmatprep.subr.mxu0 %v2875
  %3181 = vmatpush1.msra.mxu0 %v2874
  %3182 = vmatprep.subr.mxu0 %v2873
  %3183 = vmatpush1.msra.mxu0 %v2872
  %3184 = vmatprep.subr.mxu0 %v2871
  %3185 = vmatpush1.msra.mxu0 %v2870
  %3186 = vmatprep.subr.mxu0 %v2869
  %3187 = vmatpush1.msra.mxu0 %v2868
  %3188 = vmatprep.subr.mxu0 %v2867
  %3189 = vmatpush1.msra.mxu0 %v2866
  %3190 = vmatprep.subr.mxu0 %v2865
  %3191 = vmatpush1.msra.mxu0 %v2864
  %3192 = vmatprep.subr.mxu0 %v2863
  %3193 = vmatpush1.msra.mxu0 %v2862
  %3194 = vmatprep.subr.mxu0 %v2861
  %3195 = vmatpush1.msra.mxu0 %v2860
  %3196 = vmatprep.subr.mxu0 0.0
  %3197 = vmatpush2.msra.mxu0 0.0
  %3198 = vmatprep.subr.mxu0 0.0
  %3199 = vmatpush2.msra.mxu0 0.0
  %3200 = vmatprep.subr.mxu0 0.0
  %3201 = vmatpush2.msra.mxu0 0.0
  %3202 = vmatprep.subr.mxu0 0.0
  %3203 = vmatpush2.msra.mxu0 0.0
  %3204 = vmatprep.subr.mxu0 0.0
  %3205 = vmatpush2.msra.mxu0 0.0
  %3206 = vmatprep.subr.mxu0 0.0
  %3207 = vmatpush2.msra.mxu0 0.0
  %3208 = vmatprep.subr.mxu0 0.0
  %3209 = vmatpush2.msra.mxu0 0.0
  %3210 = vmatprep.subr.mxu0 0.0
  %3211 = vmatpush2.msra.mxu0 0.0
  %3212 = vmatprep.subr.mxu0 0.0
  %3213 = vmatpush2.msra.mxu0 0.0
  %3214 = vmatprep.subr.mxu0 0.0
  %3215 = vmatpush2.msra.mxu0 0.0
  %3216 = vmatprep.subr.mxu0 0.0
  %3217 = vmatpush2.msra.mxu0 0.0
  %3218 = vmatprep.subr.mxu0 0.0
  %3219 = vmatpush2.msra.mxu0 0.0
  %3220 = vmatprep.subr.mxu0 0.0
  %3221 = vmatpush2.msra.mxu0 0.0
  %3222 = vmatprep.subr.mxu0 0.0
  %3223 = vmatpush2.msra.mxu0 0.0
  %3224 = vmatprep.subr.mxu0 0.0
  %3225 = vmatpush2.msra.mxu0 0.0
  %3226 = vmatprep.subr.mxu0 0.0
  %3227 = vmatpush2.msra.mxu0 0.0
  %3228 = vmatprep.mubr.f32.mxu0 0.0
  %3229 = vmatmul.mubr.f32.gmra.mxu0 %v3130
  %v3230 = vpop.f32.mrf.mxu0
  %v3231 = vadd.f32 %v3048, %v3230
  %v3232 = vpop.f32.mrf.mxu0
  %v3233 = vadd.f32 %v3050, %v3232
  %3234 = vmatprep.mubr.f32.mxu0 0.0
  %3235 = vmatmul.mubr.f32.gmra.mxu0 %v3132
  %v3236 = vpop.f32.mrf.mxu0
  %v3237 = vadd.f32 %v3054, %v3236
  %v3238 = vpop.f32.mrf.mxu0
  %v3239 = vadd.f32 %v3056, %v3238
  %3240 = vmatprep.mubr.f32.mxu0 0.0
  %3241 = vmatmul.mubr.f32.gmra.mxu0 %v3134
  %v3242 = vpop.f32.mrf.mxu0
  %v3243 = vadd.f32 %v3060, %v3242
  %v3244 = vpop.f32.mrf.mxu0
  %v3245 = vadd.f32 %v3062, %v3244
  %3246 = vmatprep.mubr.f32.mxu0 0.0
  %3247 = vmatmul.mubr.f32.gmra.mxu0 %v3136
  %v3248 = vpop.f32.mrf.mxu0
  %v3249 = vadd.f32 %v3066, %v3248
  %v3250 = vpop.f32.mrf.mxu0
  %v3251 = vadd.f32 %v3068, %v3250
  %3252 = vmatprep.mubr.f32.mxu0 0.0
  %3253 = vmatmul.mubr.f32.gmra.mxu0 %v3138
  %v3254 = vpop.f32.mrf.mxu0
  %v3255 = vadd.f32 %v3072, %v3254
  %v3256 = vpop.f32.mrf.mxu0
  %v3257 = vadd.f32 %v3074, %v3256
  %3258 = vmatprep.mubr.f32.mxu0 0.0
  %3259 = vmatmul.mubr.f32.gmra.mxu0 %v3140
  %v3260 = vpop.f32.mrf.mxu0
  %v3261 = vadd.f32 %v3078, %v3260
  %v3262 = vpop.f32.mrf.mxu0
  %v3263 = vadd.f32 %v3080, %v3262
  %3264 = vmatprep.mubr.f32.mxu0 0.0
  %3265 = vmatmul.mubr.f32.gmra.mxu0 %v3142
  %v3266 = vpop.f32.mrf.mxu0
  %v3267 = vadd.f32 %v3084, %v3266
  %v3268 = vpop.f32.mrf.mxu0
  %v3269 = vadd.f32 %v3086, %v3268
  %3270 = vmatprep.mubr.f32.mxu0 0.0
  %3271 = vmatmul.mubr.f32.gmra.mxu0 %v3144
  %v3272 = vpop.f32.mrf.mxu0
  %v3273 = vadd.f32 %v3090, %v3272
  %v3274 = vpop.f32.mrf.mxu0
  %v3275 = vadd.f32 %v3092, %v3274
  %3276 = vmatprep.mubr.f32.mxu0 0.0
  %3277 = vmatmul.mubr.f32.gmra.mxu0 %v3146
  %v3278 = vpop.f32.mrf.mxu0
  %v3279 = vadd.f32 %v3096, %v3278
  %v3280 = vpop.f32.mrf.mxu0
  %v3281 = vadd.f32 %v3098, %v3280
  %3282 = vmatprep.mubr.f32.mxu0 0.0
  %3283 = vmatmul.mubr.f32.gmra.mxu0 %v3148
  %v3284 = vpop.f32.mrf.mxu0
  %v3285 = vadd.f32 %v3102, %v3284
  %v3286 = vpop.f32.mrf.mxu0
  %v3287 = vadd.f32 %v3104, %v3286
  %3288 = vmatprep.mubr.f32.mxu0 0.0
  %3289 = vmatmul.mubr.f32.gmra.mxu0 %v3150
  %v3290 = vpop.f32.mrf.mxu0
  %v3291 = vadd.f32 %v3108, %v3290
  %v3292 = vpop.f32.mrf.mxu0
  %v3293 = vadd.f32 %v3110, %v3292
  %3294 = vmatprep.mubr.f32.mxu0 0.0
  %3295 = vmatmul.mubr.f32.gmra.mxu0 %v3152
  %v3296 = vpop.f32.mrf.mxu0
  %v3297 = vadd.f32 %v3114, %v3296
  %v3298 = vpop.f32.mrf.mxu0
  %v3299 = vadd.f32 %v3116, %v3298
  %3300 = vmatprep.mubr.f32.mxu0 0.0
  %3301 = vmatmul.mubr.f32.gmra.mxu0 %v3154
  %v3302 = vpop.f32.mrf.mxu0
  %v3303 = vadd.f32 %v3120, %v3302
  %v3304 = vpop.f32.mrf.mxu0
  %v3305 = vadd.f32 %v3122, %v3304
  %3306 = vmatprep.mubr.f32.mxu0 0.0
  %3307 = vmatmul.mubr.f32.gmra.mxu0 %v3156
  %v3308 = vpop.f32.mrf.mxu0
  %v3309 = vadd.f32 %v3126, %v3308
  %v3310 = vpop.f32.mrf.mxu0
  %v3311 = vadd.f32 %v3128, %v3310
  %3312 = vdwg.mxu0
  %s3313 = scalar_lea.vmem %s5, 352
  %v3314 = vld [vmem:[%s3313] sm:$0xff]
  %v3315 = vld [vmem:[%s3313 + $0x8] sm:$0xff]
  %v3316 = vld [vmem:[%s3313 + $0x10] sm:$0xff]
  %v3317 = vld [vmem:[%s3313 + $0x18] sm:$0xff]
  %v3318 = vld [vmem:[%s3313 + $0x20] sm:$0xff]
  %v3319 = vld [vmem:[%s3313 + $0x28] sm:$0xff]
  %v3320 = vld [vmem:[%s3313 + $0x30] sm:$0xff]
  %v3321 = vld [vmem:[%s3313 + $0x38] sm:$0xff]
  %v3322 = vld [vmem:[%s3313 + $0x40] sm:$0xff]
  %v3323 = vld [vmem:[%s3313 + $0x48] sm:$0xff]
  %v3324 = vld [vmem:[%s3313 + $0x50] sm:$0xff]
  %v3325 = vld [vmem:[%s3313 + $0x58] sm:$0xff]
  %v3326 = vld [vmem:[%s3313 + $0x60] sm:$0xff]
  %v3327 = vld [vmem:[%s3313 + $0x68] sm:$0xff]
  %v3328 = vld [vmem:[%s3313 + $0x70] sm:$0xff]
  %v3329 = vld [vmem:[%s3313 + $0x78] sm:$0xff]
  %v3330 = vld [vmem:[%s3313 + $0x80] sm:$0xff]
  %v3331 = vld [vmem:[%s3313 + $0x88] sm:$0xff]
  %v3332 = vld [vmem:[%s3313 + $0x90] sm:$0xff]
  %v3333 = vld [vmem:[%s3313 + $0x98] sm:$0xff]
  %v3334 = vld [vmem:[%s3313 + $0xa0] sm:$0xf]
  %v3335 = vld [vmem:[%s3313 + $0xa8] sm:$0xf]
  %v3336 = vrot.slane %v2792, 2
  %v3337 = vrot.slane %v2797, 2
  %v3338 = vsel %vm898, %v3336, %v3337
  %v3339 = vrot.slane %v2802, 2
  %v3340 = vsel %vm898, %v3337, %v3339
  %v3341 = vrot.slane %v2807, 2
  %v3342 = vsel %vm898, %v3339, %v3341
  %v3343 = vrot.slane %v2812, 2
  %v3344 = vsel %vm898, %v3341, %v3343
  %v3345 = vrot.slane %v2817, 2
  %v3346 = vsel %vm898, %v3343, %v3345
  %v3347 = vrot.slane %v2822, 2
  %v3348 = vsel %vm898, %v3345, %v3347
  %v3349 = vrot.slane %v2827, 2
  %v3350 = vsel %vm898, %v3347, %v3349
  %v3351 = vrot.slane %v2832, 2
  %v3352 = vsel %vm898, %v3349, %v3351
  %v3353 = vrot.slane %v2837, 2
  %v3354 = vsel %vm898, %v3351, %v3353
  %v3355 = vrot.slane %v2842, 2
  %v3356 = vsel %vm898, %v3353, %v3355
  %v3357 = vrot.slane %v2847, 2
  %v3358 = vsel %vm898, %v3355, %v3357
  %v3359 = vrot.slane %v2852, 2
  %v3360 = vsel %vm898, %v3357, %v3359
  %v3361 = vrot.slane %v2857, 2
  %v3362 = vsel %vm898, %v3359, %v3361
  %v3363 = vsel %vm2946, %v3338, 0
  %v3365 = vsel %vm2946, %v3340, 0
  %v3367 = vsel %vm2946, %v3342, 0
  %v3369 = vsel %vm2946, %v3344, 0
  %v3371 = vsel %vm2946, %v3346, 0
  %v3373 = vsel %vm2946, %v3348, 0
  %v3375 = vsel %vm2946, %v3350, 0
  %v3377 = vsel %vm2946, %v3352, 0
  %v3379 = vsel %vm2946, %v3354, 0
  %v3381 = vsel %vm2946, %v3356, 0
  %v3383 = vsel %vm2946, %v3358, 0
  %v3385 = vsel %vm2946, %v3360, 0
  %v3387 = vsel %vm2946, %v3362, 0
  %v3389 = vsel %vm2946, %v3361, 0
  %v3392 = vsel %vm1846, %v3334, 0
  %v3395 = vsel %vm1846, %v3335, 0
  %3397 = vmatprep.subr.mxu0 0.0
  %3398 = vmatpush1.msra.mxu0 0.0
  %3399 = vmatprep.subr.mxu0 0.0
  %3400 = vmatpush1.msra.mxu0 0.0
  %3401 = vmatprep.subr.mxu0 0.0
  %3402 = vmatpush1.msra.mxu0 0.0
  %3403 = vmatprep.subr.mxu0 0.0
  %3404 = vmatpush1.msra.mxu0 0.0
  %3405 = vmatprep.subr.mxu0 0.0
  %3406 = vmatpush1.msra.mxu0 0.0
  %3407 = vmatprep.subr.mxu0 %v3395
  %3408 = vmatpush1.msra.mxu0 %v3392
  %3409 = vmatprep.subr.mxu0 %v3333
  %3410 = vmatpush1.msra.mxu0 %v3332
  %3411 = vmatprep.subr.mxu0 %v3331
  %3412 = vmatpush1.msra.mxu0 %v3330
  %3413 = vmatprep.subr.mxu0 %v3329
  %3414 = vmatpush1.msra.mxu0 %v3328
  %3415 = vmatprep.subr.mxu0 %v3327
  %3416 = vmatpush1.msra.mxu0 %v3326
  %3417 = vmatprep.subr.mxu0 %v3325
  %3418 = vmatpush1.msra.mxu0 %v3324
  %3419 = vmatprep.subr.mxu0 %v3323
  %3420 = vmatpush1.msra.mxu0 %v3322
  %3421 = vmatprep.subr.mxu0 %v3321
  %3422 = vmatpush1.msra.mxu0 %v3320
  %3423 = vmatprep.subr.mxu0 %v3319
  %3424 = vmatpush1.msra.mxu0 %v3318
  %3425 = vmatprep.subr.mxu0 %v3317
  %3426 = vmatpush1.msra.mxu0 %v3316
  %3427 = vmatprep.subr.mxu0 %v3315
  %3428 = vmatpush1.msra.mxu0 %v3314
  %3429 = vmatprep.subr.mxu0 0.0
  %3430 = vmatpush2.msra.mxu0 0.0
  %3431 = vmatprep.subr.mxu0 0.0
  %3432 = vmatpush2.msra.mxu0 0.0
  %3433 = vmatprep.subr.mxu0 0.0
  %3434 = vmatpush2.msra.mxu0 0.0
  %3435 = vmatprep.subr.mxu0 0.0
  %3436 = vmatpush2.msra.mxu0 0.0
  %3437 = vmatprep.subr.mxu0 0.0
  %3438 = vmatpush2.msra.mxu0 0.0
  %3439 = vmatprep.subr.mxu0 0.0
  %3440 = vmatpush2.msra.mxu0 0.0
  %3441 = vmatprep.subr.mxu0 0.0
  %3442 = vmatpush2.msra.mxu0 0.0
  %3443 = vmatprep.subr.mxu0 0.0
  %3444 = vmatpush2.msra.mxu0 0.0
  %3445 = vmatprep.subr.mxu0 0.0
  %3446 = vmatpush2.msra.mxu0 0.0
  %3447 = vmatprep.subr.mxu0 0.0
  %3448 = vmatpush2.msra.mxu0 0.0
  %3449 = vmatprep.subr.mxu0 0.0
  %3450 = vmatpush2.msra.mxu0 0.0
  %3451 = vmatprep.subr.mxu0 0.0
  %3452 = vmatpush2.msra.mxu0 0.0
  %3453 = vmatprep.subr.mxu0 0.0
  %3454 = vmatpush2.msra.mxu0 0.0
  %3455 = vmatprep.subr.mxu0 0.0
  %3456 = vmatpush2.msra.mxu0 0.0
  %3457 = vmatprep.subr.mxu0 0.0
  %3458 = vmatpush2.msra.mxu0 0.0
  %3459 = vmatprep.subr.mxu0 0.0
  %3460 = vmatpush2.msra.mxu0 0.0
  %3461 = vmatprep.mubr.f32.mxu0 0.0
  %3462 = vmatmul.mubr.f32.gmra.mxu0 %v3363
  %v3463 = vpop.f32.mrf.mxu0
  %v3464 = vadd.f32 0.0, %v3463
  %v3465 = vpop.f32.mrf.mxu0
  %v3466 = vadd.f32 0.0, %v3465
  %3467 = vmatprep.mubr.f32.mxu0 0.0
  %3468 = vmatmul.mubr.f32.gmra.mxu0 %v3365
  %v3469 = vpop.f32.mrf.mxu0
  %v3470 = vadd.f32 0.0, %v3469
  %v3471 = vpop.f32.mrf.mxu0
  %v3472 = vadd.f32 0.0, %v3471
  %3473 = vmatprep.mubr.f32.mxu0 0.0
  %3474 = vmatmul.mubr.f32.gmra.mxu0 %v3367
  %v3475 = vpop.f32.mrf.mxu0
  %v3476 = vadd.f32 0.0, %v3475
  %v3477 = vpop.f32.mrf.mxu0
  %v3478 = vadd.f32 0.0, %v3477
  %3479 = vmatprep.mubr.f32.mxu0 0.0
  %3480 = vmatmul.mubr.f32.gmra.mxu0 %v3369
  %v3481 = vpop.f32.mrf.mxu0
  %v3482 = vadd.f32 0.0, %v3481
  %v3483 = vpop.f32.mrf.mxu0
  %v3484 = vadd.f32 0.0, %v3483
  %3485 = vmatprep.mubr.f32.mxu0 0.0
  %3486 = vmatmul.mubr.f32.gmra.mxu0 %v3371
  %v3487 = vpop.f32.mrf.mxu0
  %v3488 = vadd.f32 0.0, %v3487
  %v3489 = vpop.f32.mrf.mxu0
  %v3490 = vadd.f32 0.0, %v3489
  %3491 = vmatprep.mubr.f32.mxu0 0.0
  %3492 = vmatmul.mubr.f32.gmra.mxu0 %v3373
  %v3493 = vpop.f32.mrf.mxu0
  %v3494 = vadd.f32 0.0, %v3493
  %v3495 = vpop.f32.mrf.mxu0
  %v3496 = vadd.f32 0.0, %v3495
  %3497 = vmatprep.mubr.f32.mxu0 0.0
  %3498 = vmatmul.mubr.f32.gmra.mxu0 %v3375
  %v3499 = vpop.f32.mrf.mxu0
  %v3500 = vadd.f32 0.0, %v3499
  %v3501 = vpop.f32.mrf.mxu0
  %v3502 = vadd.f32 0.0, %v3501
  %3503 = vmatprep.mubr.f32.mxu0 0.0
  %3504 = vmatmul.mubr.f32.gmra.mxu0 %v3377
  %v3505 = vpop.f32.mrf.mxu0
  %v3506 = vadd.f32 0.0, %v3505
  %v3507 = vpop.f32.mrf.mxu0
  %v3508 = vadd.f32 0.0, %v3507
  %3509 = vmatprep.mubr.f32.mxu0 0.0
  %3510 = vmatmul.mubr.f32.gmra.mxu0 %v3379
  %v3511 = vpop.f32.mrf.mxu0
  %v3512 = vadd.f32 0.0, %v3511
  %v3513 = vpop.f32.mrf.mxu0
  %v3514 = vadd.f32 0.0, %v3513
  %3515 = vmatprep.mubr.f32.mxu0 0.0
  %3516 = vmatmul.mubr.f32.gmra.mxu0 %v3381
  %v3517 = vpop.f32.mrf.mxu0
  %v3518 = vadd.f32 0.0, %v3517
  %v3519 = vpop.f32.mrf.mxu0
  %v3520 = vadd.f32 0.0, %v3519
  %3521 = vmatprep.mubr.f32.mxu0 0.0
  %3522 = vmatmul.mubr.f32.gmra.mxu0 %v3383
  %v3523 = vpop.f32.mrf.mxu0
  %v3524 = vadd.f32 0.0, %v3523
  %v3525 = vpop.f32.mrf.mxu0
  %v3526 = vadd.f32 0.0, %v3525
  %3527 = vmatprep.mubr.f32.mxu0 0.0
  %3528 = vmatmul.mubr.f32.gmra.mxu0 %v3385
  %v3529 = vpop.f32.mrf.mxu0
  %v3530 = vadd.f32 0.0, %v3529
  %v3531 = vpop.f32.mrf.mxu0
  %v3532 = vadd.f32 0.0, %v3531
  %3533 = vmatprep.mubr.f32.mxu0 0.0
  %3534 = vmatmul.mubr.f32.gmra.mxu0 %v3387
  %v3535 = vpop.f32.mrf.mxu0
  %v3536 = vadd.f32 0.0, %v3535
  %v3537 = vpop.f32.mrf.mxu0
  %v3538 = vadd.f32 0.0, %v3537
  %3539 = vmatprep.mubr.f32.mxu0 0.0
  %3540 = vmatmul.mubr.f32.gmra.mxu0 %v3389
  %v3541 = vpop.f32.mrf.mxu0
  %v3542 = vadd.f32 0.0, %v3541
  %v3543 = vpop.f32.mrf.mxu0
  %v3544 = vadd.f32 0.0, %v3543
  %3545 = vdwg.mxu0
  %v3546 = vadd.f32 %v3231, %v3464
  %v3547 = vadd.f32 %v3233, %v3466
  %v3548 = vadd.f32 %v3237, %v3470
  %v3549 = vadd.f32 %v3239, %v3472
  %v3550 = vadd.f32 %v3243, %v3476
  %v3551 = vadd.f32 %v3245, %v3478
  %v3552 = vadd.f32 %v3249, %v3482
  %v3553 = vadd.f32 %v3251, %v3484
  %v3554 = vadd.f32 %v3255, %v3488
  %v3555 = vadd.f32 %v3257, %v3490
  %v3556 = vadd.f32 %v3261, %v3494
  %v3557 = vadd.f32 %v3263, %v3496
  %v3558 = vadd.f32 %v3267, %v3500
  %v3559 = vadd.f32 %v3269, %v3502
  %v3560 = vadd.f32 %v3273, %v3506
  %v3561 = vadd.f32 %v3275, %v3508
  %v3562 = vadd.f32 %v3279, %v3512
  %v3563 = vadd.f32 %v3281, %v3514
  %v3564 = vadd.f32 %v3285, %v3518
  %v3565 = vadd.f32 %v3287, %v3520
  %v3566 = vadd.f32 %v3291, %v3524
  %v3567 = vadd.f32 %v3293, %v3526
  %v3568 = vadd.f32 %v3297, %v3530
  %v3569 = vadd.f32 %v3299, %v3532
  %v3570 = vadd.f32 %v3303, %v3536
  %v3571 = vadd.f32 %v3305, %v3538
  %v3572 = vadd.f32 %v3309, %v3542
  %v3573 = vadd.f32 %v3311, %v3544
  %s3574 = scalar_lea.vmem %s5, 528
  %v3575 = vld [vmem:[%s3574] sm:$0xff]
  %v3576 = vld [vmem:[%s3574 + $0x8] sm:$0xff]
  %v3577 = vld [vmem:[%s3574 + $0x10] sm:$0xff]
  %v3578 = vld [vmem:[%s3574 + $0x18] sm:$0xff]
  %v3579 = vld [vmem:[%s3574 + $0x20] sm:$0xff]
  %v3580 = vld [vmem:[%s3574 + $0x28] sm:$0xff]
  %v3581 = vld [vmem:[%s3574 + $0x30] sm:$0xff]
  %v3582 = vld [vmem:[%s3574 + $0x38] sm:$0xff]
  %v3583 = vld [vmem:[%s3574 + $0x40] sm:$0xff]
  %v3584 = vld [vmem:[%s3574 + $0x48] sm:$0xff]
  %v3585 = vld [vmem:[%s3574 + $0x50] sm:$0xff]
  %v3586 = vld [vmem:[%s3574 + $0x58] sm:$0xff]
  %v3587 = vld [vmem:[%s3574 + $0x60] sm:$0xff]
  %v3588 = vld [vmem:[%s3574 + $0x68] sm:$0xff]
  %v3589 = vld [vmem:[%s3574 + $0x70] sm:$0xff]
  %v3590 = vld [vmem:[%s3574 + $0x78] sm:$0xff]
  %v3591 = vld [vmem:[%s3574 + $0x80] sm:$0xff]
  %v3592 = vld [vmem:[%s3574 + $0x88] sm:$0xff]
  %v3593 = vld [vmem:[%s3574 + $0x90] sm:$0xff]
  %v3594 = vld [vmem:[%s3574 + $0x98] sm:$0xff]
  %v3595 = vld [vmem:[%s3574 + $0xa0] sm:$0xf]
  %v3596 = vld [vmem:[%s3574 + $0xa8] sm:$0xf]
  %v3597 = vrot.slane %v2792, 3
  %v3598 = vrot.slane %v2797, 3
  %v3599 = vsel %vm1372, %v3597, %v3598
  %v3600 = vrot.slane %v2802, 3
  %v3601 = vsel %vm1372, %v3598, %v3600
  %v3602 = vrot.slane %v2807, 3
  %v3603 = vsel %vm1372, %v3600, %v3602
  %v3604 = vrot.slane %v2812, 3
  %v3605 = vsel %vm1372, %v3602, %v3604
  %v3606 = vrot.slane %v2817, 3
  %v3607 = vsel %vm1372, %v3604, %v3606
  %v3608 = vrot.slane %v2822, 3
  %v3609 = vsel %vm1372, %v3606, %v3608
  %v3610 = vrot.slane %v2827, 3
  %v3611 = vsel %vm1372, %v3608, %v3610
  %v3612 = vrot.slane %v2832, 3
  %v3613 = vsel %vm1372, %v3610, %v3612
  %v3614 = vrot.slane %v2837, 3
  %v3615 = vsel %vm1372, %v3612, %v3614
  %v3616 = vrot.slane %v2842, 3
  %v3617 = vsel %vm1372, %v3614, %v3616
  %v3618 = vrot.slane %v2847, 3
  %v3619 = vsel %vm1372, %v3616, %v3618
  %v3620 = vrot.slane %v2852, 3
  %v3621 = vsel %vm1372, %v3618, %v3620
  %v3622 = vrot.slane %v2857, 3
  %v3623 = vsel %vm1372, %v3620, %v3622
  %v3624 = vsel %vm2946, %v3599, 0
  %v3626 = vsel %vm2946, %v3601, 0
  %v3628 = vsel %vm2946, %v3603, 0
  %v3630 = vsel %vm2946, %v3605, 0
  %v3632 = vsel %vm2946, %v3607, 0
  %v3634 = vsel %vm2946, %v3609, 0
  %v3636 = vsel %vm2946, %v3611, 0
  %v3638 = vsel %vm2946, %v3613, 0
  %v3640 = vsel %vm2946, %v3615, 0
  %v3642 = vsel %vm2946, %v3617, 0
  %v3644 = vsel %vm2946, %v3619, 0
  %v3646 = vsel %vm2946, %v3621, 0
  %v3648 = vsel %vm2946, %v3623, 0
  %v3650 = vsel %vm2946, %v3622, 0
  %v3653 = vsel %vm1846, %v3595, 0
  %v3656 = vsel %vm1846, %v3596, 0
  %3658 = vmatprep.subr.mxu0 0.0
  %3659 = vmatpush1.msra.mxu0 0.0
  %3660 = vmatprep.subr.mxu0 0.0
  %3661 = vmatpush1.msra.mxu0 0.0
  %3662 = vmatprep.subr.mxu0 0.0
  %3663 = vmatpush1.msra.mxu0 0.0
  %3664 = vmatprep.subr.mxu0 0.0
  %3665 = vmatpush1.msra.mxu0 0.0
  %3666 = vmatprep.subr.mxu0 0.0
  %3667 = vmatpush1.msra.mxu0 0.0
  %3668 = vmatprep.subr.mxu0 %v3656
  %3669 = vmatpush1.msra.mxu0 %v3653
  %3670 = vmatprep.subr.mxu0 %v3594
  %3671 = vmatpush1.msra.mxu0 %v3593
  %3672 = vmatprep.subr.mxu0 %v3592
  %3673 = vmatpush1.msra.mxu0 %v3591
  %3674 = vmatprep.subr.mxu0 %v3590
  %3675 = vmatpush1.msra.mxu0 %v3589
  %3676 = vmatprep.subr.mxu0 %v3588
  %3677 = vmatpush1.msra.mxu0 %v3587
  %3678 = vmatprep.subr.mxu0 %v3586
  %3679 = vmatpush1.msra.mxu0 %v3585
  %3680 = vmatprep.subr.mxu0 %v3584
  %3681 = vmatpush1.msra.mxu0 %v3583
  %3682 = vmatprep.subr.mxu0 %v3582
  %3683 = vmatpush1.msra.mxu0 %v3581
  %3684 = vmatprep.subr.mxu0 %v3580
  %3685 = vmatpush1.msra.mxu0 %v3579
  %3686 = vmatprep.subr.mxu0 %v3578
  %3687 = vmatpush1.msra.mxu0 %v3577
  %3688 = vmatprep.subr.mxu0 %v3576
  %3689 = vmatpush1.msra.mxu0 %v3575
  %3690 = vmatprep.subr.mxu0 0.0
  %3691 = vmatpush2.msra.mxu0 0.0
  %3692 = vmatprep.subr.mxu0 0.0
  %3693 = vmatpush2.msra.mxu0 0.0
  %3694 = vmatprep.subr.mxu0 0.0
  %3695 = vmatpush2.msra.mxu0 0.0
  %3696 = vmatprep.subr.mxu0 0.0
  %3697 = vmatpush2.msra.mxu0 0.0
  %3698 = vmatprep.subr.mxu0 0.0
  %3699 = vmatpush2.msra.mxu0 0.0
  %3700 = vmatprep.subr.mxu0 0.0
  %3701 = vmatpush2.msra.mxu0 0.0
  %3702 = vmatprep.subr.mxu0 0.0
  %3703 = vmatpush2.msra.mxu0 0.0
  %3704 = vmatprep.subr.mxu0 0.0
  %3705 = vmatpush2.msra.mxu0 0.0
  %3706 = vmatprep.subr.mxu0 0.0
  %3707 = vmatpush2.msra.mxu0 0.0
  %3708 = vmatprep.subr.mxu0 0.0
  %3709 = vmatpush2.msra.mxu0 0.0
  %3710 = vmatprep.subr.mxu0 0.0
  %3711 = vmatpush2.msra.mxu0 0.0
  %3712 = vmatprep.subr.mxu0 0.0
  %3713 = vmatpush2.msra.mxu0 0.0
  %3714 = vmatprep.subr.mxu0 0.0
  %3715 = vmatpush2.msra.mxu0 0.0
  %3716 = vmatprep.subr.mxu0 0.0
  %3717 = vmatpush2.msra.mxu0 0.0
  %3718 = vmatprep.subr.mxu0 0.0
  %3719 = vmatpush2.msra.mxu0 0.0
  %3720 = vmatprep.subr.mxu0 0.0
  %3721 = vmatpush2.msra.mxu0 0.0
  %3722 = vmatprep.mubr.f32.mxu0 0.0
  %3723 = vmatmul.mubr.f32.gmra.mxu0 %v3624
  %v3724 = vpop.f32.mrf.mxu0
  %v3725 = vadd.f32 0.0, %v3724
  %v3726 = vpop.f32.mrf.mxu0
  %v3727 = vadd.f32 0.0, %v3726
  %3728 = vmatprep.mubr.f32.mxu0 0.0
  %3729 = vmatmul.mubr.f32.gmra.mxu0 %v3626
  %v3730 = vpop.f32.mrf.mxu0
  %v3731 = vadd.f32 0.0, %v3730
  %v3732 = vpop.f32.mrf.mxu0
  %v3733 = vadd.f32 0.0, %v3732
  %3734 = vmatprep.mubr.f32.mxu0 0.0
  %3735 = vmatmul.mubr.f32.gmra.mxu0 %v3628
  %v3736 = vpop.f32.mrf.mxu0
  %v3737 = vadd.f32 0.0, %v3736
  %v3738 = vpop.f32.mrf.mxu0
  %v3739 = vadd.f32 0.0, %v3738
  %3740 = vmatprep.mubr.f32.mxu0 0.0
  %3741 = vmatmul.mubr.f32.gmra.mxu0 %v3630
  %v3742 = vpop.f32.mrf.mxu0
  %v3743 = vadd.f32 0.0, %v3742
  %v3744 = vpop.f32.mrf.mxu0
  %v3745 = vadd.f32 0.0, %v3744
  %3746 = vmatprep.mubr.f32.mxu0 0.0
  %3747 = vmatmul.mubr.f32.gmra.mxu0 %v3632
  %v3748 = vpop.f32.mrf.mxu0
  %v3749 = vadd.f32 0.0, %v3748
  %v3750 = vpop.f32.mrf.mxu0
  %v3751 = vadd.f32 0.0, %v3750
  %3752 = vmatprep.mubr.f32.mxu0 0.0
  %3753 = vmatmul.mubr.f32.gmra.mxu0 %v3634
  %v3754 = vpop.f32.mrf.mxu0
  %v3755 = vadd.f32 0.0, %v3754
  %v3756 = vpop.f32.mrf.mxu0
  %v3757 = vadd.f32 0.0, %v3756
  %3758 = vmatprep.mubr.f32.mxu0 0.0
  %3759 = vmatmul.mubr.f32.gmra.mxu0 %v3636
  %v3760 = vpop.f32.mrf.mxu0
  %v3761 = vadd.f32 0.0, %v3760
  %v3762 = vpop.f32.mrf.mxu0
  %v3763 = vadd.f32 0.0, %v3762
  %3764 = vmatprep.mubr.f32.mxu0 0.0
  %3765 = vmatmul.mubr.f32.gmra.mxu0 %v3638
  %v3766 = vpop.f32.mrf.mxu0
  %v3767 = vadd.f32 0.0, %v3766
  %v3768 = vpop.f32.mrf.mxu0
  %v3769 = vadd.f32 0.0, %v3768
  %3770 = vmatprep.mubr.f32.mxu0 0.0
  %3771 = vmatmul.mubr.f32.gmra.mxu0 %v3640
  %v3772 = vpop.f32.mrf.mxu0
  %v3773 = vadd.f32 0.0, %v3772
  %v3774 = vpop.f32.mrf.mxu0
  %v3775 = vadd.f32 0.0, %v3774
  %3776 = vmatprep.mubr.f32.mxu0 0.0
  %3777 = vmatmul.mubr.f32.gmra.mxu0 %v3642
  %v3778 = vpop.f32.mrf.mxu0
  %v3779 = vadd.f32 0.0, %v3778
  %v3780 = vpop.f32.mrf.mxu0
  %v3781 = vadd.f32 0.0, %v3780
  %3782 = vmatprep.mubr.f32.mxu0 0.0
  %3783 = vmatmul.mubr.f32.gmra.mxu0 %v3644
  %v3784 = vpop.f32.mrf.mxu0
  %v3785 = vadd.f32 0.0, %v3784
  %v3786 = vpop.f32.mrf.mxu0
  %v3787 = vadd.f32 0.0, %v3786
  %3788 = vmatprep.mubr.f32.mxu0 0.0
  %3789 = vmatmul.mubr.f32.gmra.mxu0 %v3646
  %v3790 = vpop.f32.mrf.mxu0
  %v3791 = vadd.f32 0.0, %v3790
  %v3792 = vpop.f32.mrf.mxu0
  %v3793 = vadd.f32 0.0, %v3792
  %3794 = vmatprep.mubr.f32.mxu0 0.0
  %3795 = vmatmul.mubr.f32.gmra.mxu0 %v3648
  %v3796 = vpop.f32.mrf.mxu0
  %v3797 = vadd.f32 0.0, %v3796
  %v3798 = vpop.f32.mrf.mxu0
  %v3799 = vadd.f32 0.0, %v3798
  %3800 = vmatprep.mubr.f32.mxu0 0.0
  %3801 = vmatmul.mubr.f32.gmra.mxu0 %v3650
  %v3802 = vpop.f32.mrf.mxu0
  %v3803 = vadd.f32 0.0, %v3802
  %v3804 = vpop.f32.mrf.mxu0
  %v3805 = vadd.f32 0.0, %v3804
  %3806 = vdwg.mxu0
  %v3807 = vadd.f32 %v3546, %v3725
  %v3808 = vadd.f32 %v3547, %v3727
  %v3809 = vadd.f32 %v3548, %v3731
  %v3810 = vadd.f32 %v3549, %v3733
  %v3811 = vadd.f32 %v3550, %v3737
  %v3812 = vadd.f32 %v3551, %v3739
  %v3813 = vadd.f32 %v3552, %v3743
  %v3814 = vadd.f32 %v3553, %v3745
  %v3815 = vadd.f32 %v3554, %v3749
  %v3816 = vadd.f32 %v3555, %v3751
  %v3817 = vadd.f32 %v3556, %v3755
  %v3818 = vadd.f32 %v3557, %v3757
  %v3819 = vadd.f32 %v3558, %v3761
  %v3820 = vadd.f32 %v3559, %v3763
  %v3821 = vadd.f32 %v3560, %v3767
  %v3822 = vadd.f32 %v3561, %v3769
  %v3823 = vadd.f32 %v3562, %v3773
  %v3824 = vadd.f32 %v3563, %v3775
  %v3825 = vadd.f32 %v3564, %v3779
  %v3826 = vadd.f32 %v3565, %v3781
  %v3827 = vadd.f32 %v3566, %v3785
  %v3828 = vadd.f32 %v3567, %v3787
  %v3829 = vadd.f32 %v3568, %v3791
  %v3830 = vadd.f32 %v3569, %v3793
  %v3831 = vadd.f32 %v3570, %v3797
  %v3832 = vadd.f32 %v3571, %v3799
  %v3833 = vadd.f32 %v3572, %v3803
  %v3834 = vadd.f32 %v3573, %v3805
  %s3835 = scalar_lea.vmem %s5, 704
  %v3836 = vld [vmem:[%s3835] sm:$0xff]
  %v3837 = vld [vmem:[%s3835 + $0x8] sm:$0xff]
  %v3838 = vld [vmem:[%s3835 + $0x10] sm:$0xff]
  %v3839 = vld [vmem:[%s3835 + $0x18] sm:$0xff]
  %v3840 = vld [vmem:[%s3835 + $0x20] sm:$0xff]
  %v3841 = vld [vmem:[%s3835 + $0x28] sm:$0xff]
  %v3842 = vld [vmem:[%s3835 + $0x30] sm:$0xff]
  %v3843 = vld [vmem:[%s3835 + $0x38] sm:$0xff]
  %v3844 = vld [vmem:[%s3835 + $0x40] sm:$0xff]
  %v3845 = vld [vmem:[%s3835 + $0x48] sm:$0xff]
  %v3846 = vld [vmem:[%s3835 + $0x50] sm:$0xff]
  %v3847 = vld [vmem:[%s3835 + $0x58] sm:$0xff]
  %v3848 = vld [vmem:[%s3835 + $0x60] sm:$0xff]
  %v3849 = vld [vmem:[%s3835 + $0x68] sm:$0xff]
  %v3850 = vld [vmem:[%s3835 + $0x70] sm:$0xff]
  %v3851 = vld [vmem:[%s3835 + $0x78] sm:$0xff]
  %v3852 = vld [vmem:[%s3835 + $0x80] sm:$0xff]
  %v3853 = vld [vmem:[%s3835 + $0x88] sm:$0xff]
  %v3854 = vld [vmem:[%s3835 + $0x90] sm:$0xff]
  %v3855 = vld [vmem:[%s3835 + $0x98] sm:$0xff]
  %v3856 = vld [vmem:[%s3835 + $0xa0] sm:$0xf]
  %v3857 = vld [vmem:[%s3835 + $0xa8] sm:$0xf]
  %v3858 = vrot.slane %v2792, 4
  %v3859 = vrot.slane %v2797, 4
  %v3860 = vsel %vm1846, %v3858, %v3859
  %v3861 = vrot.slane %v2802, 4
  %v3862 = vsel %vm1846, %v3859, %v3861
  %v3863 = vrot.slane %v2807, 4
  %v3864 = vsel %vm1846, %v3861, %v3863
  %v3865 = vrot.slane %v2812, 4
  %v3866 = vsel %vm1846, %v3863, %v3865
  %v3867 = vrot.slane %v2817, 4
  %v3868 = vsel %vm1846, %v3865, %v3867
  %v3869 = vrot.slane %v2822, 4
  %v3870 = vsel %vm1846, %v3867, %v3869
  %v3871 = vrot.slane %v2827, 4
  %v3872 = vsel %vm1846, %v3869, %v3871
  %v3873 = vrot.slane %v2832, 4
  %v3874 = vsel %vm1846, %v3871, %v3873
  %v3875 = vrot.slane %v2837, 4
  %v3876 = vsel %vm1846, %v3873, %v3875
  %v3877 = vrot.slane %v2842, 4
  %v3878 = vsel %vm1846, %v3875, %v3877
  %v3879 = vrot.slane %v2847, 4
  %v3880 = vsel %vm1846, %v3877, %v3879
  %v3881 = vrot.slane %v2852, 4
  %v3882 = vsel %vm1846, %v3879, %v3881
  %v3883 = vrot.slane %v2857, 4
  %v3884 = vsel %vm1846, %v3881, %v3883
  %v3885 = vsel %vm2946, %v3860, 0
  %v3887 = vsel %vm2946, %v3862, 0
  %v3889 = vsel %vm2946, %v3864, 0
  %v3891 = vsel %vm2946, %v3866, 0
  %v3893 = vsel %vm2946, %v3868, 0
  %v3895 = vsel %vm2946, %v3870, 0
  %v3897 = vsel %vm2946, %v3872, 0
  %v3899 = vsel %vm2946, %v3874, 0
  %v3901 = vsel %vm2946, %v3876, 0
  %v3903 = vsel %vm2946, %v3878, 0
  %v3905 = vsel %vm2946, %v3880, 0
  %v3907 = vsel %vm2946, %v3882, 0
  %v3909 = vsel %vm2946, %v3884, 0
  %v3911 = vsel %vm2946, %v3883, 0
  %v3914 = vsel %vm1846, %v3856, 0
  %v3917 = vsel %vm1846, %v3857, 0
  %3919 = vmatprep.subr.mxu0 0.0
  %3920 = vmatpush1.msra.mxu0 0.0
  %3921 = vmatprep.subr.mxu0 0.0
  %3922 = vmatpush1.msra.mxu0 0.0
  %3923 = vmatprep.subr.mxu0 0.0
  %3924 = vmatpush1.msra.mxu0 0.0
  %3925 = vmatprep.subr.mxu0 0.0
  %3926 = vmatpush1.msra.mxu0 0.0
  %3927 = vmatprep.subr.mxu0 0.0
  %3928 = vmatpush1.msra.mxu0 0.0
  %3929 = vmatprep.subr.mxu0 %v3917
  %3930 = vmatpush1.msra.mxu0 %v3914
  %3931 = vmatprep.subr.mxu0 %v3855
  %3932 = vmatpush1.msra.mxu0 %v3854
  %3933 = vmatprep.subr.mxu0 %v3853
  %3934 = vmatpush1.msra.mxu0 %v3852
  %3935 = vmatprep.subr.mxu0 %v3851
  %3936 = vmatpush1.msra.mxu0 %v3850
  %3937 = vmatprep.subr.mxu0 %v3849
  %3938 = vmatpush1.msra.mxu0 %v3848
  %3939 = vmatprep.subr.mxu0 %v3847
  %3940 = vmatpush1.msra.mxu0 %v3846
  %3941 = vmatprep.subr.mxu0 %v3845
  %3942 = vmatpush1.msra.mxu0 %v3844
  %3943 = vmatprep.subr.mxu0 %v3843
  %3944 = vmatpush1.msra.mxu0 %v3842
  %3945 = vmatprep.subr.mxu0 %v3841
  %3946 = vmatpush1.msra.mxu0 %v3840
  %3947 = vmatprep.subr.mxu0 %v3839
  %3948 = vmatpush1.msra.mxu0 %v3838
  %3949 = vmatprep.subr.mxu0 %v3837
  %3950 = vmatpush1.msra.mxu0 %v3836
  %3951 = vmatprep.subr.mxu0 0.0
  %3952 = vmatpush2.msra.mxu0 0.0
  %3953 = vmatprep.subr.mxu0 0.0
  %3954 = vmatpush2.msra.mxu0 0.0
  %3955 = vmatprep.subr.mxu0 0.0
  %3956 = vmatpush2.msra.mxu0 0.0
  %3957 = vmatprep.subr.mxu0 0.0
  %3958 = vmatpush2.msra.mxu0 0.0
  %3959 = vmatprep.subr.mxu0 0.0
  %3960 = vmatpush2.msra.mxu0 0.0
  %3961 = vmatprep.subr.mxu0 0.0
  %3962 = vmatpush2.msra.mxu0 0.0
  %3963 = vmatprep.subr.mxu0 0.0
  %3964 = vmatpush2.msra.mxu0 0.0
  %3965 = vmatprep.subr.mxu0 0.0
  %3966 = vmatpush2.msra.mxu0 0.0
  %3967 = vmatprep.subr.mxu0 0.0
  %3968 = vmatpush2.msra.mxu0 0.0
  %3969 = vmatprep.subr.mxu0 0.0
  %3970 = vmatpush2.msra.mxu0 0.0
  %3971 = vmatprep.subr.mxu0 0.0
  %3972 = vmatpush2.msra.mxu0 0.0
  %3973 = vmatprep.subr.mxu0 0.0
  %3974 = vmatpush2.msra.mxu0 0.0
  %3975 = vmatprep.subr.mxu0 0.0
  %3976 = vmatpush2.msra.mxu0 0.0
  %3977 = vmatprep.subr.mxu0 0.0
  %3978 = vmatpush2.msra.mxu0 0.0
  %3979 = vmatprep.subr.mxu0 0.0
  %3980 = vmatpush2.msra.mxu0 0.0
  %3981 = vmatprep.subr.mxu0 0.0
  %3982 = vmatpush2.msra.mxu0 0.0
  %3983 = vmatprep.mubr.f32.mxu0 0.0
  %3984 = vmatmul.mubr.f32.gmra.mxu0 %v3885
  %v3985 = vpop.f32.mrf.mxu0
  %v3986 = vadd.f32 0.0, %v3985
  %v3987 = vpop.f32.mrf.mxu0
  %v3988 = vadd.f32 0.0, %v3987
  %3989 = vmatprep.mubr.f32.mxu0 0.0
  %3990 = vmatmul.mubr.f32.gmra.mxu0 %v3887
  %v3991 = vpop.f32.mrf.mxu0
  %v3992 = vadd.f32 0.0, %v3991
  %v3993 = vpop.f32.mrf.mxu0
  %v3994 = vadd.f32 0.0, %v3993
  %3995 = vmatprep.mubr.f32.mxu0 0.0
  %3996 = vmatmul.mubr.f32.gmra.mxu0 %v3889
  %v3997 = vpop.f32.mrf.mxu0
  %v3998 = vadd.f32 0.0, %v3997
  %v3999 = vpop.f32.mrf.mxu0
  %v4000 = vadd.f32 0.0, %v3999
  %4001 = vmatprep.mubr.f32.mxu0 0.0
  %4002 = vmatmul.mubr.f32.gmra.mxu0 %v3891
  %v4003 = vpop.f32.mrf.mxu0
  %v4004 = vadd.f32 0.0, %v4003
  %v4005 = vpop.f32.mrf.mxu0
  %v4006 = vadd.f32 0.0, %v4005
  %4007 = vmatprep.mubr.f32.mxu0 0.0
  %4008 = vmatmul.mubr.f32.gmra.mxu0 %v3893
  %v4009 = vpop.f32.mrf.mxu0
  %v4010 = vadd.f32 0.0, %v4009
  %v4011 = vpop.f32.mrf.mxu0
  %v4012 = vadd.f32 0.0, %v4011
  %4013 = vmatprep.mubr.f32.mxu0 0.0
  %4014 = vmatmul.mubr.f32.gmra.mxu0 %v3895
  %v4015 = vpop.f32.mrf.mxu0
  %v4016 = vadd.f32 0.0, %v4015
  %v4017 = vpop.f32.mrf.mxu0
  %v4018 = vadd.f32 0.0, %v4017
  %4019 = vmatprep.mubr.f32.mxu0 0.0
  %4020 = vmatmul.mubr.f32.gmra.mxu0 %v3897
  %v4021 = vpop.f32.mrf.mxu0
  %v4022 = vadd.f32 0.0, %v4021
  %v4023 = vpop.f32.mrf.mxu0
  %v4024 = vadd.f32 0.0, %v4023
  %4025 = vmatprep.mubr.f32.mxu0 0.0
  %4026 = vmatmul.mubr.f32.gmra.mxu0 %v3899
  %v4027 = vpop.f32.mrf.mxu0
  %v4028 = vadd.f32 0.0, %v4027
  %v4029 = vpop.f32.mrf.mxu0
  %v4030 = vadd.f32 0.0, %v4029
  %4031 = vmatprep.mubr.f32.mxu0 0.0
  %4032 = vmatmul.mubr.f32.gmra.mxu0 %v3901
  %v4033 = vpop.f32.mrf.mxu0
  %v4034 = vadd.f32 0.0, %v4033
  %v4035 = vpop.f32.mrf.mxu0
  %v4036 = vadd.f32 0.0, %v4035
  %4037 = vmatprep.mubr.f32.mxu0 0.0
  %4038 = vmatmul.mubr.f32.gmra.mxu0 %v3903
  %v4039 = vpop.f32.mrf.mxu0
  %v4040 = vadd.f32 0.0, %v4039
  %v4041 = vpop.f32.mrf.mxu0
  %v4042 = vadd.f32 0.0, %v4041
  %4043 = vmatprep.mubr.f32.mxu0 0.0
  %4044 = vmatmul.mubr.f32.gmra.mxu0 %v3905
  %v4045 = vpop.f32.mrf.mxu0
  %v4046 = vadd.f32 0.0, %v4045
  %v4047 = vpop.f32.mrf.mxu0
  %v4048 = vadd.f32 0.0, %v4047
  %4049 = vmatprep.mubr.f32.mxu0 0.0
  %4050 = vmatmul.mubr.f32.gmra.mxu0 %v3907
  %v4051 = vpop.f32.mrf.mxu0
  %v4052 = vadd.f32 0.0, %v4051
  %v4053 = vpop.f32.mrf.mxu0
  %v4054 = vadd.f32 0.0, %v4053
  %4055 = vmatprep.mubr.f32.mxu0 0.0
  %4056 = vmatmul.mubr.f32.gmra.mxu0 %v3909
  %v4057 = vpop.f32.mrf.mxu0
  %v4058 = vadd.f32 0.0, %v4057
  %v4059 = vpop.f32.mrf.mxu0
  %v4060 = vadd.f32 0.0, %v4059
  %4061 = vmatprep.mubr.f32.mxu0 0.0
  %4062 = vmatmul.mubr.f32.gmra.mxu0 %v3911
  %v4063 = vpop.f32.mrf.mxu0
  %v4064 = vadd.f32 0.0, %v4063
  %v4065 = vpop.f32.mrf.mxu0
  %v4066 = vadd.f32 0.0, %v4065
  %4067 = vdwg.mxu0
  %v4068 = vadd.f32 %v3807, %v3986
  %v4069 = vadd.f32 %v3808, %v3988
  %v4070 = vadd.f32 %v3809, %v3992
  %v4071 = vadd.f32 %v3810, %v3994
  %v4072 = vadd.f32 %v3811, %v3998
  %v4073 = vadd.f32 %v3812, %v4000
  %v4074 = vadd.f32 %v3813, %v4004
  %v4075 = vadd.f32 %v3814, %v4006
  %v4076 = vadd.f32 %v3815, %v4010
  %v4077 = vadd.f32 %v3816, %v4012
  %v4078 = vadd.f32 %v3817, %v4016
  %v4079 = vadd.f32 %v3818, %v4018
  %v4080 = vadd.f32 %v3819, %v4022
  %v4081 = vadd.f32 %v3820, %v4024
  %v4082 = vadd.f32 %v3821, %v4028
  %v4083 = vadd.f32 %v3822, %v4030
  %v4084 = vadd.f32 %v3823, %v4034
  %v4085 = vadd.f32 %v3824, %v4036
  %v4086 = vadd.f32 %v3825, %v4040
  %v4087 = vadd.f32 %v3826, %v4042
  %v4088 = vadd.f32 %v3827, %v4046
  %v4089 = vadd.f32 %v3828, %v4048
  %v4090 = vadd.f32 %v3829, %v4052
  %v4091 = vadd.f32 %v3830, %v4054
  %v4092 = vadd.f32 %v3831, %v4058
  %v4093 = vadd.f32 %v3832, %v4060
  %v4094 = vadd.f32 %v3833, %v4064
  %v4095 = vadd.f32 %v3834, %v4066
  %v4096 = vld [vmem:[%s6] sm:$0x3]
  %v4098 = vlaneseq
  %v4099 = vshrl.u32 %v4098, 7
  %v4100 = vsub.s32 0, %v4099
  %v4101 = vrot.slane %v4096, %v4100
  %v4102 = vlaneseq
  %v4103 = vshrl.u32 %v4102, 7
  %v4104 = vsub.s32 1, %v4103
  %v4105 = vrot.slane %v4096, %v4104
  %v4108 = vadd.f32 %v4068, %v4101
  %v4109 = vadd.f32 %v4069, %v4105
  %v4110 = vadd.f32 %v4070, %v4101
  %v4111 = vadd.f32 %v4071, %v4105
  %v4112 = vadd.f32 %v4072, %v4101
  %v4113 = vadd.f32 %v4073, %v4105
  %v4114 = vadd.f32 %v4074, %v4101
  %v4115 = vadd.f32 %v4075, %v4105
  %v4116 = vadd.f32 %v4076, %v4101
  %v4117 = vadd.f32 %v4077, %v4105
  %v4118 = vadd.f32 %v4078, %v4101
  %v4119 = vadd.f32 %v4079, %v4105
  %v4120 = vadd.f32 %v4080, %v4101
  %v4121 = vadd.f32 %v4081, %v4105
  %v4122 = vadd.f32 %v4082, %v4101
  %v4123 = vadd.f32 %v4083, %v4105
  %v4124 = vadd.f32 %v4084, %v4101
  %v4125 = vadd.f32 %v4085, %v4105
  %v4126 = vadd.f32 %v4086, %v4101
  %v4127 = vadd.f32 %v4087, %v4105
  %v4128 = vadd.f32 %v4088, %v4101
  %v4129 = vadd.f32 %v4089, %v4105
  %v4130 = vadd.f32 %v4090, %v4101
  %v4131 = vadd.f32 %v4091, %v4105
  %v4132 = vadd.f32 %v4092, %v4101
  %v4133 = vadd.f32 %v4093, %v4105
  %v4134 = vadd.f32 %v4094, %v4101
  %v4135 = vadd.f32 %v4095, %v4105
  %v4136 = vtanh.pop %v4108
  %v4137 = vtanh.pop %v4109
  %v4138 = vtanh.pop %v4110
  %v4139 = vtanh.pop %v4111
  %v4140 = vtanh.pop %v4112
  %v4141 = vtanh.pop %v4113
  %v4142 = vtanh.pop %v4114
  %v4143 = vtanh.pop %v4115
  %v4144 = vtanh.pop %v4116
  %v4145 = vtanh.pop %v4117
  %v4146 = vtanh.pop %v4118
  %v4147 = vtanh.pop %v4119
  %v4148 = vtanh.pop %v4120
  %v4149 = vtanh.pop %v4121
  %v4150 = vtanh.pop %v4122
  %v4151 = vtanh.pop %v4123
  %v4152 = vtanh.pop %v4124
  %v4153 = vtanh.pop %v4125
  %v4154 = vtanh.pop %v4126
  %v4155 = vtanh.pop %v4127
  %v4156 = vtanh.pop %v4128
  %v4157 = vtanh.pop %v4129
  %v4158 = vtanh.pop %v4130
  %v4159 = vtanh.pop %v4131
  %v4160 = vtanh.pop %v4132
  %v4161 = vtanh.pop %v4133
  %v4162 = vtanh.pop %v4134
  %v4163 = vtanh.pop %v4135
  %v4164 = vld [vmem:[%s7] sm:$0xff]
  %v4165 = vld [vmem:[%s7 + $0x8] sm:$0xff]
  %v4166 = vld [vmem:[%s7 + $0x10] sm:$0xff]
  %v4167 = vld [vmem:[%s7 + $0x18] sm:$0xff]
  %v4168 = vld [vmem:[%s7 + $0x20] sm:$0xff]
  %vm4169 = vcmask 883712
  %v4171 = vsel %vm4169, %v4164, 0
  %v4174 = vsel %vm4169, %v4165, 0
  %v4177 = vsel %vm4169, %v4166, 0
  %v4180 = vsel %vm4169, %v4167, 0
  %v4183 = vsel %vm4169, %v4168, 0
  %v4186 = vsel %vm1846, %v4162, 0
  %v4189 = vsel %vm1846, %v4163, 0
  %4191 = vmatprep.subr.mxu0 0.0
  %4192 = vmatpush1.msra.mxu0 0.0
  %4193 = vmatprep.subr.mxu0 0.0
  %4194 = vmatpush1.msra.mxu0 0.0
  %4195 = vmatprep.subr.mxu0 %v4189
  %4196 = vmatpush1.msra.mxu0 %v4186
  %4197 = vmatprep.subr.mxu0 %v4161
  %4198 = vmatpush1.msra.mxu0 %v4160
  %4199 = vmatprep.subr.mxu0 %v4159
  %4200 = vmatpush1.msra.mxu0 %v4158
  %4201 = vmatprep.subr.mxu0 %v4157
  %4202 = vmatpush1.msra.mxu0 %v4156
  %4203 = vmatprep.subr.mxu0 %v4155
  %4204 = vmatpush1.msra.mxu0 %v4154
  %4205 = vmatprep.subr.mxu0 %v4153
  %4206 = vmatpush1.msra.mxu0 %v4152
  %4207 = vmatprep.subr.mxu0 %v4151
  %4208 = vmatpush1.msra.mxu0 %v4150
  %4209 = vmatprep.subr.mxu0 %v4149
  %4210 = vmatpush1.msra.mxu0 %v4148
  %4211 = vmatprep.subr.mxu0 %v4147
  %4212 = vmatpush1.msra.mxu0 %v4146
  %4213 = vmatprep.subr.mxu0 %v4145
  %4214 = vmatpush1.msra.mxu0 %v4144
  %4215 = vmatprep.subr.mxu0 %v4143
  %4216 = vmatpush1.msra.mxu0 %v4142
  %4217 = vmatprep.subr.mxu0 %v4141
  %4218 = vmatpush1.msra.mxu0 %v4140
  %4219 = vmatprep.subr.mxu0 %v4139
  %4220 = vmatpush1.msra.mxu0 %v4138
  %4221 = vmatprep.subr.mxu0 %v4137
  %4222 = vmatpush1.msra.mxu0 %v4136
  %4223 = vmatprep.subr.mxu0 0.0
  %4224 = vmatpush2.msra.mxu0 0.0
  %4225 = vmatprep.subr.mxu0 0.0
  %4226 = vmatpush2.msra.mxu0 0.0
  %4227 = vmatprep.subr.mxu0 0.0
  %4228 = vmatpush2.msra.mxu0 0.0
  %4229 = vmatprep.subr.mxu0 0.0
  %4230 = vmatpush2.msra.mxu0 0.0
  %4231 = vmatprep.subr.mxu0 0.0
  %4232 = vmatpush2.msra.mxu0 0.0
  %4233 = vmatprep.subr.mxu0 0.0
  %4234 = vmatpush2.msra.mxu0 0.0
  %4235 = vmatprep.subr.mxu0 0.0
  %4236 = vmatpush2.msra.mxu0 0.0
  %4237 = vmatprep.subr.mxu0 0.0
  %4238 = vmatpush2.msra.mxu0 0.0
  %4239 = vmatprep.subr.mxu0 0.0
  %4240 = vmatpush2.msra.mxu0 0.0
  %4241 = vmatprep.subr.mxu0 0.0
  %4242 = vmatpush2.msra.mxu0 0.0
  %4243 = vmatprep.subr.mxu0 0.0
  %4244 = vmatpush2.msra.mxu0 0.0
  %4245 = vmatprep.subr.mxu0 0.0
  %4246 = vmatpush2.msra.mxu0 0.0
  %4247 = vmatprep.subr.mxu0 0.0
  %4248 = vmatpush2.msra.mxu0 0.0
  %4249 = vmatprep.subr.mxu0 0.0
  %4250 = vmatpush2.msra.mxu0 0.0
  %4251 = vmatprep.subr.mxu0 0.0
  %4252 = vmatpush2.msra.mxu0 0.0
  %4253 = vmatprep.subr.mxu0 0.0
  %4254 = vmatpush2.msra.mxu0 0.0
  %4255 = vmatprep.mubr.f32.mxu0 0.0
  %4256 = vmatmul.mubr.f32.gmra.mxu0 %v4171
  %v4257 = vpop.f32.mrf.mxu0
  %v4258 = vadd.f32 0.0, %v4257
  %v4259 = vpop.f32.mrf.mxu0
  %v4260 = vadd.f32 0.0, %v4259
  %4261 = vmatprep.mubr.f32.mxu0 0.0
  %4262 = vmatmul.mubr.f32.gmra.mxu0 %v4174
  %v4263 = vpop.f32.mrf.mxu0
  %v4264 = vadd.f32 0.0, %v4263
  %v4265 = vpop.f32.mrf.mxu0
  %v4266 = vadd.f32 0.0, %v4265
  %4267 = vmatprep.mubr.f32.mxu0 0.0
  %4268 = vmatmul.mubr.f32.gmra.mxu0 %v4177
  %v4269 = vpop.f32.mrf.mxu0
  %v4270 = vadd.f32 0.0, %v4269
  %v4271 = vpop.f32.mrf.mxu0
  %v4272 = vadd.f32 0.0, %v4271
  %4273 = vmatprep.mubr.f32.mxu0 0.0
  %4274 = vmatmul.mubr.f32.gmra.mxu0 %v4180
  %v4275 = vpop.f32.mrf.mxu0
  %v4276 = vadd.f32 0.0, %v4275
  %v4277 = vpop.f32.mrf.mxu0
  %v4278 = vadd.f32 0.0, %v4277
  %4279 = vmatprep.mubr.f32.mxu0 0.0
  %4280 = vmatmul.mubr.f32.gmra.mxu0 %v4183
  %v4281 = vpop.f32.mrf.mxu0
  %v4282 = vadd.f32 0.0, %v4281
  %v4283 = vpop.f32.mrf.mxu0
  %v4284 = vadd.f32 0.0, %v4283
  %4285 = vdwg.mxu0
  %v4286 = vld [vmem:[%s8] sm:$0xff]
  %v4287 = vld [vmem:[%s8 + $0x8] sm:$0xff]
  %v4288 = vld [vmem:[%s8 + $0x10] sm:$0xff]
  %v4289 = vld [vmem:[%s8 + $0x18] sm:$0xff]
  %v4290 = vld [vmem:[%s8 + $0x20] sm:$0xff]
  %v4291 = vld [vmem:[%s8 + $0x28] sm:$0xff]
  %v4292 = vld [vmem:[%s8 + $0x30] sm:$0xff]
  %v4293 = vld [vmem:[%s8 + $0x38] sm:$0xff]
  %v4294 = vld [vmem:[%s8 + $0x40] sm:$0xff]
  %v4295 = vld [vmem:[%s8 + $0x48] sm:$0xff]
  %v4296 = vld [vmem:[%s8 + $0x50] sm:$0xff]
  %v4297 = vld [vmem:[%s8 + $0x58] sm:$0xff]
  %v4298 = vld [vmem:[%s8 + $0x60] sm:$0xff]
  %v4299 = vld [vmem:[%s8 + $0x68] sm:$0xff]
  %v4300 = vld [vmem:[%s8 + $0x70] sm:$0xff]
  %v4301 = vld [vmem:[%s8 + $0x78] sm:$0xff]
  %v4302 = vld [vmem:[%s8 + $0x80] sm:$0xff]
  %v4303 = vld [vmem:[%s8 + $0x88] sm:$0xff]
  %v4304 = vld [vmem:[%s8 + $0x90] sm:$0xff]
  %v4305 = vld [vmem:[%s8 + $0x98] sm:$0xff]
  %vm4306 = vcmask 261120
  %v4308 = vsel %vm4306, %v4260, 0
  %v4311 = vsel %vm4306, %v4266, 0
  %v4314 = vsel %vm4306, %v4272, 0
  %v4317 = vsel %vm4306, %v4278, 0
  %v4320 = vsel %vm4306, %v4284, 0
  %4322 = vmatprep.subr.mxu0 0.0
  %4323 = vmatpush1.msra.mxu0 %v4301
  %4324 = vmatprep.subr.mxu0 0.0
  %4325 = vmatpush1.msra.mxu0 %v4300
  %4326 = vmatprep.subr.mxu0 0.0
  %4327 = vmatpush1.msra.mxu0 %v4299
  %4328 = vmatprep.subr.mxu0 0.0
  %4329 = vmatpush1.msra.mxu0 %v4298
  %4330 = vmatprep.subr.mxu0 0.0
  %4331 = vmatpush1.msra.mxu0 %v4297
  %4332 = vmatprep.subr.mxu0 0.0
  %4333 = vmatpush1.msra.mxu0 %v4296
  %4334 = vmatprep.subr.mxu0 0.0
  %4335 = vmatpush1.msra.mxu0 %v4295
  %4336 = vmatprep.subr.mxu0 0.0
  %4337 = vmatpush1.msra.mxu0 %v4294
  %4338 = vmatprep.subr.mxu0 0.0
  %4339 = vmatpush1.msra.mxu0 %v4293
  %4340 = vmatprep.subr.mxu0 0.0
  %4341 = vmatpush1.msra.mxu0 %v4292
  %4342 = vmatprep.subr.mxu0 0.0
  %4343 = vmatpush1.msra.mxu0 %v4291
  %4344 = vmatprep.subr.mxu0 0.0
  %4345 = vmatpush1.msra.mxu0 %v4290
  %4346 = vmatprep.subr.mxu0 0.0
  %4347 = vmatpush1.msra.mxu0 %v4289
  %4348 = vmatprep.subr.mxu0 0.0
  %4349 = vmatpush1.msra.mxu0 %v4288
  %4350 = vmatprep.subr.mxu0 0.0
  %4351 = vmatpush1.msra.mxu0 %v4287
  %4352 = vmatprep.subr.mxu0 0.0
  %4353 = vmatpush1.msra.mxu0 %v4286
  %4354 = vmatprep.subr.mxu0 0.0
  %4355 = vmatpush2.msra.mxu0 0.0
  %4356 = vmatprep.subr.mxu0 0.0
  %4357 = vmatpush2.msra.mxu0 0.0
  %4358 = vmatprep.subr.mxu0 0.0
  %4359 = vmatpush2.msra.mxu0 0.0
  %4360 = vmatprep.subr.mxu0 0.0
  %4361 = vmatpush2.msra.mxu0 0.0
  %4362 = vmatprep.subr.mxu0 0.0
  %4363 = vmatpush2.msra.mxu0 0.0
  %4364 = vmatprep.subr.mxu0 0.0
  %4365 = vmatpush2.msra.mxu0 0.0
  %4366 = vmatprep.subr.mxu0 0.0
  %4367 = vmatpush2.msra.mxu0 0.0
  %4368 = vmatprep.subr.mxu0 0.0
  %4369 = vmatpush2.msra.mxu0 0.0
  %4370 = vmatprep.subr.mxu0 0.0
  %4371 = vmatpush2.msra.mxu0 0.0
  %4372 = vmatprep.subr.mxu0 0.0
  %4373 = vmatpush2.msra.mxu0 0.0
  %4374 = vmatprep.subr.mxu0 0.0
  %4375 = vmatpush2.msra.mxu0 0.0
  %4376 = vmatprep.subr.mxu0 0.0
  %4377 = vmatpush2.msra.mxu0 0.0
  %4378 = vmatprep.subr.mxu0 0.0
  %4379 = vmatpush2.msra.mxu0 %v4305
  %4380 = vmatprep.subr.mxu0 0.0
  %4381 = vmatpush2.msra.mxu0 %v4304
  %4382 = vmatprep.subr.mxu0 0.0
  %4383 = vmatpush2.msra.mxu0 %v4303
  %4384 = vmatprep.subr.mxu0 0.0
  %4385 = vmatpush2.msra.mxu0 %v4302
  %4386 = vmatprep.mubr.f32.mxu0 %v4308
  %4387 = vmatmul.mubr.f32.gmra.mxu0 %v4258
  %v4388 = vpop.f32.mrf.mxu0
  %v4389 = vadd.f32 0.0, %v4388
  %v4390 = vpop.f32.mrf.mxu0
  %4391 = vmatprep.mubr.f32.mxu0 %v4311
  %4392 = vmatmul.mubr.f32.gmra.mxu0 %v4264
  %v4393 = vpop.f32.mrf.mxu0
  %v4394 = vadd.f32 0.0, %v4393
  %v4395 = vpop.f32.mrf.mxu0
  %4396 = vmatprep.mubr.f32.mxu0 %v4314
  %4397 = vmatmul.mubr.f32.gmra.mxu0 %v4270
  %v4398 = vpop.f32.mrf.mxu0
  %v4399 = vadd.f32 0.0, %v4398
  %v4400 = vpop.f32.mrf.mxu0
  %4401 = vmatprep.mubr.f32.mxu0 %v4317
  %4402 = vmatmul.mubr.f32.gmra.mxu0 %v4276
  %v4403 = vpop.f32.mrf.mxu0
  %v4404 = vadd.f32 0.0, %v4403
  %v4405 = vpop.f32.mrf.mxu0
  %4406 = vmatprep.mubr.f32.mxu0 %v4320
  %4407 = vmatmul.mubr.f32.gmra.mxu0 %v4282
  %v4408 = vpop.f32.mrf.mxu0
  %v4409 = vadd.f32 0.0, %v4408
  %v4410 = vpop.f32.mrf.mxu0
  %4411 = vdwg.mxu0
  %v4412 = vld [vmem:[%s9] sm:$0xff]
  %v4413 = vld [vmem:[%s9 + $0x8] sm:$0xff]
  %v4414 = vld [vmem:[%s9 + $0x10] sm:$0xff]
  %v4415 = vld [vmem:[%s9 + $0x18] sm:$0xff]
  %v4416 = vld [vmem:[%s9 + $0x20] sm:$0xff]
  %v4417 = vld [vmem:[%s9 + $0x28] sm:$0xff]
  %v4418 = vld [vmem:[%s9 + $0x30] sm:$0xff]
  %v4419 = vld [vmem:[%s9 + $0x38] sm:$0xff]
  %v4420 = vld [vmem:[%s9 + $0x40] sm:$0xff]
  %v4421 = vld [vmem:[%s9 + $0x48] sm:$0xff]
  %s4422 = scalar_lea.vmem %s9, 80
  %v4423 = vld [vmem:[%s4422] sm:$0xff]
  %v4424 = vld [vmem:[%s4422 + $0x8] sm:$0xff]
  %v4425 = vld [vmem:[%s4422 + $0x10] sm:$0xff]
  %v4426 = vld [vmem:[%s4422 + $0x18] sm:$0xff]
  %v4427 = vld [vmem:[%s4422 + $0x20] sm:$0xff]
  %v4428 = vld [vmem:[%s4422 + $0x28] sm:$0xff]
  %v4429 = vld [vmem:[%s4422 + $0x30] sm:$0xff]
  %v4430 = vld [vmem:[%s4422 + $0x38] sm:$0xff]
  %v4431 = vld [vmem:[%s4422 + $0x40] sm:$0xff]
  %v4432 = vld [vmem:[%s4422 + $0x48] sm:$0xff]
  %v4438 = vrot.slane %v4389, 1
  %v4439 = vrot.slane %v4394, 1
  %v4440 = vsel %vm166, %v4438, %v4439
  %v4441 = vrot.slane %v4399, 1
  %v4442 = vsel %vm166, %v4439, %v4441
  %v4443 = vrot.slane %v4404, 1
  %v4444 = vsel %vm166, %v4441, %v4443
  %v4445 = vrot.slane %v4409, 1
  %v4446 = vsel %vm166, %v4443, %v4445
  %vm4447 = vcmask 654336
  %v4448 = vsel %vm4447, %v4440, 0
  %v4450 = vsel %vm4447, %v4442, 0
  %v4452 = vsel %vm4447, %v4444, 0
  %v4454 = vsel %vm4447, %v4446, 0
  %v4456 = vsel %vm4447, %v4445, 0
  %4458 = vmatprep.subr.mxu0 0.0
  %4459 = vmatpush1.msra.mxu0 0.0
  %4460 = vmatprep.subr.mxu0 0.0
  %4461 = vmatpush1.msra.mxu0 0.0
  %4462 = vmatprep.subr.mxu0 0.0
  %4463 = vmatpush1.msra.mxu0 0.0
  %4464 = vmatprep.subr.mxu0 0.0
  %4465 = vmatpush1.msra.mxu0 0.0
  %4466 = vmatprep.subr.mxu0 0.0
  %4467 = vmatpush1.msra.mxu0 0.0
  %4468 = vmatprep.subr.mxu0 0.0
  %4469 = vmatpush1.msra.mxu0 0.0
  %4470 = vmatprep.subr.mxu0 0.0
  %4471 = vmatpush1.msra.mxu0 %v4432
  %4472 = vmatprep.subr.mxu0 0.0
  %4473 = vmatpush1.msra.mxu0 %v4431
  %4474 = vmatprep.subr.mxu0 0.0
  %4475 = vmatpush1.msra.mxu0 %v4430
  %4476 = vmatprep.subr.mxu0 0.0
  %4477 = vmatpush1.msra.mxu0 %v4429
  %4478 = vmatprep.subr.mxu0 0.0
  %4479 = vmatpush1.msra.mxu0 %v4428
  %4480 = vmatprep.subr.mxu0 0.0
  %4481 = vmatpush1.msra.mxu0 %v4427
  %4482 = vmatprep.subr.mxu0 0.0
  %4483 = vmatpush1.msra.mxu0 %v4426
  %4484 = vmatprep.subr.mxu0 0.0
  %4485 = vmatpush1.msra.mxu0 %v4425
  %4486 = vmatprep.subr.mxu0 0.0
  %4487 = vmatpush1.msra.mxu0 %v4424
  %4488 = vmatprep.subr.mxu0 0.0
  %4489 = vmatpush1.msra.mxu0 %v4423
  %4490 = vmatprep.subr.mxu0 0.0
  %4491 = vmatpush2.msra.mxu0 0.0
  %4492 = vmatprep.subr.mxu0 0.0
  %4493 = vmatpush2.msra.mxu0 0.0
  %4494 = vmatprep.subr.mxu0 0.0
  %4495 = vmatpush2.msra.mxu0 0.0
  %4496 = vmatprep.subr.mxu0 0.0
  %4497 = vmatpush2.msra.mxu0 0.0
  %4498 = vmatprep.subr.mxu0 0.0
  %4499 = vmatpush2.msra.mxu0 0.0
  %4500 = vmatprep.subr.mxu0 0.0
  %4501 = vmatpush2.msra.mxu0 0.0
  %4502 = vmatprep.subr.mxu0 0.0
  %4503 = vmatpush2.msra.mxu0 0.0
  %4504 = vmatprep.subr.mxu0 0.0
  %4505 = vmatpush2.msra.mxu0 0.0
  %4506 = vmatprep.subr.mxu0 0.0
  %4507 = vmatpush2.msra.mxu0 0.0
  %4508 = vmatprep.subr.mxu0 0.0
  %4509 = vmatpush2.msra.mxu0 0.0
  %4510 = vmatprep.subr.mxu0 0.0
  %4511 = vmatpush2.msra.mxu0 0.0
  %4512 = vmatprep.subr.mxu0 0.0
  %4513 = vmatpush2.msra.mxu0 0.0
  %4514 = vmatprep.subr.mxu0 0.0
  %4515 = vmatpush2.msra.mxu0 0.0
  %4516 = vmatprep.subr.mxu0 0.0
  %4517 = vmatpush2.msra.mxu0 0.0
  %4518 = vmatprep.subr.mxu0 0.0
  %4519 = vmatpush2.msra.mxu0 0.0
  %4520 = vmatprep.subr.mxu0 0.0
  %4521 = vmatpush2.msra.mxu0 0.0
  %4522 = vmatprep.mubr.f32.mxu0 0.0
  %4523 = vmatmul.mubr.f32.gmra.mxu0 %v4448
  %v4524 = vpop.f32.mrf.mxu0
  %v4525 = vadd.f32 0.0, %v4524
  %v4526 = vpop.f32.mrf.mxu0
  %4527 = vmatprep.mubr.f32.mxu0 0.0
  %4528 = vmatmul.mubr.f32.gmra.mxu0 %v4450
  %v4529 = vpop.f32.mrf.mxu0
  %v4530 = vadd.f32 0.0, %v4529
  %v4531 = vpop.f32.mrf.mxu0
  %4532 = vmatprep.mubr.f32.mxu0 0.0
  %4533 = vmatmul.mubr.f32.gmra.mxu0 %v4452
  %v4534 = vpop.f32.mrf.mxu0
  %v4535 = vadd.f32 0.0, %v4534
  %v4536 = vpop.f32.mrf.mxu0
  %4537 = vmatprep.mubr.f32.mxu0 0.0
  %4538 = vmatmul.mubr.f32.gmra.mxu0 %v4454
  %v4539 = vpop.f32.mrf.mxu0
  %v4540 = vadd.f32 0.0, %v4539
  %v4541 = vpop.f32.mrf.mxu0
  %4542 = vmatprep.mubr.f32.mxu0 0.0
  %4543 = vmatmul.mubr.f32.gmra.mxu0 %v4456
  %v4544 = vpop.f32.mrf.mxu0
  %v4545 = vadd.f32 0.0, %v4544
  %v4546 = vpop.f32.mrf.mxu0
  %4547 = vdwg.mxu0
  %v4548 = vsel %vm4447, %v4389, 0
  %v4550 = vsel %vm4447, %v4394, 0
  %v4552 = vsel %vm4447, %v4399, 0
  %v4554 = vsel %vm4447, %v4404, 0
  %v4556 = vsel %vm4447, %v4409, 0
  %4558 = vmatprep.subr.mxu0 0.0
  %4559 = vmatpush1.msra.mxu0 0.0
  %4560 = vmatprep.subr.mxu0 0.0
  %4561 = vmatpush1.msra.mxu0 0.0
  %4562 = vmatprep.subr.mxu0 0.0
  %4563 = vmatpush1.msra.mxu0 0.0
  %4564 = vmatprep.subr.mxu0 0.0
  %4565 = vmatpush1.msra.mxu0 0.0
  %4566 = vmatprep.subr.mxu0 0.0
  %4567 = vmatpush1.msra.mxu0 0.0
  %4568 = vmatprep.subr.mxu0 0.0
  %4569 = vmatpush1.msra.mxu0 0.0
  %4570 = vmatprep.subr.mxu0 0.0
  %4571 = vmatpush1.msra.mxu0 %v4421
  %4572 = vmatprep.subr.mxu0 0.0
  %4573 = vmatpush1.msra.mxu0 %v4420
  %4574 = vmatprep.subr.mxu0 0.0
  %4575 = vmatpush1.msra.mxu0 %v4419
  %4576 = vmatprep.subr.mxu0 0.0
  %4577 = vmatpush1.msra.mxu0 %v4418
  %4578 = vmatprep.subr.mxu0 0.0
  %4579 = vmatpush1.msra.mxu0 %v4417
  %4580 = vmatprep.subr.mxu0 0.0
  %4581 = vmatpush1.msra.mxu0 %v4416
  %4582 = vmatprep.subr.mxu0 0.0
  %4583 = vmatpush1.msra.mxu0 %v4415
  %4584 = vmatprep.subr.mxu0 0.0
  %4585 = vmatpush1.msra.mxu0 %v4414
  %4586 = vmatprep.subr.mxu0 0.0
  %4587 = vmatpush1.msra.mxu0 %v4413
  %4588 = vmatprep.subr.mxu0 0.0
  %4589 = vmatpush1.msra.mxu0 %v4412
  %4590 = vmatprep.subr.mxu0 0.0
  %4591 = vmatpush2.msra.mxu0 0.0
  %4592 = vmatprep.subr.mxu0 0.0
  %4593 = vmatpush2.msra.mxu0 0.0
  %4594 = vmatprep.subr.mxu0 0.0
  %4595 = vmatpush2.msra.mxu0 0.0
  %4596 = vmatprep.subr.mxu0 0.0
  %4597 = vmatpush2.msra.mxu0 0.0
  %4598 = vmatprep.subr.mxu0 0.0
  %4599 = vmatpush2.msra.mxu0 0.0
  %4600 = vmatprep.subr.mxu0 0.0
  %4601 = vmatpush2.msra.mxu0 0.0
  %4602 = vmatprep.subr.mxu0 0.0
  %4603 = vmatpush2.msra.mxu0 0.0
  %4604 = vmatprep.subr.mxu0 0.0
  %4605 = vmatpush2.msra.mxu0 0.0
  %4606 = vmatprep.subr.mxu0 0.0
  %4607 = vmatpush2.msra.mxu0 0.0
  %4608 = vmatprep.subr.mxu0 0.0
  %4609 = vmatpush2.msra.mxu0 0.0
  %4610 = vmatprep.subr.mxu0 0.0
  %4611 = vmatpush2.msra.mxu0 0.0
  %4612 = vmatprep.subr.mxu0 0.0
  %4613 = vmatpush2.msra.mxu0 0.0
  %4614 = vmatprep.subr.mxu0 0.0
  %4615 = vmatpush2.msra.mxu0 0.0
  %4616 = vmatprep.subr.mxu0 0.0
  %4617 = vmatpush2.msra.mxu0 0.0
  %4618 = vmatprep.subr.mxu0 0.0
  %4619 = vmatpush2.msra.mxu0 0.0
  %4620 = vmatprep.subr.mxu0 0.0
  %4621 = vmatpush2.msra.mxu0 0.0
  %4622 = vmatprep.mubr.f32.mxu0 0.0
  %4623 = vmatmul.mubr.f32.gmra.mxu0 %v4548
  %v4624 = vpop.f32.mrf.mxu0
  %v4625 = vadd.f32 %v4525, %v4624
  %v4626 = vpop.f32.mrf.mxu0
  %4627 = vmatprep.mubr.f32.mxu0 0.0
  %4628 = vmatmul.mubr.f32.gmra.mxu0 %v4550
  %v4629 = vpop.f32.mrf.mxu0
  %v4630 = vadd.f32 %v4530, %v4629
  %v4631 = vpop.f32.mrf.mxu0
  %4632 = vmatprep.mubr.f32.mxu0 0.0
  %4633 = vmatmul.mubr.f32.gmra.mxu0 %v4552
  %v4634 = vpop.f32.mrf.mxu0
  %v4635 = vadd.f32 %v4535, %v4634
  %v4636 = vpop.f32.mrf.mxu0
  %4637 = vmatprep.mubr.f32.mxu0 0.0
  %4638 = vmatmul.mubr.f32.gmra.mxu0 %v4554
  %v4639 = vpop.f32.mrf.mxu0
  %v4640 = vadd.f32 %v4540, %v4639
  %v4641 = vpop.f32.mrf.mxu0
  %4642 = vmatprep.mubr.f32.mxu0 0.0
  %4643 = vmatmul.mubr.f32.gmra.mxu0 %v4556
  %v4644 = vpop.f32.mrf.mxu0
  %v4645 = vadd.f32 %v4545, %v4644
  %v4646 = vpop.f32.mrf.mxu0
  %4647 = vdwg.mxu0
  %s4648 = scalar_lea.vmem %s9, 160
  %v4649 = vld [vmem:[%s4648] sm:$0xff]
  %v4650 = vld [vmem:[%s4648 + $0x8] sm:$0xff]
  %v4651 = vld [vmem:[%s4648 + $0x10] sm:$0xff]
  %v4652 = vld [vmem:[%s4648 + $0x18] sm:$0xff]
  %v4653 = vld [vmem:[%s4648 + $0x20] sm:$0xff]
  %v4654 = vld [vmem:[%s4648 + $0x28] sm:$0xff]
  %v4655 = vld [vmem:[%s4648 + $0x30] sm:$0xff]
  %v4656 = vld [vmem:[%s4648 + $0x38] sm:$0xff]
  %v4657 = vld [vmem:[%s4648 + $0x40] sm:$0xff]
  %v4658 = vld [vmem:[%s4648 + $0x48] sm:$0xff]
  %v4659 = vrot.slane %v4389, 2
  %v4660 = vrot.slane %v4394, 2
  %v4661 = vsel %vm898, %v4659, %v4660
  %v4662 = vrot.slane %v4399, 2
  %v4663 = vsel %vm898, %v4660, %v4662
  %v4664 = vrot.slane %v4404, 2
  %v4665 = vsel %vm898, %v4662, %v4664
  %v4666 = vrot.slane %v4409, 2
  %v4667 = vsel %vm898, %v4664, %v4666
  %v4668 = vsel %vm4447, %v4661, 0
  %v4670 = vsel %vm4447, %v4663, 0
  %v4672 = vsel %vm4447, %v4665, 0
  %v4674 = vsel %vm4447, %v4667, 0
  %v4676 = vsel %vm4447, %v4666, 0
  %4678 = vmatprep.subr.mxu0 0.0
  %4679 = vmatpush1.msra.mxu0 0.0
  %4680 = vmatprep.subr.mxu0 0.0
  %4681 = vmatpush1.msra.mxu0 0.0
  %4682 = vmatprep.subr.mxu0 0.0
  %4683 = vmatpush1.msra.mxu0 0.0
  %4684 = vmatprep.subr.mxu0 0.0
  %4685 = vmatpush1.msra.mxu0 0.0
  %4686 = vmatprep.subr.mxu0 0.0
  %4687 = vmatpush1.msra.mxu0 0.0
  %4688 = vmatprep.subr.mxu0 0.0
  %4689 = vmatpush1.msra.mxu0 0.0
  %4690 = vmatprep.subr.mxu0 0.0
  %4691 = vmatpush1.msra.mxu0 %v4658
  %4692 = vmatprep.subr.mxu0 0.0
  %4693 = vmatpush1.msra.mxu0 %v4657
  %4694 = vmatprep.subr.mxu0 0.0
  %4695 = vmatpush1.msra.mxu0 %v4656
  %4696 = vmatprep.subr.mxu0 0.0
  %4697 = vmatpush1.msra.mxu0 %v4655
  %4698 = vmatprep.subr.mxu0 0.0
  %4699 = vmatpush1.msra.mxu0 %v4654
  %4700 = vmatprep.subr.mxu0 0.0
  %4701 = vmatpush1.msra.mxu0 %v4653
  %4702 = vmatprep.subr.mxu0 0.0
  %4703 = vmatpush1.msra.mxu0 %v4652
  %4704 = vmatprep.subr.mxu0 0.0
  %4705 = vmatpush1.msra.mxu0 %v4651
  %4706 = vmatprep.subr.mxu0 0.0
  %4707 = vmatpush1.msra.mxu0 %v4650
  %4708 = vmatprep.subr.mxu0 0.0
  %4709 = vmatpush1.msra.mxu0 %v4649
  %4710 = vmatprep.subr.mxu0 0.0
  %4711 = vmatpush2.msra.mxu0 0.0
  %4712 = vmatprep.subr.mxu0 0.0
  %4713 = vmatpush2.msra.mxu0 0.0
  %4714 = vmatprep.subr.mxu0 0.0
  %4715 = vmatpush2.msra.mxu0 0.0
  %4716 = vmatprep.subr.mxu0 0.0
  %4717 = vmatpush2.msra.mxu0 0.0
  %4718 = vmatprep.subr.mxu0 0.0
  %4719 = vmatpush2.msra.mxu0 0.0
  %4720 = vmatprep.subr.mxu0 0.0
  %4721 = vmatpush2.msra.mxu0 0.0
  %4722 = vmatprep.subr.mxu0 0.0
  %4723 = vmatpush2.msra.mxu0 0.0
  %4724 = vmatprep.subr.mxu0 0.0
  %4725 = vmatpush2.msra.mxu0 0.0
  %4726 = vmatprep.subr.mxu0 0.0
  %4727 = vmatpush2.msra.mxu0 0.0
  %4728 = vmatprep.subr.mxu0 0.0
  %4729 = vmatpush2.msra.mxu0 0.0
  %4730 = vmatprep.subr.mxu0 0.0
  %4731 = vmatpush2.msra.mxu0 0.0
  %4732 = vmatprep.subr.mxu0 0.0
  %4733 = vmatpush2.msra.mxu0 0.0
  %4734 = vmatprep.subr.mxu0 0.0
  %4735 = vmatpush2.msra.mxu0 0.0
  %4736 = vmatprep.subr.mxu0 0.0
  %4737 = vmatpush2.msra.mxu0 0.0
  %4738 = vmatprep.subr.mxu0 0.0
  %4739 = vmatpush2.msra.mxu0 0.0
  %4740 = vmatprep.subr.mxu0 0.0
  %4741 = vmatpush2.msra.mxu0 0.0
  %4742 = vmatprep.mubr.f32.mxu0 0.0
  %4743 = vmatmul.mubr.f32.gmra.mxu0 %v4668
  %v4744 = vpop.f32.mrf.mxu0
  %v4745 = vadd.f32 0.0, %v4744
  %v4746 = vpop.f32.mrf.mxu0
  %4747 = vmatprep.mubr.f32.mxu0 0.0
  %4748 = vmatmul.mubr.f32.gmra.mxu0 %v4670
  %v4749 = vpop.f32.mrf.mxu0
  %v4750 = vadd.f32 0.0, %v4749
  %v4751 = vpop.f32.mrf.mxu0
  %4752 = vmatprep.mubr.f32.mxu0 0.0
  %4753 = vmatmul.mubr.f32.gmra.mxu0 %v4672
  %v4754 = vpop.f32.mrf.mxu0
  %v4755 = vadd.f32 0.0, %v4754
  %v4756 = vpop.f32.mrf.mxu0
  %4757 = vmatprep.mubr.f32.mxu0 0.0
  %4758 = vmatmul.mubr.f32.gmra.mxu0 %v4674
  %v4759 = vpop.f32.mrf.mxu0
  %v4760 = vadd.f32 0.0, %v4759
  %v4761 = vpop.f32.mrf.mxu0
  %4762 = vmatprep.mubr.f32.mxu0 0.0
  %4763 = vmatmul.mubr.f32.gmra.mxu0 %v4676
  %v4764 = vpop.f32.mrf.mxu0
  %v4765 = vadd.f32 0.0, %v4764
  %v4766 = vpop.f32.mrf.mxu0
  %4767 = vdwg.mxu0
  %v4768 = vadd.f32 %v4625, %v4745
  %v4769 = vadd.f32 %v4630, %v4750
  %v4770 = vadd.f32 %v4635, %v4755
  %v4771 = vadd.f32 %v4640, %v4760
  %v4772 = vadd.f32 %v4645, %v4765
  %s4773 = scalar_lea.vmem %s9, 240
  %v4774 = vld [vmem:[%s4773] sm:$0xff]
  %v4775 = vld [vmem:[%s4773 + $0x8] sm:$0xff]
  %v4776 = vld [vmem:[%s4773 + $0x10] sm:$0xff]
  %v4777 = vld [vmem:[%s4773 + $0x18] sm:$0xff]
  %v4778 = vld [vmem:[%s4773 + $0x20] sm:$0xff]
  %v4779 = vld [vmem:[%s4773 + $0x28] sm:$0xff]
  %v4780 = vld [vmem:[%s4773 + $0x30] sm:$0xff]
  %v4781 = vld [vmem:[%s4773 + $0x38] sm:$0xff]
  %v4782 = vld [vmem:[%s4773 + $0x40] sm:$0xff]
  %v4783 = vld [vmem:[%s4773 + $0x48] sm:$0xff]
  %v4784 = vrot.slane %v4389, 3
  %v4785 = vrot.slane %v4394, 3
  %v4786 = vsel %vm1372, %v4784, %v4785
  %v4787 = vrot.slane %v4399, 3
  %v4788 = vsel %vm1372, %v4785, %v4787
  %v4789 = vrot.slane %v4404, 3
  %v4790 = vsel %vm1372, %v4787, %v4789
  %v4791 = vrot.slane %v4409, 3
  %v4792 = vsel %vm1372, %v4789, %v4791
  %v4793 = vsel %vm4447, %v4786, 0
  %v4795 = vsel %vm4447, %v4788, 0
  %v4797 = vsel %vm4447, %v4790, 0
  %v4799 = vsel %vm4447, %v4792, 0
  %v4801 = vsel %vm4447, %v4791, 0
  %4803 = vmatprep.subr.mxu0 0.0
  %4804 = vmatpush1.msra.mxu0 0.0
  %4805 = vmatprep.subr.mxu0 0.0
  %4806 = vmatpush1.msra.mxu0 0.0
  %4807 = vmatprep.subr.mxu0 0.0
  %4808 = vmatpush1.msra.mxu0 0.0
  %4809 = vmatprep.subr.mxu0 0.0
  %4810 = vmatpush1.msra.mxu0 0.0
  %4811 = vmatprep.subr.mxu0 0.0
  %4812 = vmatpush1.msra.mxu0 0.0
  %4813 = vmatprep.subr.mxu0 0.0
  %4814 = vmatpush1.msra.mxu0 0.0
  %4815 = vmatprep.subr.mxu0 0.0
  %4816 = vmatpush1.msra.mxu0 %v4783
  %4817 = vmatprep.subr.mxu0 0.0
  %4818 = vmatpush1.msra.mxu0 %v4782
  %4819 = vmatprep.subr.mxu0 0.0
  %4820 = vmatpush1.msra.mxu0 %v4781
  %4821 = vmatprep.subr.mxu0 0.0
  %4822 = vmatpush1.msra.mxu0 %v4780
  %4823 = vmatprep.subr.mxu0 0.0
  %4824 = vmatpush1.msra.mxu0 %v4779
  %4825 = vmatprep.subr.mxu0 0.0
  %4826 = vmatpush1.msra.mxu0 %v4778
  %4827 = vmatprep.subr.mxu0 0.0
  %4828 = vmatpush1.msra.mxu0 %v4777
  %4829 = vmatprep.subr.mxu0 0.0
  %4830 = vmatpush1.msra.mxu0 %v4776
  %4831 = vmatprep.subr.mxu0 0.0
  %4832 = vmatpush1.msra.mxu0 %v4775
  %4833 = vmatprep.subr.mxu0 0.0
  %4834 = vmatpush1.msra.mxu0 %v4774
  %4835 = vmatprep.subr.mxu0 0.0
  %4836 = vmatpush2.msra.mxu0 0.0
  %4837 = vmatprep.subr.mxu0 0.0
  %4838 = vmatpush2.msra.mxu0 0.0
  %4839 = vmatprep.subr.mxu0 0.0
  %4840 = vmatpush2.msra.mxu0 0.0
  %4841 = vmatprep.subr.mxu0 0.0
  %4842 = vmatpush2.msra.mxu0 0.0
  %4843 = vmatprep.subr.mxu0 0.0
  %4844 = vmatpush2.msra.mxu0 0.0
  %4845 = vmatprep.subr.mxu0 0.0
  %4846 = vmatpush2.msra.mxu0 0.0
  %4847 = vmatprep.subr.mxu0 0.0
  %4848 = vmatpush2.msra.mxu0 0.0
  %4849 = vmatprep.subr.mxu0 0.0
  %4850 = vmatpush2.msra.mxu0 0.0
  %4851 = vmatprep.subr.mxu0 0.0
  %4852 = vmatpush2.msra.mxu0 0.0
  %4853 = vmatprep.subr.mxu0 0.0
  %4854 = vmatpush2.msra.mxu0 0.0
  %4855 = vmatprep.subr.mxu0 0.0
  %4856 = vmatpush2.msra.mxu0 0.0
  %4857 = vmatprep.subr.mxu0 0.0
  %4858 = vmatpush2.msra.mxu0 0.0
  %4859 = vmatprep.subr.mxu0 0.0
  %4860 = vmatpush2.msra.mxu0 0.0
  %4861 = vmatprep.subr.mxu0 0.0
  %4862 = vmatpush2.msra.mxu0 0.0
  %4863 = vmatprep.subr.mxu0 0.0
  %4864 = vmatpush2.msra.mxu0 0.0
  %4865 = vmatprep.subr.mxu0 0.0
  %4866 = vmatpush2.msra.mxu0 0.0
  %4867 = vmatprep.mubr.f32.mxu0 0.0
  %4868 = vmatmul.mubr.f32.gmra.mxu0 %v4793
  %v4869 = vpop.f32.mrf.mxu0
  %v4870 = vadd.f32 0.0, %v4869
  %v4871 = vpop.f32.mrf.mxu0
  %4872 = vmatprep.mubr.f32.mxu0 0.0
  %4873 = vmatmul.mubr.f32.gmra.mxu0 %v4795
  %v4874 = vpop.f32.mrf.mxu0
  %v4875 = vadd.f32 0.0, %v4874
  %v4876 = vpop.f32.mrf.mxu0
  %4877 = vmatprep.mubr.f32.mxu0 0.0
  %4878 = vmatmul.mubr.f32.gmra.mxu0 %v4797
  %v4879 = vpop.f32.mrf.mxu0
  %v4880 = vadd.f32 0.0, %v4879
  %v4881 = vpop.f32.mrf.mxu0
  %4882 = vmatprep.mubr.f32.mxu0 0.0
  %4883 = vmatmul.mubr.f32.gmra.mxu0 %v4799
  %v4884 = vpop.f32.mrf.mxu0
  %v4885 = vadd.f32 0.0, %v4884
  %v4886 = vpop.f32.mrf.mxu0
  %4887 = vmatprep.mubr.f32.mxu0 0.0
  %4888 = vmatmul.mubr.f32.gmra.mxu0 %v4801
  %v4889 = vpop.f32.mrf.mxu0
  %v4890 = vadd.f32 0.0, %v4889
  %v4891 = vpop.f32.mrf.mxu0
  %4892 = vdwg.mxu0
  %v4893 = vadd.f32 %v4768, %v4870
  %v4894 = vadd.f32 %v4769, %v4875
  %v4895 = vadd.f32 %v4770, %v4880
  %v4896 = vadd.f32 %v4771, %v4885
  %v4897 = vadd.f32 %v4772, %v4890
  %s4898 = scalar_lea.vmem %s9, 320
  %v4899 = vld [vmem:[%s4898] sm:$0xff]
  %v4900 = vld [vmem:[%s4898 + $0x8] sm:$0xff]
  %v4901 = vld [vmem:[%s4898 + $0x10] sm:$0xff]
  %v4902 = vld [vmem:[%s4898 + $0x18] sm:$0xff]
  %v4903 = vld [vmem:[%s4898 + $0x20] sm:$0xff]
  %v4904 = vld [vmem:[%s4898 + $0x28] sm:$0xff]
  %v4905 = vld [vmem:[%s4898 + $0x30] sm:$0xff]
  %v4906 = vld [vmem:[%s4898 + $0x38] sm:$0xff]
  %v4907 = vld [vmem:[%s4898 + $0x40] sm:$0xff]
  %v4908 = vld [vmem:[%s4898 + $0x48] sm:$0xff]
  %v4909 = vrot.slane %v4389, 4
  %v4910 = vrot.slane %v4394, 4
  %v4911 = vsel %vm1846, %v4909, %v4910
  %v4912 = vrot.slane %v4399, 4
  %v4913 = vsel %vm1846, %v4910, %v4912
  %v4914 = vrot.slane %v4404, 4
  %v4915 = vsel %vm1846, %v4912, %v4914
  %v4916 = vrot.slane %v4409, 4
  %v4917 = vsel %vm1846, %v4914, %v4916
  %v4918 = vsel %vm4447, %v4911, 0
  %v4920 = vsel %vm4447, %v4913, 0
  %v4922 = vsel %vm4447, %v4915, 0
  %v4924 = vsel %vm4447, %v4917, 0
  %v4926 = vsel %vm4447, %v4916, 0
  %4928 = vmatprep.subr.mxu0 0.0
  %4929 = vmatpush1.msra.mxu0 0.0
  %4930 = vmatprep.subr.mxu0 0.0
  %4931 = vmatpush1.msra.mxu0 0.0
  %4932 = vmatprep.subr.mxu0 0.0
  %4933 = vmatpush1.msra.mxu0 0.0
  %4934 = vmatprep.subr.mxu0 0.0
  %4935 = vmatpush1.msra.mxu0 0.0
  %4936 = vmatprep.subr.mxu0 0.0
  %4937 = vmatpush1.msra.mxu0 0.0
  %4938 = vmatprep.subr.mxu0 0.0
  %4939 = vmatpush1.msra.mxu0 0.0
  %4940 = vmatprep.subr.mxu0 0.0
  %4941 = vmatpush1.msra.mxu0 %v4908
  %4942 = vmatprep.subr.mxu0 0.0
  %4943 = vmatpush1.msra.mxu0 %v4907
  %4944 = vmatprep.subr.mxu0 0.0
  %4945 = vmatpush1.msra.mxu0 %v4906
  %4946 = vmatprep.subr.mxu0 0.0
  %4947 = vmatpush1.msra.mxu0 %v4905
  %4948 = vmatprep.subr.mxu0 0.0
  %4949 = vmatpush1.msra.mxu0 %v4904
  %4950 = vmatprep.subr.mxu0 0.0
  %4951 = vmatpush1.msra.mxu0 %v4903
  %4952 = vmatprep.subr.mxu0 0.0
  %4953 = vmatpush1.msra.mxu0 %v4902
  %4954 = vmatprep.subr.mxu0 0.0
  %4955 = vmatpush1.msra.mxu0 %v4901
  %4956 = vmatprep.subr.mxu0 0.0
  %4957 = vmatpush1.msra.mxu0 %v4900
  %4958 = vmatprep.subr.mxu0 0.0
  %4959 = vmatpush1.msra.mxu0 %v4899
  %4960 = vmatprep.subr.mxu0 0.0
  %4961 = vmatpush2.msra.mxu0 0.0
  %4962 = vmatprep.subr.mxu0 0.0
  %4963 = vmatpush2.msra.mxu0 0.0
  %4964 = vmatprep.subr.mxu0 0.0
  %4965 = vmatpush2.msra.mxu0 0.0
  %4966 = vmatprep.subr.mxu0 0.0
  %4967 = vmatpush2.msra.mxu0 0.0
  %4968 = vmatprep.subr.mxu0 0.0
  %4969 = vmatpush2.msra.mxu0 0.0
  %4970 = vmatprep.subr.mxu0 0.0
  %4971 = vmatpush2.msra.mxu0 0.0
  %4972 = vmatprep.subr.mxu0 0.0
  %4973 = vmatpush2.msra.mxu0 0.0
  %4974 = vmatprep.subr.mxu0 0.0
  %4975 = vmatpush2.msra.mxu0 0.0
  %4976 = vmatprep.subr.mxu0 0.0
  %4977 = vmatpush2.msra.mxu0 0.0
  %4978 = vmatprep.subr.mxu0 0.0
  %4979 = vmatpush2.msra.mxu0 0.0
  %4980 = vmatprep.subr.mxu0 0.0
  %4981 = vmatpush2.msra.mxu0 0.0
  %4982 = vmatprep.subr.mxu0 0.0
  %4983 = vmatpush2.msra.mxu0 0.0
  %4984 = vmatprep.subr.mxu0 0.0
  %4985 = vmatpush2.msra.mxu0 0.0
  %4986 = vmatprep.subr.mxu0 0.0
  %4987 = vmatpush2.msra.mxu0 0.0
  %4988 = vmatprep.subr.mxu0 0.0
  %4989 = vmatpush2.msra.mxu0 0.0
  %4990 = vmatprep.subr.mxu0 0.0
  %4991 = vmatpush2.msra.mxu0 0.0
  %4992 = vmatprep.mubr.f32.mxu0 0.0
  %4993 = vmatmul.mubr.f32.gmra.mxu0 %v4918
  %v4994 = vpop.f32.mrf.mxu0
  %v4995 = vadd.f32 0.0, %v4994
  %v4996 = vpop.f32.mrf.mxu0
  %4997 = vmatprep.mubr.f32.mxu0 0.0
  %4998 = vmatmul.mubr.f32.gmra.mxu0 %v4920
  %v4999 = vpop.f32.mrf.mxu0
  %v5000 = vadd.f32 0.0, %v4999
  %v5001 = vpop.f32.mrf.mxu0
  %5002 = vmatprep.mubr.f32.mxu0 0.0
  %5003 = vmatmul.mubr.f32.gmra.mxu0 %v4922
  %v5004 = vpop.f32.mrf.mxu0
  %v5005 = vadd.f32 0.0, %v5004
  %v5006 = vpop.f32.mrf.mxu0
  %5007 = vmatprep.mubr.f32.mxu0 0.0
  %5008 = vmatmul.mubr.f32.gmra.mxu0 %v4924
  %v5009 = vpop.f32.mrf.mxu0
  %v5010 = vadd.f32 0.0, %v5009
  %v5011 = vpop.f32.mrf.mxu0
  %5012 = vmatprep.mubr.f32.mxu0 0.0
  %5013 = vmatmul.mubr.f32.gmra.mxu0 %v4926
  %v5014 = vpop.f32.mrf.mxu0
  %v5015 = vadd.f32 0.0, %v5014
  %v5016 = vpop.f32.mrf.mxu0
  %5017 = vdwg.mxu0
  %v5018 = vadd.f32 %v4893, %v4995
  %v5019 = vadd.f32 %v4894, %v5000
  %v5020 = vadd.f32 %v4895, %v5005
  %v5021 = vadd.f32 %v4896, %v5010
  %v5022 = vadd.f32 %v4897, %v5015
  %v5023 = vld [vmem:[%s10] sm:$0x1]
  %v5025 = vlaneseq
  %v5026 = vshrl.u32 %v5025, 7
  %v5027 = vsub.s32 0, %v5026
  %v5028 = vrot.slane %v5023, %v5027
  %v5030 = vadd.f32 %v5018, %v5028
  %v5031 = vadd.f32 %v5019, %v5028
  %v5032 = vadd.f32 %v5020, %v5028
  %v5033 = vadd.f32 %v5021, %v5028
  %v5034 = vadd.f32 %v5022, %v5028
  %v5035 = vtanh.pop %v5030
  %v5036 = vtanh.pop %v5031
  %v5037 = vtanh.pop %v5032
  %v5038 = vtanh.pop %v5033
  %v5039 = vtanh.pop %v5034
  %v5040 = vld [vmem:[%s11] sm:$0xff]
  %vm5041 = vcmask 293888
  %v5043 = vsel %vm5041, %v5040, 0
  %v5046 = vsel %vm1846, %v5039, 0
  %5048 = vmatprep.subr.mxu0 0.0
  %5049 = vmatpush1.msra.mxu0 0.0
  %5050 = vmatprep.subr.mxu0 0.0
  %5051 = vmatpush1.msra.mxu0 0.0
  %5052 = vmatprep.subr.mxu0 0.0
  %5053 = vmatpush1.msra.mxu0 0.0
  %5054 = vmatprep.subr.mxu0 0.0
  %5055 = vmatpush1.msra.mxu0 0.0
  %5056 = vmatprep.subr.mxu0 0.0
  %5057 = vmatpush1.msra.mxu0 0.0
  %5058 = vmatprep.subr.mxu0 0.0
  %5059 = vmatpush1.msra.mxu0 0.0
  %5060 = vmatprep.subr.mxu0 0.0
  %5061 = vmatpush1.msra.mxu0 0.0
  %5062 = vmatprep.subr.mxu0 0.0
  %5063 = vmatpush1.msra.mxu0 0.0
  %5064 = vmatprep.subr.mxu0 0.0
  %5065 = vmatpush1.msra.mxu0 0.0
  %5066 = vmatprep.subr.mxu0 0.0
  %5067 = vmatpush1.msra.mxu0 0.0
  %5068 = vmatprep.subr.mxu0 0.0
  %5069 = vmatpush1.msra.mxu0 0.0
  %5070 = vmatprep.subr.mxu0 0.0
  %5071 = vmatpush1.msra.mxu0 %v5046
  %5072 = vmatprep.subr.mxu0 0.0
  %5073 = vmatpush1.msra.mxu0 %v5038
  %5074 = vmatprep.subr.mxu0 0.0
  %5075 = vmatpush1.msra.mxu0 %v5037
  %5076 = vmatprep.subr.mxu0 0.0
  %5077 = vmatpush1.msra.mxu0 %v5036
  %5078 = vmatprep.subr.mxu0 0.0
  %5079 = vmatpush1.msra.mxu0 %v5035
  %5080 = vmatprep.subr.mxu0 0.0
  %5081 = vmatpush2.msra.mxu0 0.0
  %5082 = vmatprep.subr.mxu0 0.0
  %5083 = vmatpush2.msra.mxu0 0.0
  %5084 = vmatprep.subr.mxu0 0.0
  %5085 = vmatpush2.msra.mxu0 0.0
  %5086 = vmatprep.subr.mxu0 0.0
  %5087 = vmatpush2.msra.mxu0 0.0
  %5088 = vmatprep.subr.mxu0 0.0
  %5089 = vmatpush2.msra.mxu0 0.0
  %5090 = vmatprep.subr.mxu0 0.0
  %5091 = vmatpush2.msra.mxu0 0.0
  %5092 = vmatprep.subr.mxu0 0.0
  %5093 = vmatpush2.msra.mxu0 0.0
  %5094 = vmatprep.subr.mxu0 0.0
  %5095 = vmatpush2.msra.mxu0 0.0
  %5096 = vmatprep.subr.mxu0 0.0
  %5097 = vmatpush2.msra.mxu0 0.0
  %5098 = vmatprep.subr.mxu0 0.0
  %5099 = vmatpush2.msra.mxu0 0.0
  %5100 = vmatprep.subr.mxu0 0.0
  %5101 = vmatpush2.msra.mxu0 0.0
  %5102 = vmatprep.subr.mxu0 0.0
  %5103 = vmatpush2.msra.mxu0 0.0
  %5104 = vmatprep.subr.mxu0 0.0
  %5105 = vmatpush2.msra.mxu0 0.0
  %5106 = vmatprep.subr.mxu0 0.0
  %5107 = vmatpush2.msra.mxu0 0.0
  %5108 = vmatprep.subr.mxu0 0.0
  %5109 = vmatpush2.msra.mxu0 0.0
  %5110 = vmatprep.subr.mxu0 0.0
  %5111 = vmatpush2.msra.mxu0 0.0
  %5112 = vmatprep.mubr.f32.mxu0 0.0
  %5113 = vmatmul.mubr.f32.gmra.mxu0 %v5043
  %v5114 = vpop.f32.mrf.mxu0
  %v5115 = vadd.f32 0.0, %v5114
  %v5116 = vpop.f32.mrf.mxu0
  %5117 = vdwg.mxu0
  %v5118 = vld [vmem:[%s12] sm:$0xff]
  %v5119 = vld [vmem:[%s12 + $0x8] sm:$0xff]
  %v5120 = vld [vmem:[%s12 + $0x10] sm:$0xff]
  %v5121 = vld [vmem:[%s12 + $0x18] sm:$0xff]
  %v5122 = vld [vmem:[%s12 + $0x20] sm:$0xff]
  %v5123 = vld [vmem:[%s12 + $0x28] sm:$0xff]
  %v5124 = vld [vmem:[%s12 + $0x30] sm:$0xff]
  %v5125 = vld [vmem:[%s12 + $0x38] sm:$0xff]
  %v5126 = vld [vmem:[%s12 + $0x40] sm:$0xff]
  %v5127 = vld [vmem:[%s12 + $0x48] sm:$0xff]
  %v5128 = vld [vmem:[%s12 + $0x50] sm:$0xff]
  %v5129 = vld [vmem:[%s12 + $0x58] sm:$0xff]
  %v5130 = vld [vmem:[%s12 + $0x60] sm:$0xff]
  %v5131 = vld [vmem:[%s12 + $0x68] sm:$0xff]
  %v5132 = vld [vmem:[%s12 + $0x70] sm:$0xff]
  %v5133 = vld [vmem:[%s13] sm:$0x1]
  %v5135 = vlaneseq
  %v5136 = vshrl.u32 %v5135, 7
  %v5137 = vsub.s32 0, %v5136
  %v5138 = vrot.slane %v5133, %v5137
  %vm5140 = vcmask 982016
  %v5142 = vsel %vm5140, %v5115, 0
  %5144 = vmatprep.subr.mxu0 0.0
  %5145 = vmatpush1.msra.mxu0 0.0
  %5146 = vmatprep.subr.mxu0 0.0
  %5147 = vmatpush1.msra.mxu0 %v5132
  %5148 = vmatprep.subr.mxu0 0.0
  %5149 = vmatpush1.msra.mxu0 %v5131
  %5150 = vmatprep.subr.mxu0 0.0
  %5151 = vmatpush1.msra.mxu0 %v5130
  %5152 = vmatprep.subr.mxu0 0.0
  %5153 = vmatpush1.msra.mxu0 %v5129
  %5154 = vmatprep.subr.mxu0 0.0
  %5155 = vmatpush1.msra.mxu0 %v5128
  %5156 = vmatprep.subr.mxu0 0.0
  %5157 = vmatpush1.msra.mxu0 %v5127
  %5158 = vmatprep.subr.mxu0 0.0
  %5159 = vmatpush1.msra.mxu0 %v5126
  %5160 = vmatprep.subr.mxu0 0.0
  %5161 = vmatpush1.msra.mxu0 %v5125
  %5162 = vmatprep.subr.mxu0 0.0
  %5163 = vmatpush1.msra.mxu0 %v5124
  %5164 = vmatprep.subr.mxu0 0.0
  %5165 = vmatpush1.msra.mxu0 %v5123
  %5166 = vmatprep.subr.mxu0 0.0
  %5167 = vmatpush1.msra.mxu0 %v5122
  %5168 = vmatprep.subr.mxu0 0.0
  %5169 = vmatpush1.msra.mxu0 %v5121
  %5170 = vmatprep.subr.mxu0 0.0
  %5171 = vmatpush1.msra.mxu0 %v5120
  %5172 = vmatprep.subr.mxu0 0.0
  %5173 = vmatpush1.msra.mxu0 %v5119
  %5174 = vmatprep.subr.mxu0 0.0
  %5175 = vmatpush1.msra.mxu0 %v5118
  %5176 = vmatprep.subr.mxu0 0.0
  %5177 = vmatpush2.msra.mxu0 0.0
  %5178 = vmatprep.subr.mxu0 0.0
  %5179 = vmatpush2.msra.mxu0 0.0
  %5180 = vmatprep.subr.mxu0 0.0
  %5181 = vmatpush2.msra.mxu0 0.0
  %5182 = vmatprep.subr.mxu0 0.0
  %5183 = vmatpush2.msra.mxu0 0.0
  %5184 = vmatprep.subr.mxu0 0.0
  %5185 = vmatpush2.msra.mxu0 0.0
  %5186 = vmatprep.subr.mxu0 0.0
  %5187 = vmatpush2.msra.mxu0 0.0
  %5188 = vmatprep.subr.mxu0 0.0
  %5189 = vmatpush2.msra.mxu0 0.0
  %5190 = vmatprep.subr.mxu0 0.0
  %5191 = vmatpush2.msra.mxu0 0.0
  %5192 = vmatprep.subr.mxu0 0.0
  %5193 = vmatpush2.msra.mxu0 0.0
  %5194 = vmatprep.subr.mxu0 0.0
  %5195 = vmatpush2.msra.mxu0 0.0
  %5196 = vmatprep.subr.mxu0 0.0
  %5197 = vmatpush2.msra.mxu0 0.0
  %5198 = vmatprep.subr.mxu0 0.0
  %5199 = vmatpush2.msra.mxu0 0.0
  %5200 = vmatprep.subr.mxu0 0.0
  %5201 = vmatpush2.msra.mxu0 0.0
  %5202 = vmatprep.subr.mxu0 0.0
  %5203 = vmatpush2.msra.mxu0 0.0
  %5204 = vmatprep.subr.mxu0 0.0
  %5205 = vmatpush2.msra.mxu0 0.0
  %5206 = vmatprep.subr.mxu0 0.0
  %5207 = vmatpush2.msra.mxu0 0.0
  %5208 = vmatprep.mubr.f32.mxu0 0.0
  %5209 = vmatmul.mubr.f32.gmra.mxu0 %v5142
  %v5210 = vpop.f32.mrf.mxu0
  %v5211 = vadd.f32 %v5138, %v5210
  %v5212 = vpop.f32.mrf.mxu0
  %5213 = vdwg.mxu0
  %v5214 = vtanh.pop %v5211
  %v5215 = vld [vmem:[%s14] sm:$0xff]
  %v5216 = vld [vmem:[%s14 + $0x8] sm:$0xff]
  %v5217 = vld [vmem:[%s14 + $0x10] sm:$0xff]
  %v5218 = vld [vmem:[%s14 + $0x18] sm:$0xff]
  %v5219 = vld [vmem:[%s14 + $0x20] sm:$0xff]
  %v5220 = vld [vmem:[%s14 + $0x28] sm:$0xff]
  %v5221 = vld [vmem:[%s14 + $0x30] sm:$0xff]
  %v5222 = vld [vmem:[%s14 + $0x38] sm:$0xff]
  %v5223 = vld [vmem:[%s14 + $0x40] sm:$0xff]
  %v5224 = vld [vmem:[%s14 + $0x48] sm:$0xff]
  %v5225 = vld [vmem:[%s14 + $0x50] sm:$0xf]
  %v5226 = vld [vmem:[%s15] sm:$0x1]
  %v5228 = vlaneseq
  %v5229 = vshrl.u32 %v5228, 7
  %v5230 = vsub.s32 0, %v5229
  %v5231 = vrot.slane %v5226, %v5230
  %v5234 = vsel %vm2946, %v5214, 0
  %v5237 = vsel %vm1846, %v5225, 0
  %5239 = vmatprep.subr.mxu0 0.0
  %5240 = vmatpush1.msra.mxu0 0.0
  %5241 = vmatprep.subr.mxu0 0.0
  %5242 = vmatpush1.msra.mxu0 0.0
  %5243 = vmatprep.subr.mxu0 0.0
  %5244 = vmatpush1.msra.mxu0 0.0
  %5245 = vmatprep.subr.mxu0 0.0
  %5246 = vmatpush1.msra.mxu0 0.0
  %5247 = vmatprep.subr.mxu0 0.0
  %5248 = vmatpush1.msra.mxu0 0.0
  %5249 = vmatprep.subr.mxu0 0.0
  %5250 = vmatpush1.msra.mxu0 %v5237
  %5251 = vmatprep.subr.mxu0 0.0
  %5252 = vmatpush1.msra.mxu0 %v5224
  %5253 = vmatprep.subr.mxu0 0.0
  %5254 = vmatpush1.msra.mxu0 %v5223
  %5255 = vmatprep.subr.mxu0 0.0
  %5256 = vmatpush1.msra.mxu0 %v5222
  %5257 = vmatprep.subr.mxu0 0.0
  %5258 = vmatpush1.msra.mxu0 %v5221
  %5259 = vmatprep.subr.mxu0 0.0
  %5260 = vmatpush1.msra.mxu0 %v5220
  %5261 = vmatprep.subr.mxu0 0.0
  %5262 = vmatpush1.msra.mxu0 %v5219
  %5263 = vmatprep.subr.mxu0 0.0
  %5264 = vmatpush1.msra.mxu0 %v5218
  %5265 = vmatprep.subr.mxu0 0.0
  %5266 = vmatpush1.msra.mxu0 %v5217
  %5267 = vmatprep.subr.mxu0 0.0
  %5268 = vmatpush1.msra.mxu0 %v5216
  %5269 = vmatprep.subr.mxu0 0.0
  %5270 = vmatpush1.msra.mxu0 %v5215
  %5271 = vmatprep.subr.mxu0 0.0
  %5272 = vmatpush2.msra.mxu0 0.0
  %5273 = vmatprep.subr.mxu0 0.0
  %5274 = vmatpush2.msra.mxu0 0.0
  %5275 = vmatprep.subr.mxu0 0.0
  %5276 = vmatpush2.msra.mxu0 0.0
  %5277 = vmatprep.subr.mxu0 0.0
  %5278 = vmatpush2.msra.mxu0 0.0
  %5279 = vmatprep.subr.mxu0 0.0
  %5280 = vmatpush2.msra.mxu0 0.0
  %5281 = vmatprep.subr.mxu0 0.0
  %5282 = vmatpush2.msra.mxu0 0.0
  %5283 = vmatprep.subr.mxu0 0.0
  %5284 = vmatpush2.msra.mxu0 0.0
  %5285 = vmatprep.subr.mxu0 0.0
  %5286 = vmatpush2.msra.mxu0 0.0
  %5287 = vmatprep.subr.mxu0 0.0
  %5288 = vmatpush2.msra.mxu0 0.0
  %5289 = vmatprep.subr.mxu0 0.0
  %5290 = vmatpush2.msra.mxu0 0.0
  %5291 = vmatprep.subr.mxu0 0.0
  %5292 = vmatpush2.msra.mxu0 0.0
  %5293 = vmatprep.subr.mxu0 0.0
  %5294 = vmatpush2.msra.mxu0 0.0
  %5295 = vmatprep.subr.mxu0 0.0
  %5296 = vmatpush2.msra.mxu0 0.0
  %5297 = vmatprep.subr.mxu0 0.0
  %5298 = vmatpush2.msra.mxu0 0.0
  %5299 = vmatprep.subr.mxu0 0.0
  %5300 = vmatpush2.msra.mxu0 0.0
  %5301 = vmatprep.subr.mxu0 0.0
  %5302 = vmatpush2.msra.mxu0 0.0
  %5303 = vmatprep.mubr.f32.mxu0 0.0
  %5304 = vmatmul.mubr.f32.gmra.mxu0 %v5234
  %v5305 = vpop.f32.mrf.mxu0
  %v5306 = vadd.f32 %v5231, %v5305
  %v5307 = vpop.f32.mrf.mxu0
  %5308 = vdwg.mxu0
  %vm5309 = vcmask 15360
  %5310 = vst.msk [vmem:[%s16] sm:$0xff] %vm5309, %v5306
  // Predicated region
  $region66: #{lenet_forward.1} parent=0 // pred_check
    _
  $region67: #{lenet_forward.1} parent=0 // pred_check_branch
    %5312 = sbr.rel (0) target = $region69
  $region68: #{lenet_forward.1} parent=0 // pred_region
    _
  $region69: #{lenet_forward.1} parent=0 // pred_fallthru
    _
  // Predicated region
  $region70: #{lenet_forward.1} parent=0 // pred_check
    _
  $region71: #{lenet_forward.1} parent=0 // pred_check_branch
    %5314 = sbr.rel (0) target = $region73
  $region72: #{lenet_forward.1} parent=0 // pred_region
    _
  $region73: #{lenet_forward.1} parent=0 // pred_fallthru
    _

</llo_original>
